<compile_context>
chip_gen: v5e
topology: v5e:2x2
jax: 0.10.0
libtpu: 0.0.40
codegen_flags: <defaults>
</compile_context>

<pallas_src>
import functools

import jax
import jax.numpy as jnp
from jax.experimental import pallas as pl
from jax.experimental.pallas import tpu as pltpu

EPS = 1e-5
_VMEM_LIMIT = 32 * 1024 * 1024   # fits scoped VMEM on v5e / v6e / v7x


# ----------------------------------------------------------------------------
# Fused kernel: GAP -> BN1 -> 1x1 conv -> BN2 -> ReLU -> broadcast add -> 3x3 conv
# ----------------------------------------------------------------------------
def _ceb_fused_kernel(x_ref, wmid_ref, s1_ref, b1_ref, s2_ref, b2_ref, w3_ref,
                      o_ref, ypad_ref, *, inv_hw):
    # x_ref:   (1, H, W, C)    bf16
    # wmid_ref:(C, C)          f32, [in, out]
    # s*/b*:   (1, C)          f32, folded BN scale / bias
    # w3_ref:  (9, C, Cout)    f32, taps ordered kh*3 + kw
    # o_ref:   (1, H, W, Cout) f32
    # ypad_ref:(H+3, Wp, C)    f32 VMEM halo scratch, Wp >= W+2 and Wp % 8 == 0
    _, H, W, C = x_ref.shape
    Cout = o_ref.shape[-1]
    Wp = ypad_ref.shape[1]
    L = H * Wp                      # rows of the flattened conv operand

    # ---- single load of the image block; reused by the pooling and the add ----
    xf = x_ref[0].astype(jnp.float32)                                   # (H, W, C)

    # ---- context vector: GAP -> BN1 -> 1x1 conv (MXU) -> BN2 -> ReLU ----------
    # Reduce H first (plain VPU vreg adds), then W (one XLU sublane reduce).
    pooled = (jnp.sum(jnp.sum(xf, axis=0), axis=0) * inv_hw)[None, :]   # (1, C)
    p = pooled * s1_ref[...] + b1_ref[...]                              # BN1
    mm = jnp.dot(p, wmid_ref[...], preferred_element_type=jnp.float32)  # 1x1 conv
    m = jnp.maximum(mm * s2_ref[...] + b2_ref[...], 0.0)                # BN2 + ReLU

    # ---- broadcast add fused with the halo write -------------------------------
    # ypad row r = padded image row r (0: top halo, 1+h: image row h, H+1: bottom
    # halo, H+2: slack).  Only the thin halo strips are zeroed each step (robust
    # under any grid semantics, ~cost-free); the interior is overwritten directly.
    ypad_ref[0:1, :, :] = jnp.zeros((1, Wp, C), jnp.float32)            # top halo
    ypad_ref[H + 1:H + 3, :, :] = jnp.zeros((2, Wp, C), jnp.float32)    # bottom + slack
    ypad_ref[1:H + 1, 0:1, :] = jnp.zeros((H, 1, C), jnp.float32)       # left halo
    ypad_ref[1:H + 1, W + 1:Wp, :] = jnp.zeros((H, Wp - W - 1, C), jnp.float32)
    ypad_ref[1:H + 1, 1:W + 1, :] = xf + m                              # interior = x + m

    # ---- 3x3 conv: 9 accumulated 2-D MXU dots ----------------------------------
    # For kernel row kh, load one contiguous full-width slab of H+1 padded rows,
    # flatten it (Wp % 8 == 0 -> pure relabel), and take the three kw taps as
    # static row-offset slices of that flat value.  Output (h, w) lives at flat
    # row h*Wp + w; columns W..Wp-1 of each row are junk and dropped at the end.
    w3 = w3_ref[...]                                                    # (9, C, Cout)
    acc = jnp.zeros((L, Cout), jnp.float32)
    for kh in range(3):
        slab = ypad_ref[kh:kh + H + 1, :, :]                            # (H+1, Wp, C)
        flat = slab.reshape((H + 1) * Wp, C)
        for kw in range(3):
            part = flat[kw:kw + L, :]                                   # row-offset tap
            acc = acc + jnp.dot(part, w3[3 * kh + kw],
                                preferred_element_type=jnp.float32)

    out = acc.reshape(H, Wp, Cout)[:, :W, :]                            # drop junk cols
    o_ref[...] = out.reshape(1, H, W, Cout)


# ----------------------------------------------------------------------------
# Wrapper (glue: transposes, BN folding, weight reshape, pallas_call plumbing)
# ----------------------------------------------------------------------------
def context_embedding_forward(x_nchw, params):
    N, C, H, W = x_nchw.shape
    w_mid = params["w_mid"]       # (C, C, 1, 1)     OIHW
    w_last = params["w_last"]     # (Cout, C, 3, 3)  OIHW
    Cout = w_last.shape[0]

    # Fold BatchNorm (inference mode) into scale / bias.
    s1 = params["bn1_gamma"] * jax.lax.rsqrt(params["bn1_var"] + EPS)
    b1 = params["bn1_beta"] - params["bn1_mean"] * s1
    s2 = params["bn2_gamma"] * jax.lax.rsqrt(params["bn2_var"] + EPS)
    b2 = params["bn2_beta"] - params["bn2_mean"] * s2

    # bf16 activations in HBM (halves the dominant HBM read); f32 math in-kernel.
    x_nhwc = jnp.transpose(x_nchw, (0, 2, 3, 1)).astype(jnp.bfloat16)
    wmid2d = jnp.transpose(w_mid[:, :, 0, 0], (1, 0)).astype(jnp.float32)   # (Cin, Cin)
    # (Cout, Cin, 3, 3) -> (kh, kw, Cin, Cout) -> (9, Cin, Cout)
    w3 = jnp.transpose(w_last, (2, 3, 1, 0)).reshape(9, C, Cout).astype(jnp.float32)

    # Padded row width for the conv scratch: >= W + 2 and a multiple of 8 so the
    # flatten / un-flatten reshapes around the MXU dots stay layout-preserving.
    Wp = ((W + 2 + 7) // 8) * 8

    out_nhwc = pl.pallas_call(
        functools.partial(_ceb_fused_kernel, inv_hw=1.0 / float(H * W)),
        out_shape=jax.ShapeDtypeStruct((N, H, W, Cout), jnp.float32),
        grid=(N,),
        in_specs=[
            pl.BlockSpec((1, H, W, C), lambda n: (n, 0, 0, 0)),
            pl.BlockSpec((C, C), lambda n: (0, 0)),
            pl.BlockSpec((1, C), lambda n: (0, 0)),
            pl.BlockSpec((1, C), lambda n: (0, 0)),
            pl.BlockSpec((1, C), lambda n: (0, 0)),
            pl.BlockSpec((1, C), lambda n: (0, 0)),
            pl.BlockSpec((9, C, Cout), lambda n: (0, 0, 0)),
        ],
        out_specs=pl.BlockSpec((1, H, W, Cout), lambda n: (n, 0, 0, 0)),
        scratch_shapes=[pltpu.VMEM((H + 3, Wp, C), jnp.float32)],
        compiler_params=pltpu.CompilerParams(
            dimension_semantics=("parallel",),
            vmem_limit_bytes=_VMEM_LIMIT),
    )(x_nhwc, wmid2d, s1.reshape(1, C), b1.reshape(1, C),
      s2.reshape(1, C), b2.reshape(1, C), w3)

    return jnp.transpose(out_nhwc, (0, 3, 1, 2))   # back to NCHW


# ----------------------------------------------------------------------------
# Pure-JAX reference (NCHW, f32, HIGHEST precision), for the correctness check
# ----------------------------------------------------------------------------
def reference_forward(x, params):
    def bn(v, g, b, m, var):
        sc = (g * jax.lax.rsqrt(var + EPS))[None, :, None, None]
        return (v - m[None, :, None, None]) * sc + b[None, :, None, None]

    pooled = jnp.mean(x, axis=(2, 3), keepdims=True)
    r = bn(pooled, params["bn1_gamma"], params["bn1_beta"],
           params["bn1_mean"], params["bn1_var"])
    r = jax.lax.conv_general_dilated(
        r, params["w_mid"], (1, 1), "VALID",
        dimension_numbers=("NCHW", "OIHW", "NCHW"),
        precision=jax.lax.Precision.HIGHEST)
    r = bn(r, params["bn2_gamma"], params["bn2_beta"],
           params["bn2_mean"], params["bn2_var"])
    r = jnp.maximum(r, 0.0)
    y = r + x
    out = jax.lax.conv_general_dilated(
        y, params["w_last"], (1, 1), ((1, 1), (1, 1)),
        dimension_numbers=("NCHW", "OIHW", "NCHW"),
        precision=jax.lax.Precision.HIGHEST)
    return out


def make_params(in_ch, out_ch, key):
    ks = jax.random.split(key, 10)

    def bn_params(kg, kb, km, kv, c):
        return (1.0 + 0.1 * jax.random.normal(kg, (c,), jnp.float32),
                0.1 * jax.random.normal(kb, (c,), jnp.float32),
                0.1 * jax.random.normal(km, (c,), jnp.float32),
                0.5 + jnp.abs(jax.random.normal(kv, (c,), jnp.float32)))

    g1, b1, m1, v1 = bn_params(ks[0], ks[1], ks[2], ks[3], in_ch)
    g2, b2, m2, v2 = bn_params(ks[4], ks[5], ks[6], ks[7], in_ch)
    return dict(
        w_mid=0.3 * jax.random.normal(ks[8], (in_ch, in_ch, 1, 1), jnp.float32),
        w_last=0.3 * jax.random.normal(ks[9], (out_ch, in_ch, 3, 3), jnp.float32),
        bn1_gamma=g1, bn1_beta=b1, bn1_mean=m1, bn1_var=v1,
        bn2_gamma=g2, bn2_beta=b2, bn2_mean=m2, bn2_var=v2,
    )


if __name__ == "__main__":
    key = jax.random.PRNGKey(0)
    kx, kp = jax.random.split(key)

    N, Cin, H, W = 2, 4, 16, 16
    Cout = 8

    x = jax.random.normal(kx, (N, Cin, H, W), jnp.float32)
    params = make_params(Cin, Cout, kp)

    out = jax.block_until_ready(context_embedding_forward(x, params))
    assert out.shape == (N, Cout, H, W)

    ref = reference_forward(x, params)
    max_err = float(jnp.max(jnp.abs(out - ref)))
    # bf16 activations in HBM + default (single-pass) MXU precision vs. an f32
    # HIGHEST-precision reference -> loosened tolerance.
    assert jnp.allclose(out, ref, atol=1e-1, rtol=1e-1), f"max abs err {max_err}"

    print("KERNEL_OK")
</pallas_src>

<mosaic_0001>
module attributes {stable_mosaic.version = 11 : i64} {
  func.func @_ceb_fused_kernel(%arg0: i32, %arg1: memref<1x16x16x4xbf16, #tpu.memory_space<vmem>>, %arg2: memref<4x4xf32, #tpu.memory_space<vmem>>, %arg3: memref<1x4xf32, #tpu.memory_space<vmem>>, %arg4: memref<1x4xf32, #tpu.memory_space<vmem>>, %arg5: memref<1x4xf32, #tpu.memory_space<vmem>>, %arg6: memref<1x4xf32, #tpu.memory_space<vmem>>, %arg7: memref<9x4x8xf32, #tpu.memory_space<vmem>>, %arg8: memref<1x16x16x8xf32, #tpu.memory_space<vmem>>, %arg9: memref<19x24x4xf32, #tpu.memory_space<vmem>>) attributes {dimension_semantics = [#tpu.dimension_semantics<parallel>], iteration_bounds = array<i64: 2>, scalar_prefetch = 0 : i64, scratch_operands = 1 : i64, tpu.core_type = #tpu.core_type<tc>, window_params = [{transform_indices = @transform_0, window_bounds = array<i64: 1, 16, 16, 4>}, {pipeline_mode = #tpu.pipeline_mode<synchronous>, transform_indices = @transform_1, window_bounds = array<i64: 4, 4>}, {pipeline_mode = #tpu.pipeline_mode<synchronous>, transform_indices = @transform_2, window_bounds = array<i64: 1, 4>}, {pipeline_mode = #tpu.pipeline_mode<synchronous>, transform_indices = @transform_3, window_bounds = array<i64: 1, 4>}, {pipeline_mode = #tpu.pipeline_mode<synchronous>, transform_indices = @transform_4, window_bounds = array<i64: 1, 4>}, {pipeline_mode = #tpu.pipeline_mode<synchronous>, transform_indices = @transform_5, window_bounds = array<i64: 1, 4>}, {pipeline_mode = #tpu.pipeline_mode<synchronous>, transform_indices = @transform_6, window_bounds = array<i64: 9, 4, 8>}, {transform_indices = @transform_7, window_bounds = array<i64: 1, 16, 16, 8>}]} {
    %c0 = arith.constant 0 : index
    %c0_0 = arith.constant 0 : index
    %c0_1 = arith.constant 0 : index
    %c0_2 = arith.constant 0 : index
    %0 = vector.load %arg1[%c0, %c0_0, %c0_1, %c0_2] : memref<1x16x16x4xbf16, #tpu.memory_space<vmem>>, vector<1x16x16x4xbf16>
    %1 = vector.shape_cast %0 : vector<1x16x16x4xbf16> to vector<16x16x4xbf16>
    %2 = arith.extf %1 : vector<16x16x4xbf16> to vector<16x16x4xf32>
    %cst = arith.constant dense<0.000000e+00> : vector<16x4xf32>
    %3 = vector.multi_reduction <add>, %2, %cst [0] : vector<16x16x4xf32> to vector<16x4xf32>
    %cst_3 = arith.constant dense<0.000000e+00> : vector<4xf32>
    %4 = vector.multi_reduction <add>, %3, %cst_3 [0] : vector<16x4xf32> to vector<4xf32>
    %cst_4 = arith.constant 3.906250e-03 : f32
    %5 = vector.broadcast %cst_4 : f32 to vector<4xf32>
    %6 = arith.mulf %4, %5 : vector<4xf32>
    %7 = vector.shape_cast %6 : vector<4xf32> to vector<1x4xf32>
    %c0_5 = arith.constant 0 : index
    %c0_6 = arith.constant 0 : index
    %8 = vector.load %arg3[%c0_5, %c0_6] : memref<1x4xf32, #tpu.memory_space<vmem>>, vector<1x4xf32>
    %9 = arith.mulf %7, %8 : vector<1x4xf32>
    %c0_7 = arith.constant 0 : index
    %c0_8 = arith.constant 0 : index
    %10 = vector.load %arg4[%c0_7, %c0_8] : memref<1x4xf32, #tpu.memory_space<vmem>>, vector<1x4xf32>
    %11 = arith.addf %9, %10 : vector<1x4xf32>
    %c0_9 = arith.constant 0 : index
    %c0_10 = arith.constant 0 : index
    %12 = vector.load %arg2[%c0_9, %c0_10] : memref<4x4xf32, #tpu.memory_space<vmem>>, vector<4x4xf32>
    %cst_11 = arith.constant dense<0.000000e+00> : vector<1x4xf32>
    %13 = tpu.matmul %11, %12, %cst_11 {dimension_numbers = #tpu.dot_dimension_numbers<[1], [0], [0], [1], [0, 0, 1, 1], [], []>} : vector<1x4xf32>, vector<4x4xf32>, vector<1x4xf32> -> vector<1x4xf32>
    %c0_12 = arith.constant 0 : index
    %c0_13 = arith.constant 0 : index
    %14 = vector.load %arg5[%c0_12, %c0_13] : memref<1x4xf32, #tpu.memory_space<vmem>>, vector<1x4xf32>
    %15 = arith.mulf %13, %14 : vector<1x4xf32>
    %c0_14 = arith.constant 0 : index
    %c0_15 = arith.constant 0 : index
    %16 = vector.load %arg6[%c0_14, %c0_15] : memref<1x4xf32, #tpu.memory_space<vmem>>, vector<1x4xf32>
    %17 = arith.addf %15, %16 : vector<1x4xf32>
    %cst_16 = arith.constant 0.000000e+00 : f32
    %18 = vector.broadcast %cst_16 : f32 to vector<1x4xf32>
    %19 = arith.maximumf %17, %18 : vector<1x4xf32>
    %cst_17 = arith.constant 0.000000e+00 : f32
    %20 = vector.broadcast %cst_17 : f32 to vector<1x24x4xf32>
    %c0_18 = arith.constant 0 : index
    %c0_19 = arith.constant 0 : index
    %c0_20 = arith.constant 0 : index
    %21 = vector.load %arg9[%c0_18, %c0_19, %c0_20] : memref<19x24x4xf32, #tpu.memory_space<vmem>>, vector<1x24x4xf32>
    tpu.vector_store %arg9[%c0_18, %c0_19, %c0_20], %20 {strides = array<i32>} : memref<19x24x4xf32, #tpu.memory_space<vmem>>, vector<1x24x4xf32>,
    %cst_21 = arith.constant 0.000000e+00 : f32
    %22 = vector.broadcast %cst_21 : f32 to vector<2x24x4xf32>
    %c17 = arith.constant 17 : index
    %c0_22 = arith.constant 0 : index
    %c0_23 = arith.constant 0 : index
    %23 = vector.load %arg9[%c17, %c0_22, %c0_23] : memref<19x24x4xf32, #tpu.memory_space<vmem>>, vector<2x24x4xf32>
    tpu.vector_store %arg9[%c17, %c0_22, %c0_23], %22 {strides = array<i32>} : memref<19x24x4xf32, #tpu.memory_space<vmem>>, vector<2x24x4xf32>,
    %cst_24 = arith.constant 0.000000e+00 : f32
    %24 = vector.broadcast %cst_24 : f32 to vector<16x1x4xf32>
    %c1 = arith.constant 1 : index
    %c0_25 = arith.constant 0 : index
    %c0_26 = arith.constant 0 : index
    %25 = vector.load %arg9[%c1, %c0_25, %c0_26] : memref<19x24x4xf32, #tpu.memory_space<vmem>>, vector<16x1x4xf32>
    tpu.vector_store %arg9[%c1, %c0_25, %c0_26], %24 {strides = array<i32>} : memref<19x24x4xf32, #tpu.memory_space<vmem>>, vector<16x1x4xf32>,
    %cst_27 = arith.constant 0.000000e+00 : f32
    %26 = vector.broadcast %cst_27 : f32 to vector<16x7x4xf32>
    %c1_28 = arith.constant 1 : index
    %c17_29 = arith.constant 17 : index
    %c0_30 = arith.constant 0 : index
    %27 = vector.load %arg9[%c1_28, %c17_29, %c0_30] : memref<19x24x4xf32, #tpu.memory_space<vmem>>, vector<16x7x4xf32>
    tpu.vector_store %arg9[%c1_28, %c17_29, %c0_30], %26 {strides = array<i32>} : memref<19x24x4xf32, #tpu.memory_space<vmem>>, vector<16x7x4xf32>,
    %28 = vector.shape_cast %19 : vector<1x4xf32> to vector<1x1x4xf32>
    %29 = vector.broadcast %28 : vector<1x1x4xf32> to vector<16x16x4xf32>
    %30 = arith.addf %2, %29 : vector<16x16x4xf32>
    %c1_31 = arith.constant 1 : index
    %c1_32 = arith.constant 1 : index
    %c0_33 = arith.constant 0 : index
    %31 = vector.load %arg9[%c1_31, %c1_32, %c0_33] : memref<19x24x4xf32, #tpu.memory_space<vmem>>, vector<16x16x4xf32>
    tpu.vector_store %arg9[%c1_31, %c1_32, %c0_33], %30 {strides = array<i32>} : memref<19x24x4xf32, #tpu.memory_space<vmem>>, vector<16x16x4xf32>,
    %c0_34 = arith.constant 0 : index
    %c0_35 = arith.constant 0 : index
    %c0_36 = arith.constant 0 : index
    %32 = vector.load %arg7[%c0_34, %c0_35, %c0_36] : memref<9x4x8xf32, #tpu.memory_space<vmem>>, vector<9x4x8xf32>
    %cst_37 = arith.constant 0.000000e+00 : f32
    %33 = vector.broadcast %cst_37 : f32 to vector<384x8xf32>
    %c0_38 = arith.constant 0 : index
    %c0_39 = arith.constant 0 : index
    %c0_40 = arith.constant 0 : index
    %34 = vector.load %arg9[%c0_38, %c0_39, %c0_40] : memref<19x24x4xf32, #tpu.memory_space<vmem>>, vector<17x24x4xf32>
    %35 = vector.shape_cast %34 : vector<17x24x4xf32> to vector<408x4xf32>
    %36 = vector.extract_strided_slice %35 {offsets = [0, 0], sizes = [384, 4], strides = [1, 1]} : vector<408x4xf32> to vector<384x4xf32>
    %37 = vector.extract_strided_slice %32 {offsets = [0, 0, 0], sizes = [1, 4, 8], strides = [1, 1, 1]} : vector<9x4x8xf32> to vector<1x4x8xf32>
    %38 = vector.shape_cast %37 : vector<1x4x8xf32> to vector<4x8xf32>
    %cst_41 = arith.constant dense<0.000000e+00> : vector<384x8xf32>
    %39 = tpu.matmul %36, %38, %cst_41 {dimension_numbers = #tpu.dot_dimension_numbers<[1], [0], [0], [1], [0, 0, 1, 1], [], []>} : vector<384x4xf32>, vector<4x8xf32>, vector<384x8xf32> -> vector<384x8xf32>
    %40 = arith.addf %33, %39 : vector<384x8xf32>
    %41 = vector.extract_strided_slice %35 {offsets = [1, 0], sizes = [384, 4], strides = [1, 1]} : vector<408x4xf32> to vector<384x4xf32>
    %42 = vector.extract_strided_slice %32 {offsets = [1, 0, 0], sizes = [1, 4, 8], strides = [1, 1, 1]} : vector<9x4x8xf32> to vector<1x4x8xf32>
    %43 = vector.shape_cast %42 : vector<1x4x8xf32> to vector<4x8xf32>
    %cst_42 = arith.constant dense<0.000000e+00> : vector<384x8xf32>
    %44 = tpu.matmul %41, %43, %cst_42 {dimension_numbers = #tpu.dot_dimension_numbers<[1], [0], [0], [1], [0, 0, 1, 1], [], []>} : vector<384x4xf32>, vector<4x8xf32>, vector<384x8xf32> -> vector<384x8xf32>
    %45 = arith.addf %40, %44 : vector<384x8xf32>
    %46 = vector.extract_strided_slice %35 {offsets = [2, 0], sizes = [384, 4], strides = [1, 1]} : vector<408x4xf32> to vector<384x4xf32>
    %47 = vector.extract_strided_slice %32 {offsets = [2, 0, 0], sizes = [1, 4, 8], strides = [1, 1, 1]} : vector<9x4x8xf32> to vector<1x4x8xf32>
    %48 = vector.shape_cast %47 : vector<1x4x8xf32> to vector<4x8xf32>
    %cst_43 = arith.constant dense<0.000000e+00> : vector<384x8xf32>
    %49 = tpu.matmul %46, %48, %cst_43 {dimension_numbers = #tpu.dot_dimension_numbers<[1], [0], [0], [1], [0, 0, 1, 1], [], []>} : vector<384x4xf32>, vector<4x8xf32>, vector<384x8xf32> -> vector<384x8xf32>
    %50 = arith.addf %45, %49 : vector<384x8xf32>
    %c1_44 = arith.constant 1 : index
    %c0_45 = arith.constant 0 : index
    %c0_46 = arith.constant 0 : index
    %51 = vector.load %arg9[%c1_44, %c0_45, %c0_46] : memref<19x24x4xf32, #tpu.memory_space<vmem>>, vector<17x24x4xf32>
    %52 = vector.shape_cast %51 : vector<17x24x4xf32> to vector<408x4xf32>
    %53 = vector.extract_strided_slice %52 {offsets = [0, 0], sizes = [384, 4], strides = [1, 1]} : vector<408x4xf32> to vector<384x4xf32>
    %54 = vector.extract_strided_slice %32 {offsets = [3, 0, 0], sizes = [1, 4, 8], strides = [1, 1, 1]} : vector<9x4x8xf32> to vector<1x4x8xf32>
    %55 = vector.shape_cast %54 : vector<1x4x8xf32> to vector<4x8xf32>
    %cst_47 = arith.constant dense<0.000000e+00> : vector<384x8xf32>
    %56 = tpu.matmul %53, %55, %cst_47 {dimension_numbers = #tpu.dot_dimension_numbers<[1], [0], [0], [1], [0, 0, 1, 1], [], []>} : vector<384x4xf32>, vector<4x8xf32>, vector<384x8xf32> -> vector<384x8xf32>
    %57 = arith.addf %50, %56 : vector<384x8xf32>
    %58 = vector.extract_strided_slice %52 {offsets = [1, 0], sizes = [384, 4], strides = [1, 1]} : vector<408x4xf32> to vector<384x4xf32>
    %59 = vector.extract_strided_slice %32 {offsets = [4, 0, 0], sizes = [1, 4, 8], strides = [1, 1, 1]} : vector<9x4x8xf32> to vector<1x4x8xf32>
    %60 = vector.shape_cast %59 : vector<1x4x8xf32> to vector<4x8xf32>
    %cst_48 = arith.constant dense<0.000000e+00> : vector<384x8xf32>
    %61 = tpu.matmul %58, %60, %cst_48 {dimension_numbers = #tpu.dot_dimension_numbers<[1], [0], [0], [1], [0, 0, 1, 1], [], []>} : vector<384x4xf32>, vector<4x8xf32>, vector<384x8xf32> -> vector<384x8xf32>
    %62 = arith.addf %57, %61 : vector<384x8xf32>
    %63 = vector.extract_strided_slice %52 {offsets = [2, 0], sizes = [384, 4], strides = [1, 1]} : vector<408x4xf32> to vector<384x4xf32>
    %64 = vector.extract_strided_slice %32 {offsets = [5, 0, 0], sizes = [1, 4, 8], strides = [1, 1, 1]} : vector<9x4x8xf32> to vector<1x4x8xf32>
    %65 = vector.shape_cast %64 : vector<1x4x8xf32> to vector<4x8xf32>
    %cst_49 = arith.constant dense<0.000000e+00> : vector<384x8xf32>
    %66 = tpu.matmul %63, %65, %cst_49 {dimension_numbers = #tpu.dot_dimension_numbers<[1], [0], [0], [1], [0, 0, 1, 1], [], []>} : vector<384x4xf32>, vector<4x8xf32>, vector<384x8xf32> -> vector<384x8xf32>
    %67 = arith.addf %62, %66 : vector<384x8xf32>
    %c2 = arith.constant 2 : index
    %c0_50 = arith.constant 0 : index
    %c0_51 = arith.constant 0 : index
    %68 = vector.load %arg9[%c2, %c0_50, %c0_51] : memref<19x24x4xf32, #tpu.memory_space<vmem>>, vector<17x24x4xf32>
    %69 = vector.shape_cast %68 : vector<17x24x4xf32> to vector<408x4xf32>
    %70 = vector.extract_strided_slice %69 {offsets = [0, 0], sizes = [384, 4], strides = [1, 1]} : vector<408x4xf32> to vector<384x4xf32>
    %71 = vector.extract_strided_slice %32 {offsets = [6, 0, 0], sizes = [1, 4, 8], strides = [1, 1, 1]} : vector<9x4x8xf32> to vector<1x4x8xf32>
    %72 = vector.shape_cast %71 : vector<1x4x8xf32> to vector<4x8xf32>
    %cst_52 = arith.constant dense<0.000000e+00> : vector<384x8xf32>
    %73 = tpu.matmul %70, %72, %cst_52 {dimension_numbers = #tpu.dot_dimension_numbers<[1], [0], [0], [1], [0, 0, 1, 1], [], []>} : vector<384x4xf32>, vector<4x8xf32>, vector<384x8xf32> -> vector<384x8xf32>
    %74 = arith.addf %67, %73 : vector<384x8xf32>
    %75 = vector.extract_strided_slice %69 {offsets = [1, 0], sizes = [384, 4], strides = [1, 1]} : vector<408x4xf32> to vector<384x4xf32>
    %76 = vector.extract_strided_slice %32 {offsets = [7, 0, 0], sizes = [1, 4, 8], strides = [1, 1, 1]} : vector<9x4x8xf32> to vector<1x4x8xf32>
    %77 = vector.shape_cast %76 : vector<1x4x8xf32> to vector<4x8xf32>
    %cst_53 = arith.constant dense<0.000000e+00> : vector<384x8xf32>
    %78 = tpu.matmul %75, %77, %cst_53 {dimension_numbers = #tpu.dot_dimension_numbers<[1], [0], [0], [1], [0, 0, 1, 1], [], []>} : vector<384x4xf32>, vector<4x8xf32>, vector<384x8xf32> -> vector<384x8xf32>
    %79 = arith.addf %74, %78 : vector<384x8xf32>
    %80 = vector.extract_strided_slice %69 {offsets = [2, 0], sizes = [384, 4], strides = [1, 1]} : vector<408x4xf32> to vector<384x4xf32>
    %81 = vector.extract_strided_slice %32 {offsets = [8, 0, 0], sizes = [1, 4, 8], strides = [1, 1, 1]} : vector<9x4x8xf32> to vector<1x4x8xf32>
    %82 = vector.shape_cast %81 : vector<1x4x8xf32> to vector<4x8xf32>
    %cst_54 = arith.constant dense<0.000000e+00> : vector<384x8xf32>
    %83 = tpu.matmul %80, %82, %cst_54 {dimension_numbers = #tpu.dot_dimension_numbers<[1], [0], [0], [1], [0, 0, 1, 1], [], []>} : vector<384x4xf32>, vector<4x8xf32>, vector<384x8xf32> -> vector<384x8xf32>
    %84 = arith.addf %79, %83 : vector<384x8xf32>
    %85 = vector.shape_cast %84 : vector<384x8xf32> to vector<16x24x8xf32>
    %86 = vector.extract_strided_slice %85 {offsets = [0, 0, 0], sizes = [16, 16, 8], strides = [1, 1, 1]} : vector<16x24x8xf32> to vector<16x16x8xf32>
    %87 = vector.shape_cast %86 : vector<16x16x8xf32> to vector<1x16x16x8xf32>
    %c0_55 = arith.constant 0 : index
    %c0_56 = arith.constant 0 : index
    %c0_57 = arith.constant 0 : index
    %c0_58 = arith.constant 0 : index
    %88 = vector.load %arg8[%c0_55, %c0_56, %c0_57, %c0_58] : memref<1x16x16x8xf32, #tpu.memory_space<vmem>>, vector<1x16x16x8xf32>
    tpu.vector_store %arg8[%c0_55, %c0_56, %c0_57, %c0_58], %87 {strides = array<i32>} : memref<1x16x16x8xf32, #tpu.memory_space<vmem>>, vector<1x16x16x8xf32>,
    return
  }
  func.func @transform_0(%arg0: i32) -> (i32, i32, i32, i32) {
    %c0_i32 = arith.constant 0 : i32
    %c0_i32_0 = arith.constant 0 : i32
    %c0_i32_1 = arith.constant 0 : i32
    %c0_i32_2 = arith.constant 0 : i32
    return %arg0, %c0_i32, %c0_i32_0, %c0_i32_1 : i32, i32, i32, i32
  }
  func.func @transform_1(%arg0: i32) -> (i32, i32) {
    %c0_i32 = arith.constant 0 : i32
    %c0_i32_0 = arith.constant 0 : i32
    %c0_i32_1 = arith.constant 0 : i32
    return %c0_i32, %c0_i32_0 : i32, i32
  }
  func.func @transform_2(%arg0: i32) -> (i32, i32) {
    %c0_i32 = arith.constant 0 : i32
    %c0_i32_0 = arith.constant 0 : i32
    %c0_i32_1 = arith.constant 0 : i32
    return %c0_i32, %c0_i32_0 : i32, i32
  }
  func.func @transform_3(%arg0: i32) -> (i32, i32) {
    %c0_i32 = arith.constant 0 : i32
    %c0_i32_0 = arith.constant 0 : i32
    %c0_i32_1 = arith.constant 0 : i32
    return %c0_i32, %c0_i32_0 : i32, i32
  }
  func.func @transform_4(%arg0: i32) -> (i32, i32) {
    %c0_i32 = arith.constant 0 : i32
    %c0_i32_0 = arith.constant 0 : i32
    %c0_i32_1 = arith.constant 0 : i32
    return %c0_i32, %c0_i32_0 : i32, i32
  }
  func.func @transform_5(%arg0: i32) -> (i32, i32) {
    %c0_i32 = arith.constant 0 : i32
    %c0_i32_0 = arith.constant 0 : i32
    %c0_i32_1 = arith.constant 0 : i32
    return %c0_i32, %c0_i32_0 : i32, i32
  }
  func.func @transform_6(%arg0: i32) -> (i32, i32, i32) {
    %c0_i32 = arith.constant 0 : i32
    %c0_i32_0 = arith.constant 0 : i32
    %c0_i32_1 = arith.constant 0 : i32
    %c0_i32_2 = arith.constant 0 : i32
    return %c0_i32, %c0_i32_0, %c0_i32_1 : i32, i32, i32
  }
  func.func @transform_7(%arg0: i32) -> (i32, i32, i32, i32) {
    %c0_i32 = arith.constant 0 : i32
    %c0_i32_0 = arith.constant 0 : i32
    %c0_i32_1 = arith.constant 0 : i32
    %c0_i32_2 = arith.constant 0 : i32
    return %arg0, %c0_i32, %c0_i32_0, %c0_i32_1 : i32, i32, i32, i32
  }
}

</mosaic_0001>

<llo_original>
// kernel: tpu_custom_call.1
$region0: #{tpu_custom_call.1}
  #allocation0 [shape = 'u32[]', space=smem, size = 0x4, offset = 0x4, fixed_abs, tag = 'smem constant byte address 0x4 - core index']
  #allocation1 [shape = 'u32[72,128]{1,0:T(1,128)}', space=vmem, size = 0x9000, scoped, tag = 'internal scratch']
  #allocation2 [shape = 'f32[19,24,4]{2,1,0:T(8,128)}', space=vmem, size = 0x39000, scoped, tag = 'scratch operand']
  %s0 = inlined_call_operand.vmem [shape: bf16[2,16,16,4], index: 0, kind: input, shape index: {}]
  %s1 = inlined_call_operand.vmem [shape: f32[4,4], index: 1, kind: input, shape index: {}]
  %s2 = inlined_call_operand.vmem [shape: f32[1,4], index: 2, kind: input, shape index: {}]
  %s3 = inlined_call_operand.vmem [shape: f32[1,4], index: 3, kind: input, shape index: {}]
  %s4 = inlined_call_operand.vmem [shape: f32[1,4], index: 4, kind: input, shape index: {}]
  %s5 = inlined_call_operand.vmem [shape: f32[1,4], index: 5, kind: input, shape index: {}]
  %s6 = inlined_call_operand.vmem [shape: f32[9,4,8], index: 6, kind: input, shape index: {}]
  %s7 = inlined_call_operand.vmem [shape: f32[2,16,16,8], index: 7, kind: output, shape index: {}]
  %s8 = sld [smem:[#allocation0]]
  $region61: #{tpu_custom_call.1} parent=0
    _
  %s10 = ssub.s32 1, %s8
  %s11 = scalar_select 0, %s10, %s8
  loop: start=0, step=1, limit=4
  $region2: #{tpu_custom_call.1} parent=0 // loop_pre_header
    _
  $region3: #{tpu_custom_call.1} parent=0 // loop_header
    %s13 = sphi 0, %s17
    %p14 = scmp.ge.s32.totalorder %s13, 4
    %s23 = sphi 0, %s25
    %s26 = sphi 0, %s23
    %s27 = sphi 0, %s26
    %s43 = sphi 0, %s27
    %s47 = sphi 0, %s47
    %s49 = sphi 0, %s47
    %s50 = sphi 0, %s49
    %s64 = sphi 0, %s50
    %s68 = sphi 0, %s68
    %s70 = sphi 0, %s68
    %s71 = sphi 0, %s70
    %s85 = sphi 0, %s71
    %s89 = sphi 0, %s89
    %s91 = sphi 0, %s89
    %s92 = sphi 0, %s91
    %s106 = sphi 0, %s92
    %s110 = sphi 0, %s110
    %s112 = sphi 0, %s110
    %s113 = sphi 0, %s112
    %s127 = sphi 0, %s113
    %s131 = sphi 0, %s131
    %s133 = sphi 0, %s131
    %s134 = sphi 0, %s133
    %s148 = sphi 0, %s134
    %s152 = sphi 0, %s152
    %s154 = sphi 0, %s152
    %s155 = sphi 0, %s154
    %s169 = sphi 0, %s155
    %s175 = sphi 0, %s177
    %s178 = sphi 0, %s175
    %s179 = sphi 0, %s178
    %s195 = sphi 0, %s179
  $region4: #{tpu_custom_call.1} parent=0 // loop_header_branch
    %16 = sbr.rel (%p14) target = $region8
  $region5: #{tpu_custom_call.1} parent=0 // loop_body
    %s18 = ssub.s32 %s13, 1
    %s19 = ssub.s32 %s13, 2
    %s20 = sadd.s32 %s13, 1
    %s21 = ssub.s32 %s13, %s20
    %p22 = scmp.eq.s32.totalorder %s21, 0
    %s24 = sadd.s32 %s23, 1
    %s25 = scalar_select %p22, %s23, %s24
    %p28 = pneg %p22
    %p29 = scmp.eq.s32.totalorder %s13, 1
    %p30 = por %p28, %p29
    %p31 = scmp.ne.s32.totalorder %s23, %s26
    %p32 = scmp.eq.s32.totalorder %s13, 0
    %p33 = por %p31, %p32
    %p34 = scmp.ne.s32.totalorder %s23, %s26
    %p35 = scmp.eq.s32.totalorder %s18, 1
    %p36 = por %p34, %p35
    %p37 = scmp.ne.s32.totalorder %s26, %s27
    %p38 = scmp.eq.s32.totalorder %s18, 0
    %p39 = por %p37, %p38
    %p40 = scmp.ne.s32.totalorder %s26, %s27
    %p41 = scmp.eq.s32.totalorder %s19, 1
    %p42 = por %p40, %p41
    %p44 = scmp.ne.s32.totalorder %s27, %s43
    %p45 = scmp.eq.s32.totalorder %s19, 0
    %p46 = por %p44, %p45
    %s48 = sadd.s32 %s47, 1
    %p51 = scmp.eq.s32.totalorder %s13, 1
    %p52 = scmp.ne.s32.totalorder %s47, %s49
    %p53 = scmp.eq.s32.totalorder %s13, 0
    %p54 = por %p52, %p53
    %p55 = scmp.ne.s32.totalorder %s47, %s49
    %p56 = scmp.eq.s32.totalorder %s18, 1
    %p57 = por %p55, %p56
    %p58 = scmp.ne.s32.totalorder %s49, %s50
    %p59 = scmp.eq.s32.totalorder %s18, 0
    %p60 = por %p58, %p59
    %p61 = scmp.ne.s32.totalorder %s49, %s50
    %p62 = scmp.eq.s32.totalorder %s19, 1
    %p63 = por %p61, %p62
    %p65 = scmp.ne.s32.totalorder %s50, %s64
    %p66 = scmp.eq.s32.totalorder %s19, 0
    %p67 = por %p65, %p66
    %s69 = sadd.s32 %s68, 1
    %p72 = scmp.eq.s32.totalorder %s13, 1
    %p73 = scmp.ne.s32.totalorder %s68, %s70
    %p74 = scmp.eq.s32.totalorder %s13, 0
    %p75 = por %p73, %p74
    %p76 = scmp.ne.s32.totalorder %s68, %s70
    %p77 = scmp.eq.s32.totalorder %s18, 1
    %p78 = por %p76, %p77
    %p79 = scmp.ne.s32.totalorder %s70, %s71
    %p80 = scmp.eq.s32.totalorder %s18, 0
    %p81 = por %p79, %p80
    %p82 = scmp.ne.s32.totalorder %s70, %s71
    %p83 = scmp.eq.s32.totalorder %s19, 1
    %p84 = por %p82, %p83
    %p86 = scmp.ne.s32.totalorder %s71, %s85
    %p87 = scmp.eq.s32.totalorder %s19, 0
    %p88 = por %p86, %p87
    %s90 = sadd.s32 %s89, 1
    %p93 = scmp.eq.s32.totalorder %s13, 1
    %p94 = scmp.ne.s32.totalorder %s89, %s91
    %p95 = scmp.eq.s32.totalorder %s13, 0
    %p96 = por %p94, %p95
    %p97 = scmp.ne.s32.totalorder %s89, %s91
    %p98 = scmp.eq.s32.totalorder %s18, 1
    %p99 = por %p97, %p98
    %p100 = scmp.ne.s32.totalorder %s91, %s92
    %p101 = scmp.eq.s32.totalorder %s18, 0
    %p102 = por %p100, %p101
    %p103 = scmp.ne.s32.totalorder %s91, %s92
    %p104 = scmp.eq.s32.totalorder %s19, 1
    %p105 = por %p103, %p104
    %p107 = scmp.ne.s32.totalorder %s92, %s106
    %p108 = scmp.eq.s32.totalorder %s19, 0
    %p109 = por %p107, %p108
    %s111 = sadd.s32 %s110, 1
    %p114 = scmp.eq.s32.totalorder %s13, 1
    %p115 = scmp.ne.s32.totalorder %s110, %s112
    %p116 = scmp.eq.s32.totalorder %s13, 0
    %p117 = por %p115, %p116
    %p118 = scmp.ne.s32.totalorder %s110, %s112
    %p119 = scmp.eq.s32.totalorder %s18, 1
    %p120 = por %p118, %p119
    %p121 = scmp.ne.s32.totalorder %s112, %s113
    %p122 = scmp.eq.s32.totalorder %s18, 0
    %p123 = por %p121, %p122
    %p124 = scmp.ne.s32.totalorder %s112, %s113
    %p125 = scmp.eq.s32.totalorder %s19, 1
    %p126 = por %p124, %p125
    %p128 = scmp.ne.s32.totalorder %s113, %s127
    %p129 = scmp.eq.s32.totalorder %s19, 0
    %p130 = por %p128, %p129
    %s132 = sadd.s32 %s131, 1
    %p135 = scmp.eq.s32.totalorder %s13, 1
    %p136 = scmp.ne.s32.totalorder %s131, %s133
    %p137 = scmp.eq.s32.totalorder %s13, 0
    %p138 = por %p136, %p137
    %p139 = scmp.ne.s32.totalorder %s131, %s133
    %p140 = scmp.eq.s32.totalorder %s18, 1
    %p141 = por %p139, %p140
    %p142 = scmp.ne.s32.totalorder %s133, %s134
    %p143 = scmp.eq.s32.totalorder %s18, 0
    %p144 = por %p142, %p143
    %p145 = scmp.ne.s32.totalorder %s133, %s134
    %p146 = scmp.eq.s32.totalorder %s19, 1
    %p147 = por %p145, %p146
    %p149 = scmp.ne.s32.totalorder %s134, %s148
    %p150 = scmp.eq.s32.totalorder %s19, 0
    %p151 = por %p149, %p150
    %s153 = sadd.s32 %s152, 1
    %p156 = scmp.eq.s32.totalorder %s13, 1
    %p157 = scmp.ne.s32.totalorder %s152, %s154
    %p158 = scmp.eq.s32.totalorder %s13, 0
    %p159 = por %p157, %p158
    %p160 = scmp.ne.s32.totalorder %s152, %s154
    %p161 = scmp.eq.s32.totalorder %s18, 1
    %p162 = por %p160, %p161
    %p163 = scmp.ne.s32.totalorder %s154, %s155
    %p164 = scmp.eq.s32.totalorder %s18, 0
    %p165 = por %p163, %p164
    %p166 = scmp.ne.s32.totalorder %s154, %s155
    %p167 = scmp.eq.s32.totalorder %s19, 1
    %p168 = por %p166, %p167
    %p170 = scmp.ne.s32.totalorder %s155, %s169
    %p171 = scmp.eq.s32.totalorder %s19, 0
    %p172 = por %p170, %p171
    %s173 = ssub.s32 %s13, %s20
    %p174 = scmp.eq.s32.totalorder %s173, 0
    %s176 = sadd.s32 %s175, 1
    %s177 = scalar_select %p174, %s175, %s176
    %p180 = pneg %p174
    %p181 = scmp.eq.s32.totalorder %s13, 1
    %p182 = por %p180, %p181
    %p183 = scmp.ne.s32.totalorder %s175, %s178
    %p184 = scmp.eq.s32.totalorder %s13, 0
    %p185 = por %p183, %p184
    %p186 = scmp.ne.s32.totalorder %s175, %s178
    %p187 = scmp.eq.s32.totalorder %s18, 1
    %p188 = por %p186, %p187
    %p189 = scmp.ne.s32.totalorder %s178, %s179
    %p190 = scmp.eq.s32.totalorder %s18, 0
    %p191 = por %p189, %p190
    %p192 = scmp.ne.s32.totalorder %s178, %s179
    %p193 = scmp.eq.s32.totalorder %s19, 1
    %p194 = por %p192, %p193
    %p196 = scmp.ne.s32.totalorder %s179, %s195
    %p197 = scmp.eq.s32.totalorder %s19, 0
    %p198 = por %p196, %p197
    %p199 = scmp.le.s32.totalorder 1, %s13
    %p200 = scmp.lt.s32.totalorder %s13, 3
    %p201 = pnand %p199, %p200
    %p202 = pneg %p201
    // Predicated region
    $region9: #{tpu_custom_call.1} parent=5 // pred_check
      _
    $region10: #{tpu_custom_call.1} parent=5 // pred_check_branch
      %204 = sbr.rel (%p201) target = $region12
    $region11: #{tpu_custom_call.1} parent=5 // pred_region
      %s205 = ssub.s32 %s13, 1
      // Predicated region
      $region13: #{tpu_custom_call.1} parent=11 // pred_check
        %p206 = pneg %p60
      $region14: #{tpu_custom_call.1} parent=11 // pred_check_branch
        %208 = sbr.rel (%p206) target = $region16
      $region15: #{tpu_custom_call.1} parent=11 // pred_region
        _
      $region16: #{tpu_custom_call.1} parent=11 // pred_fallthru
        _
      // Predicated region
      $region17: #{tpu_custom_call.1} parent=11 // pred_check
        %p209 = pneg %p81
      $region18: #{tpu_custom_call.1} parent=11 // pred_check_branch
        %211 = sbr.rel (%p209) target = $region20
      $region19: #{tpu_custom_call.1} parent=11 // pred_region
        _
      $region20: #{tpu_custom_call.1} parent=11 // pred_fallthru
        _
      // Predicated region
      $region21: #{tpu_custom_call.1} parent=11 // pred_check
        %p212 = pneg %p102
      $region22: #{tpu_custom_call.1} parent=11 // pred_check_branch
        %214 = sbr.rel (%p212) target = $region24
      $region23: #{tpu_custom_call.1} parent=11 // pred_region
        _
      $region24: #{tpu_custom_call.1} parent=11 // pred_fallthru
        _
      // Predicated region
      $region25: #{tpu_custom_call.1} parent=11 // pred_check
        %p215 = pneg %p123
      $region26: #{tpu_custom_call.1} parent=11 // pred_check_branch
        %217 = sbr.rel (%p215) target = $region28
      $region27: #{tpu_custom_call.1} parent=11 // pred_region
        _
      $region28: #{tpu_custom_call.1} parent=11 // pred_fallthru
        _
      // Predicated region
      $region29: #{tpu_custom_call.1} parent=11 // pred_check
        %p218 = pneg %p144
      $region30: #{tpu_custom_call.1} parent=11 // pred_check_branch
        %220 = sbr.rel (%p218) target = $region32
      $region31: #{tpu_custom_call.1} parent=11 // pred_region
        _
      $region32: #{tpu_custom_call.1} parent=11 // pred_fallthru
        _
      // Predicated region
      $region33: #{tpu_custom_call.1} parent=11 // pred_check
        %p221 = pneg %p165
      $region34: #{tpu_custom_call.1} parent=11 // pred_check_branch
        %223 = sbr.rel (%p221) target = $region36
      $region35: #{tpu_custom_call.1} parent=11 // pred_region
        _
      $region36: #{tpu_custom_call.1} parent=11 // pred_fallthru
        _
    $region12: #{tpu_custom_call.1} parent=5 // pred_fallthru
      _
    %p224 = scmp.lt.s32.totalorder %s13, 2
    // Predicated region
    $region37: #{tpu_custom_call.1} parent=5 // pred_check
      %p225 = pneg %p224
    $region38: #{tpu_custom_call.1} parent=5 // pred_check_branch
      %227 = sbr.rel (%p225) target = $region40
    $region39: #{tpu_custom_call.1} parent=5 // pred_region
      // Predicated region
      $region41: #{tpu_custom_call.1} parent=39 // pred_check
        %p228 = pneg %p33
      $region42: #{tpu_custom_call.1} parent=39 // pred_check_branch
        %230 = sbr.rel (%p228) target = $region44
      $region43: #{tpu_custom_call.1} parent=39 // pred_region
        %p231 = scmp.lt.s32.totalorder %s13, 1
        %s232 = scalar_select %p231, %s13, 1
        %s233 = smul.addr %s232, 32
        %s234 = smul.addr %s233, 4
        %s235 = scalar_lea.vmem %s0, %s234
      $region44: #{tpu_custom_call.1} parent=39 // pred_fallthru
        _
    $region40: #{tpu_custom_call.1} parent=5 // pred_fallthru
      _
    %p236 = scmp.le.s32.totalorder 1, %s13
    %p237 = scmp.lt.s32.totalorder %s13, 3
    %p238 = pnand %p236, %p237
    %p239 = pneg %p238
    // Predicated region
    $region45: #{tpu_custom_call.1} parent=5 // pred_check
      _
    $region46: #{tpu_custom_call.1} parent=5 // pred_check_branch
      %241 = sbr.rel (%p238) target = $region48
    $region47: #{tpu_custom_call.1} parent=5 // pred_region
      %s242 = ssub.s32 %s13, 1
      %p243 = scmp.lt.s32.totalorder %s18, 1
      %s244 = scalar_select %p243, %s18, 1
      %s245 = smul.addr %s244, 32
      %s246 = smul.addr %s245, 4
      %s247 = scalar_lea.vmem %s0, %s246
      %p248 = pneg %p39
      %p249 = pneg %p36
      %p250 = pneg %p60
      %p251 = pneg %p57
      %p252 = pneg %p81
      %p253 = pneg %p78
      %p254 = pneg %p102
      %p255 = pneg %p99
      %p256 = pneg %p123
      %p257 = pneg %p120
      %p258 = pneg %p144
      %p259 = pneg %p141
      %p260 = pneg %p165
      %p261 = pneg %p162
      %p262 = pneg %p191
      %p263 = pneg %p188
      %p264 = scmp.lt.s32.totalorder %s18, 1
      %s265 = scalar_select %p264, %s18, 1
      %s266 = smul.addr %s265, 32
      %s267 = smul.addr %s266, 8
      %s268 = scalar_lea.vmem %s7, %s267
      %p269 = scmp.lt.s32.totalorder %s18, 1
      %s270 = scalar_select %p269, %s18, 1
      %s271 = smul.addr %s270, 32
      %s272 = smul.addr %s271, 4
      %s273 = scalar_lea.vmem %s0, %s272
      %p274 = scmp.lt.s32.totalorder %s18, 1
      %s275 = scalar_select %p274, %s18, 1
      %s276 = smul.addr %s275, 32
      %s277 = smul.addr %s276, 8
      %s278 = scalar_lea.vmem %s7, %s277
      %v279 = vld [vmem:[%s273] sm:$0xf]
      %v280 = vld [vmem:[%s273 + $0x4] sm:$0xf]
      %v281 = vld [vmem:[%s273 + $0x8] sm:$0xf]
      %v282 = vld [vmem:[%s273 + $0xc] sm:$0xf]
      %v283 = vld [vmem:[%s273 + $0x10] sm:$0xf]
      %v284 = vld [vmem:[%s273 + $0x14] sm:$0xf]
      %v285 = vld [vmem:[%s273 + $0x18] sm:$0xf]
      %v286 = vld [vmem:[%s273 + $0x1c] sm:$0xf]
      %v287 = vld [vmem:[%s273 + $0x20] sm:$0xf]
      %v288 = vld [vmem:[%s273 + $0x24] sm:$0xf]
      %v289 = vld [vmem:[%s273 + $0x28] sm:$0xf]
      %v290 = vld [vmem:[%s273 + $0x2c] sm:$0xf]
      %v291 = vld [vmem:[%s273 + $0x30] sm:$0xf]
      %v292 = vld [vmem:[%s273 + $0x34] sm:$0xf]
      %v293 = vld [vmem:[%s273 + $0x38] sm:$0xf]
      %v294 = vld [vmem:[%s273 + $0x3c] sm:$0xf]
      %v295 = vld [vmem:[%s273 + $0x40] sm:$0xf]
      %v296 = vld [vmem:[%s273 + $0x44] sm:$0xf]
      %v297 = vld [vmem:[%s273 + $0x48] sm:$0xf]
      %v298 = vld [vmem:[%s273 + $0x4c] sm:$0xf]
      %v299 = vld [vmem:[%s273 + $0x50] sm:$0xf]
      %v300 = vld [vmem:[%s273 + $0x54] sm:$0xf]
      %v301 = vld [vmem:[%s273 + $0x58] sm:$0xf]
      %v302 = vld [vmem:[%s273 + $0x5c] sm:$0xf]
      %v303 = vld [vmem:[%s273 + $0x60] sm:$0xf]
      %v304 = vld [vmem:[%s273 + $0x64] sm:$0xf]
      %v305 = vld [vmem:[%s273 + $0x68] sm:$0xf]
      %v306 = vld [vmem:[%s273 + $0x6c] sm:$0xf]
      %v307 = vld [vmem:[%s273 + $0x70] sm:$0xf]
      %v308 = vld [vmem:[%s273 + $0x74] sm:$0xf]
      %v309 = vld [vmem:[%s273 + $0x78] sm:$0xf]
      %v310 = vld [vmem:[%s273 + $0x7c] sm:$0xf]
      %v311 = vunpack.c.l.bf16 %v279
      %v312 = vunpack.c.l.bf16 %v280
      %v313 = vunpack.c.l.bf16 %v281
      %v314 = vunpack.c.l.bf16 %v282
      %v315 = vunpack.c.l.bf16 %v283
      %v316 = vunpack.c.l.bf16 %v284
      %v317 = vunpack.c.l.bf16 %v285
      %v318 = vunpack.c.l.bf16 %v286
      %v319 = vunpack.c.l.bf16 %v287
      %v320 = vunpack.c.l.bf16 %v288
      %v321 = vunpack.c.l.bf16 %v289
      %v322 = vunpack.c.l.bf16 %v290
      %v323 = vunpack.c.l.bf16 %v291
      %v324 = vunpack.c.l.bf16 %v292
      %v325 = vunpack.c.l.bf16 %v293
      %v326 = vunpack.c.l.bf16 %v294
      %v327 = vunpack.c.l.bf16 %v295
      %v328 = vunpack.c.l.bf16 %v296
      %v329 = vunpack.c.l.bf16 %v297
      %v330 = vunpack.c.l.bf16 %v298
      %v331 = vunpack.c.l.bf16 %v299
      %v332 = vunpack.c.l.bf16 %v300
      %v333 = vunpack.c.l.bf16 %v301
      %v334 = vunpack.c.l.bf16 %v302
      %v335 = vunpack.c.l.bf16 %v303
      %v336 = vunpack.c.l.bf16 %v304
      %v337 = vunpack.c.l.bf16 %v305
      %v338 = vunpack.c.l.bf16 %v306
      %v339 = vunpack.c.l.bf16 %v307
      %v340 = vunpack.c.l.bf16 %v308
      %v341 = vunpack.c.l.bf16 %v309
      %v342 = vunpack.c.l.bf16 %v310
      %vm343 = vcmask 31744
      %v344 = vsel %vm343, %v311, 0.0
      %v345 = vsel %vm343, %v313, 0.0
      %v346 = vadd.f32 %v344, %v345
      %v347 = vsel %vm343, %v315, 0.0
      %v348 = vadd.f32 %v346, %v347
      %v349 = vsel %vm343, %v317, 0.0
      %v350 = vadd.f32 %v348, %v349
      %v351 = vsel %vm343, %v319, 0.0
      %v352 = vadd.f32 %v350, %v351
      %v353 = vsel %vm343, %v321, 0.0
      %v354 = vadd.f32 %v352, %v353
      %v355 = vsel %vm343, %v323, 0.0
      %v356 = vadd.f32 %v354, %v355
      %v357 = vsel %vm343, %v325, 0.0
      %v358 = vadd.f32 %v356, %v357
      %v359 = vsel %vm343, %v327, 0.0
      %v360 = vadd.f32 %v358, %v359
      %v361 = vsel %vm343, %v329, 0.0
      %v362 = vadd.f32 %v360, %v361
      %v363 = vsel %vm343, %v331, 0.0
      %v364 = vadd.f32 %v362, %v363
      %v365 = vsel %vm343, %v333, 0.0
      %v366 = vadd.f32 %v364, %v365
      %v367 = vsel %vm343, %v335, 0.0
      %v368 = vadd.f32 %v366, %v367
      %v369 = vsel %vm343, %v337, 0.0
      %v370 = vadd.f32 %v368, %v369
      %v371 = vsel %vm343, %v339, 0.0
      %v372 = vadd.f32 %v370, %v371
      %v373 = vsel %vm343, %v341, 0.0
      %v374 = vadd.f32 %v372, %v373
      %v375 = vsel %vm343, %v312, 0.0
      %v376 = vsel %vm343, %v314, 0.0
      %v377 = vadd.f32 %v375, %v376
      %v378 = vsel %vm343, %v316, 0.0
      %v379 = vadd.f32 %v377, %v378
      %v380 = vsel %vm343, %v318, 0.0
      %v381 = vadd.f32 %v379, %v380
      %v382 = vsel %vm343, %v320, 0.0
      %v383 = vadd.f32 %v381, %v382
      %v384 = vsel %vm343, %v322, 0.0
      %v385 = vadd.f32 %v383, %v384
      %v386 = vsel %vm343, %v324, 0.0
      %v387 = vadd.f32 %v385, %v386
      %v388 = vsel %vm343, %v326, 0.0
      %v389 = vadd.f32 %v387, %v388
      %v390 = vsel %vm343, %v328, 0.0
      %v391 = vadd.f32 %v389, %v390
      %v392 = vsel %vm343, %v330, 0.0
      %v393 = vadd.f32 %v391, %v392
      %v394 = vsel %vm343, %v332, 0.0
      %v395 = vadd.f32 %v393, %v394
      %v396 = vsel %vm343, %v334, 0.0
      %v397 = vadd.f32 %v395, %v396
      %v398 = vsel %vm343, %v336, 0.0
      %v399 = vadd.f32 %v397, %v398
      %v400 = vsel %vm343, %v338, 0.0
      %v401 = vadd.f32 %v399, %v400
      %v402 = vsel %vm343, %v340, 0.0
      %v403 = vadd.f32 %v401, %v402
      %v404 = vsel %vm343, %v342, 0.0
      %v405 = vadd.f32 %v403, %v404
      %v406 = vsel %vm343, %v374, 0.0
      %v407 = vsel %vm343, %v405, 0.0
      %v408 = vadd.f32 %v406, %v407
      %v409 = vrot.slane %v408, 4
      %v410 = vadd.f32 %v408, %v409
      %v411 = vrot.slane %v410, 2
      %v412 = vadd.f32 %v410, %v411
      %v413 = vrot.slane %v412, 1
      %v414 = vadd.f32 %v412, %v413
      %v415 = vmul.f32 %v414, 0.00390625
      %v416 = vld [vmem:[%s2] sm:$0x1]
      %v417 = vmul.f32 %v415, %v416
      %v418 = vld [vmem:[%s3] sm:$0x1]
      %v419 = vadd.f32 %v417, %v418
      %v420 = vld [vmem:[%s1] sm:$0xf]
      %v422 = vsel %vm343, %v419, 0
      %vm424 = vcmask 1043456
      %v426 = vsel %vm424, %v420, 0
      %428 = vmatpush.msra.mxu0 0.0
      %429 = vmatpush.msra.mxu0 0.0
      %430 = vmatpush.msra.mxu0 0.0
      %431 = vmatpush.msra.mxu0 0.0
      %432 = vmatpush.msra.mxu0 0.0
      %433 = vmatpush.msra.mxu0 0.0
      %434 = vmatpush.msra.mxu0 0.0
      %435 = vmatpush.msra.mxu0 0.0
      %436 = vmatpush.msra.mxu0 0.0
      %437 = vmatpush.msra.mxu0 0.0
      %438 = vmatpush.msra.mxu0 0.0
      %439 = vmatpush.msra.mxu0 0.0
      %440 = vmatpush.msra.mxu0 0.0
      %441 = vmatpush.msra.mxu0 0.0
      %442 = vmatpush.msra.mxu0 0.0
      %443 = vmatpush.msra.mxu0 %v426
      %444 = vmatmul.f32.gmra.mxu0 %v422
      %v445 = vpop.f32.mrf.mxu0
      %v446 = vadd.f32 0.0, %v445
      %447 = vdwg.mxu0
      %v448 = vld [vmem:[%s4] sm:$0x1]
      %v449 = vmul.f32 %v446, %v448
      %v450 = vld [vmem:[%s5] sm:$0x1]
      %v451 = vadd.f32 %v449, %v450
      %v452 = vmax.f32 %v451, 0.0
      %453 = vst.msk [vmem:[#allocation2] sm:$0xff] %vm343, 0.0
      %454 = vst.msk [vmem:[#allocation2 + $0x8] sm:$0xff] %vm343, 0.0
      %455 = vst.msk [vmem:[#allocation2 + $0x10] sm:$0xff] %vm343, 0.0
      %s456 = scalar_lea.vmem [#allocation2], 408
      %457 = vst.msk [vmem:[%s456] sm:$0xff] %vm343, 0.0
      %458 = vst.msk [vmem:[%s456 + $0x8] sm:$0xff] %vm343, 0.0
      %459 = vst.msk [vmem:[%s456 + $0x10] sm:$0xff] %vm343, 0.0
      %460 = vst.msk [vmem:[%s456 + $0x18] sm:$0xff] %vm343, 0.0
      %461 = vst.msk [vmem:[%s456 + $0x20] sm:$0xff] %vm343, 0.0
      %462 = vst.msk [vmem:[%s456 + $0x28] sm:$0xff] %vm343, 0.0
      %s463 = scalar_lea.vmem [#allocation2], 24
      %vm464 = vcmask 24576
      %465 = vst.msk [vmem:[%s463] sm:$0x1] %vm464, 0.0
      %466 = vst.msk [vmem:[%s463 + $0x18] sm:$0x1] %vm464, 0.0
      %467 = vst.msk [vmem:[%s463 + $0x30] sm:$0x1] %vm464, 0.0
      %468 = vst.msk [vmem:[%s463 + $0x48] sm:$0x1] %vm464, 0.0
      %469 = vst.msk [vmem:[%s463 + $0x60] sm:$0x1] %vm464, 0.0
      %470 = vst.msk [vmem:[%s463 + $0x78] sm:$0x1] %vm464, 0.0
      %471 = vst.msk [vmem:[%s463 + $0x90] sm:$0x1] %vm464, 0.0
      %472 = vst.msk [vmem:[%s463 + $0xa8] sm:$0x1] %vm464, 0.0
      %473 = vst.msk [vmem:[%s463 + $0xc0] sm:$0x1] %vm464, 0.0
      %474 = vst.msk [vmem:[%s463 + $0xd8] sm:$0x1] %vm464, 0.0
      %475 = vst.msk [vmem:[%s463 + $0xf0] sm:$0x1] %vm464, 0.0
      %476 = vst.msk [vmem:[%s463 + $0x108] sm:$0x1] %vm464, 0.0
      %477 = vst.msk [vmem:[%s463 + $0x120] sm:$0x1] %vm464, 0.0
      %478 = vst.msk [vmem:[%s463 + $0x138] sm:$0x1] %vm464, 0.0
      %479 = vst.msk [vmem:[%s463 + $0x150] sm:$0x1] %vm464, 0.0
      %480 = vst.msk [vmem:[%s463 + $0x168] sm:$0x1] %vm464, 0.0
      %vm481 = vcmask 30720
      %482 = vst.msk [vmem:[%s463 + $0x11] sm:$0x7f] %vm481, 0.0
      %483 = vst.msk [vmem:[%s463 + $0x29] sm:$0x7f] %vm481, 0.0
      %484 = vst.msk [vmem:[%s463 + $0x41] sm:$0x7f] %vm481, 0.0
      %485 = vst.msk [vmem:[%s463 + $0x59] sm:$0x7f] %vm481, 0.0
      %486 = vst.msk [vmem:[%s463 + $0x71] sm:$0x7f] %vm481, 0.0
      %487 = vst.msk [vmem:[%s463 + $0x89] sm:$0x7f] %vm481, 0.0
      %488 = vst.msk [vmem:[%s463 + $0xa1] sm:$0x7f] %vm481, 0.0
      %489 = vst.msk [vmem:[%s463 + $0xb9] sm:$0x7f] %vm481, 0.0
      %490 = vst.msk [vmem:[%s463 + $0xd1] sm:$0x7f] %vm481, 0.0
      %491 = vst.msk [vmem:[%s463 + $0xe9] sm:$0x7f] %vm481, 0.0
      %492 = vst.msk [vmem:[%s463 + $0x101] sm:$0x7f] %vm481, 0.0
      %493 = vst.msk [vmem:[%s463 + $0x119] sm:$0x7f] %vm481, 0.0
      %494 = vst.msk [vmem:[%s463 + $0x131] sm:$0x7f] %vm481, 0.0
      %495 = vst.msk [vmem:[%s463 + $0x149] sm:$0x7f] %vm481, 0.0
      %496 = vst.msk [vmem:[%s463 + $0x161] sm:$0x7f] %vm481, 0.0
      %497 = vst.msk [vmem:[%s463 + $0x179] sm:$0x7f] %vm481, 0.0
      %v498 = vperm.slane %v452, 0
      %v499 = vadd.f32 %v311, %v498
      %v500 = vadd.f32 %v312, %v498
      %v501 = vadd.f32 %v313, %v498
      %v502 = vadd.f32 %v314, %v498
      %v503 = vadd.f32 %v315, %v498
      %v504 = vadd.f32 %v316, %v498
      %v505 = vadd.f32 %v317, %v498
      %v506 = vadd.f32 %v318, %v498
      %v507 = vadd.f32 %v319, %v498
      %v508 = vadd.f32 %v320, %v498
      %v509 = vadd.f32 %v321, %v498
      %v510 = vadd.f32 %v322, %v498
      %v511 = vadd.f32 %v323, %v498
      %v512 = vadd.f32 %v324, %v498
      %v513 = vadd.f32 %v325, %v498
      %v514 = vadd.f32 %v326, %v498
      %v515 = vadd.f32 %v327, %v498
      %v516 = vadd.f32 %v328, %v498
      %v517 = vadd.f32 %v329, %v498
      %v518 = vadd.f32 %v330, %v498
      %v519 = vadd.f32 %v331, %v498
      %v520 = vadd.f32 %v332, %v498
      %v521 = vadd.f32 %v333, %v498
      %v522 = vadd.f32 %v334, %v498
      %v523 = vadd.f32 %v335, %v498
      %v524 = vadd.f32 %v336, %v498
      %v525 = vadd.f32 %v337, %v498
      %v526 = vadd.f32 %v338, %v498
      %v527 = vadd.f32 %v339, %v498
      %v528 = vadd.f32 %v340, %v498
      %v529 = vadd.f32 %v341, %v498
      %v530 = vadd.f32 %v342, %v498
      %531 = vst.msk [vmem:[%s463 + $0x1] sm:$0xff] %vm343, %v499
      %532 = vst.msk [vmem:[%s463 + $0x9] sm:$0xff] %vm343, %v500
      %533 = vst.msk [vmem:[%s463 + $0x19] sm:$0xff] %vm343, %v501
      %534 = vst.msk [vmem:[%s463 + $0x21] sm:$0xff] %vm343, %v502
      %535 = vst.msk [vmem:[%s463 + $0x31] sm:$0xff] %vm343, %v503
      %536 = vst.msk [vmem:[%s463 + $0x39] sm:$0xff] %vm343, %v504
      %537 = vst.msk [vmem:[%s463 + $0x49] sm:$0xff] %vm343, %v505
      %538 = vst.msk [vmem:[%s463 + $0x51] sm:$0xff] %vm343, %v506
      %539 = vst.msk [vmem:[%s463 + $0x61] sm:$0xff] %vm343, %v507
      %540 = vst.msk [vmem:[%s463 + $0x69] sm:$0xff] %vm343, %v508
      %541 = vst.msk [vmem:[%s463 + $0x79] sm:$0xff] %vm343, %v509
      %542 = vst.msk [vmem:[%s463 + $0x81] sm:$0xff] %vm343, %v510
      %543 = vst.msk [vmem:[%s463 + $0x91] sm:$0xff] %vm343, %v511
      %544 = vst.msk [vmem:[%s463 + $0x99] sm:$0xff] %vm343, %v512
      %545 = vst.msk [vmem:[%s463 + $0xa9] sm:$0xff] %vm343, %v513
      %546 = vst.msk [vmem:[%s463 + $0xb1] sm:$0xff] %vm343, %v514
      %547 = vst.msk [vmem:[%s463 + $0xc1] sm:$0xff] %vm343, %v515
      %548 = vst.msk [vmem:[%s463 + $0xc9] sm:$0xff] %vm343, %v516
      %549 = vst.msk [vmem:[%s463 + $0xd9] sm:$0xff] %vm343, %v517
      %550 = vst.msk [vmem:[%s463 + $0xe1] sm:$0xff] %vm343, %v518
      %551 = vst.msk [vmem:[%s463 + $0xf1] sm:$0xff] %vm343, %v519
      %552 = vst.msk [vmem:[%s463 + $0xf9] sm:$0xff] %vm343, %v520
      %553 = vst.msk [vmem:[%s463 + $0x109] sm:$0xff] %vm343, %v521
      %554 = vst.msk [vmem:[%s463 + $0x111] sm:$0xff] %vm343, %v522
      %555 = vst.msk [vmem:[%s463 + $0x121] sm:$0xff] %vm343, %v523
      %556 = vst.msk [vmem:[%s463 + $0x129] sm:$0xff] %vm343, %v524
      %557 = vst.msk [vmem:[%s463 + $0x139] sm:$0xff] %vm343, %v525
      %558 = vst.msk [vmem:[%s463 + $0x141] sm:$0xff] %vm343, %v526
      %559 = vst.msk [vmem:[%s463 + $0x151] sm:$0xff] %vm343, %v527
      %560 = vst.msk [vmem:[%s463 + $0x159] sm:$0xff] %vm343, %v528
      %561 = vst.msk [vmem:[%s463 + $0x169] sm:$0xff] %vm343, %v529
      %562 = vst.msk [vmem:[%s463 + $0x171] sm:$0xff] %vm343, %v530
      %v563 = vld [vmem:[%s6] sm:$0xf]
      %v564 = vld [vmem:[%s6 + $0x4] sm:$0xf]
      %v565 = vld [vmem:[%s6 + $0x8] sm:$0xf]
      %v566 = vld [vmem:[%s6 + $0xc] sm:$0xf]
      %v567 = vld [vmem:[%s6 + $0x10] sm:$0xf]
      %v568 = vld [vmem:[%s6 + $0x14] sm:$0xf]
      %v569 = vld [vmem:[%s6 + $0x18] sm:$0xf]
      %v570 = vld [vmem:[%s6 + $0x1c] sm:$0xf]
      %v571 = vld [vmem:[%s6 + $0x20] sm:$0xf]
      %v572 = vld [vmem:[#allocation2] sm:$0xff]
      %v573 = vld [vmem:[#allocation2 + $0x8] sm:$0xff]
      %v574 = vld [vmem:[#allocation2 + $0x10] sm:$0xff]
      %v575 = vld [vmem:[#allocation2 + $0x18] sm:$0xff]
      %v576 = vld [vmem:[#allocation2 + $0x20] sm:$0xff]
      %v577 = vld [vmem:[#allocation2 + $0x28] sm:$0xff]
      %v578 = vld [vmem:[#allocation2 + $0x30] sm:$0xff]
      %v579 = vld [vmem:[#allocation2 + $0x38] sm:$0xff]
      %v580 = vld [vmem:[#allocation2 + $0x40] sm:$0xff]
      %v581 = vld [vmem:[#allocation2 + $0x48] sm:$0xff]
      %v582 = vld [vmem:[#allocation2 + $0x50] sm:$0xff]
      %v583 = vld [vmem:[#allocation2 + $0x58] sm:$0xff]
      %v584 = vld [vmem:[#allocation2 + $0x60] sm:$0xff]
      %v585 = vld [vmem:[#allocation2 + $0x68] sm:$0xff]
      %v586 = vld [vmem:[#allocation2 + $0x70] sm:$0xff]
      %v587 = vld [vmem:[#allocation2 + $0x78] sm:$0xff]
      %v588 = vld [vmem:[#allocation2 + $0x80] sm:$0xff]
      %v589 = vld [vmem:[#allocation2 + $0x88] sm:$0xff]
      %v590 = vld [vmem:[#allocation2 + $0x90] sm:$0xff]
      %v591 = vld [vmem:[#allocation2 + $0x98] sm:$0xff]
      %v592 = vld [vmem:[#allocation2 + $0xa0] sm:$0xff]
      %v593 = vld [vmem:[#allocation2 + $0xa8] sm:$0xff]
      %v594 = vld [vmem:[#allocation2 + $0xb0] sm:$0xff]
      %v595 = vld [vmem:[#allocation2 + $0xb8] sm:$0xff]
      %v596 = vld [vmem:[#allocation2 + $0xc0] sm:$0xff]
      %v597 = vld [vmem:[#allocation2 + $0xc8] sm:$0xff]
      %v598 = vld [vmem:[#allocation2 + $0xd0] sm:$0xff]
      %v599 = vld [vmem:[#allocation2 + $0xd8] sm:$0xff]
      %v600 = vld [vmem:[#allocation2 + $0xe0] sm:$0xff]
      %v601 = vld [vmem:[#allocation2 + $0xe8] sm:$0xff]
      %v602 = vld [vmem:[#allocation2 + $0xf0] sm:$0xff]
      %v603 = vld [vmem:[#allocation2 + $0xf8] sm:$0xff]
      %v604 = vld [vmem:[#allocation2 + $0x100] sm:$0xff]
      %v605 = vld [vmem:[#allocation2 + $0x108] sm:$0xff]
      %v606 = vld [vmem:[#allocation2 + $0x110] sm:$0xff]
      %v607 = vld [vmem:[#allocation2 + $0x118] sm:$0xff]
      %v608 = vld [vmem:[#allocation2 + $0x120] sm:$0xff]
      %v609 = vld [vmem:[#allocation2 + $0x128] sm:$0xff]
      %v610 = vld [vmem:[#allocation2 + $0x130] sm:$0xff]
      %v611 = vld [vmem:[#allocation2 + $0x138] sm:$0xff]
      %v612 = vld [vmem:[#allocation2 + $0x140] sm:$0xff]
      %v613 = vld [vmem:[#allocation2 + $0x148] sm:$0xff]
      %v614 = vld [vmem:[#allocation2 + $0x150] sm:$0xff]
      %v615 = vld [vmem:[#allocation2 + $0x158] sm:$0xff]
      %v616 = vld [vmem:[#allocation2 + $0x160] sm:$0xff]
      %v617 = vld [vmem:[#allocation2 + $0x168] sm:$0xff]
      %v618 = vld [vmem:[#allocation2 + $0x170] sm:$0xff]
      %v619 = vld [vmem:[#allocation2 + $0x178] sm:$0xff]
      %v620 = vld [vmem:[#allocation2 + $0x180] sm:$0xff]
      %vm670 = vcmask 1046528
      %v671 = vrot.slane %v572, 1
      %v672 = vrot.slane %v573, 1
      %v673 = vsel %vm670, %v671, %v672
      %v674 = vrot.slane %v574, 1
      %v675 = vsel %vm670, %v672, %v674
      %v676 = vrot.slane %v575, 1
      %v677 = vsel %vm670, %v674, %v676
      %v678 = vrot.slane %v576, 1
      %v679 = vsel %vm670, %v676, %v678
      %v680 = vrot.slane %v577, 1
      %v681 = vsel %vm670, %v678, %v680
      %v682 = vrot.slane %v578, 1
      %v683 = vsel %vm670, %v680, %v682
      %v684 = vrot.slane %v579, 1
      %v685 = vsel %vm670, %v682, %v684
      %v686 = vrot.slane %v580, 1
      %v687 = vsel %vm670, %v684, %v686
      %v688 = vrot.slane %v581, 1
      %v689 = vsel %vm670, %v686, %v688
      %v690 = vrot.slane %v582, 1
      %v691 = vsel %vm670, %v688, %v690
      %v692 = vrot.slane %v583, 1
      %v693 = vsel %vm670, %v690, %v692
      %v694 = vrot.slane %v584, 1
      %v695 = vsel %vm670, %v692, %v694
      %v696 = vrot.slane %v585, 1
      %v697 = vsel %vm670, %v694, %v696
      %v698 = vrot.slane %v586, 1
      %v699 = vsel %vm670, %v696, %v698
      %v700 = vrot.slane %v587, 1
      %v701 = vsel %vm670, %v698, %v700
      %v702 = vrot.slane %v588, 1
      %v703 = vsel %vm670, %v700, %v702
      %v704 = vrot.slane %v589, 1
      %v705 = vsel %vm670, %v702, %v704
      %v706 = vrot.slane %v590, 1
      %v707 = vsel %vm670, %v704, %v706
      %v708 = vrot.slane %v591, 1
      %v709 = vsel %vm670, %v706, %v708
      %v710 = vrot.slane %v592, 1
      %v711 = vsel %vm670, %v708, %v710
      %v712 = vrot.slane %v593, 1
      %v713 = vsel %vm670, %v710, %v712
      %v714 = vrot.slane %v594, 1
      %v715 = vsel %vm670, %v712, %v714
      %v716 = vrot.slane %v595, 1
      %v717 = vsel %vm670, %v714, %v716
      %v718 = vrot.slane %v596, 1
      %v719 = vsel %vm670, %v716, %v718
      %v720 = vrot.slane %v597, 1
      %v721 = vsel %vm670, %v718, %v720
      %v722 = vrot.slane %v598, 1
      %v723 = vsel %vm670, %v720, %v722
      %v724 = vrot.slane %v599, 1
      %v725 = vsel %vm670, %v722, %v724
      %v726 = vrot.slane %v600, 1
      %v727 = vsel %vm670, %v724, %v726
      %v728 = vrot.slane %v601, 1
      %v729 = vsel %vm670, %v726, %v728
      %v730 = vrot.slane %v602, 1
      %v731 = vsel %vm670, %v728, %v730
      %v732 = vrot.slane %v603, 1
      %v733 = vsel %vm670, %v730, %v732
      %v734 = vrot.slane %v604, 1
      %v735 = vsel %vm670, %v732, %v734
      %v736 = vrot.slane %v605, 1
      %v737 = vsel %vm670, %v734, %v736
      %v738 = vrot.slane %v606, 1
      %v739 = vsel %vm670, %v736, %v738
      %v740 = vrot.slane %v607, 1
      %v741 = vsel %vm670, %v738, %v740
      %v742 = vrot.slane %v608, 1
      %v743 = vsel %vm670, %v740, %v742
      %v744 = vrot.slane %v609, 1
      %v745 = vsel %vm670, %v742, %v744
      %v746 = vrot.slane %v610, 1
      %v747 = vsel %vm670, %v744, %v746
      %v748 = vrot.slane %v611, 1
      %v749 = vsel %vm670, %v746, %v748
      %v750 = vrot.slane %v612, 1
      %v751 = vsel %vm670, %v748, %v750
      %v752 = vrot.slane %v613, 1
      %v753 = vsel %vm670, %v750, %v752
      %v754 = vrot.slane %v614, 1
      %v755 = vsel %vm670, %v752, %v754
      %v756 = vrot.slane %v615, 1
      %v757 = vsel %vm670, %v754, %v756
      %v758 = vrot.slane %v616, 1
      %v759 = vsel %vm670, %v756, %v758
      %v760 = vrot.slane %v617, 1
      %v761 = vsel %vm670, %v758, %v760
      %v762 = vrot.slane %v618, 1
      %v763 = vsel %vm670, %v760, %v762
      %v764 = vrot.slane %v619, 1
      %v765 = vsel %vm670, %v762, %v764
      %v766 = vrot.slane %v620, 1
      %v767 = vsel %vm670, %v764, %v766
      %v768 = vsel %vm343, %v673, 0
      %v770 = vsel %vm343, %v675, 0
      %v772 = vsel %vm343, %v677, 0
      %v774 = vsel %vm343, %v679, 0
      %v776 = vsel %vm343, %v681, 0
      %v778 = vsel %vm343, %v683, 0
      %v780 = vsel %vm343, %v685, 0
      %v782 = vsel %vm343, %v687, 0
      %v784 = vsel %vm343, %v689, 0
      %v786 = vsel %vm343, %v691, 0
      %v788 = vsel %vm343, %v693, 0
      %v790 = vsel %vm343, %v695, 0
      %v792 = vsel %vm343, %v697, 0
      %v794 = vsel %vm343, %v699, 0
      %v796 = vsel %vm343, %v701, 0
      %v798 = vsel %vm343, %v703, 0
      %v800 = vsel %vm343, %v705, 0
      %v802 = vsel %vm343, %v707, 0
      %v804 = vsel %vm343, %v709, 0
      %v806 = vsel %vm343, %v711, 0
      %v808 = vsel %vm343, %v713, 0
      %v810 = vsel %vm343, %v715, 0
      %v812 = vsel %vm343, %v717, 0
      %v814 = vsel %vm343, %v719, 0
      %v816 = vsel %vm343, %v721, 0
      %v818 = vsel %vm343, %v723, 0
      %v820 = vsel %vm343, %v725, 0
      %v822 = vsel %vm343, %v727, 0
      %v824 = vsel %vm343, %v729, 0
      %v826 = vsel %vm343, %v731, 0
      %v828 = vsel %vm343, %v733, 0
      %v830 = vsel %vm343, %v735, 0
      %v832 = vsel %vm343, %v737, 0
      %v834 = vsel %vm343, %v739, 0
      %v836 = vsel %vm343, %v741, 0
      %v838 = vsel %vm343, %v743, 0
      %v840 = vsel %vm343, %v745, 0
      %v842 = vsel %vm343, %v747, 0
      %v844 = vsel %vm343, %v749, 0
      %v846 = vsel %vm343, %v751, 0
      %v848 = vsel %vm343, %v753, 0
      %v850 = vsel %vm343, %v755, 0
      %v852 = vsel %vm343, %v757, 0
      %v854 = vsel %vm343, %v759, 0
      %v856 = vsel %vm343, %v761, 0
      %v858 = vsel %vm343, %v763, 0
      %v860 = vsel %vm343, %v765, 0
      %v862 = vsel %vm343, %v767, 0
      %v865 = vsel %vm424, %v564, 0
      %867 = vmatpush.msra.mxu0 0.0
      %868 = vmatpush.msra.mxu0 0.0
      %869 = vmatpush.msra.mxu0 0.0
      %870 = vmatpush.msra.mxu0 0.0
      %871 = vmatpush.msra.mxu0 0.0
      %872 = vmatpush.msra.mxu0 0.0
      %873 = vmatpush.msra.mxu0 0.0
      %874 = vmatpush.msra.mxu0 0.0
      %875 = vmatpush.msra.mxu0 0.0
      %876 = vmatpush.msra.mxu0 0.0
      %877 = vmatpush.msra.mxu0 0.0
      %878 = vmatpush.msra.mxu0 0.0
      %879 = vmatpush.msra.mxu0 0.0
      %880 = vmatpush.msra.mxu0 0.0
      %881 = vmatpush.msra.mxu0 0.0
      %882 = vmatpush.msra.mxu0 %v865
      %883 = vmatmul.f32.gmra.mxu0 %v768
      %v884 = vpop.f32.mrf.mxu0
      %v885 = vadd.f32 0.0, %v884
      %886 = vmatmul.f32.gmra.mxu0 %v770
      %v887 = vpop.f32.mrf.mxu0
      %v888 = vadd.f32 0.0, %v887
      %889 = vmatmul.f32.gmra.mxu0 %v772
      %v890 = vpop.f32.mrf.mxu0
      %891 = vmatmul.f32.gmra.mxu0 %v774
      %v892 = vpop.f32.mrf.mxu0
      %v893 = vadd.f32 0.0, %v892
      %894 = vmatmul.f32.gmra.mxu0 %v776
      %v895 = vpop.f32.mrf.mxu0
      %v896 = vadd.f32 0.0, %v895
      %897 = vmatmul.f32.gmra.mxu0 %v778
      %v898 = vpop.f32.mrf.mxu0
      %899 = vmatmul.f32.gmra.mxu0 %v780
      %v900 = vpop.f32.mrf.mxu0
      %v901 = vadd.f32 0.0, %v900
      %902 = vmatmul.f32.gmra.mxu0 %v782
      %v903 = vpop.f32.mrf.mxu0
      %v904 = vadd.f32 0.0, %v903
      %905 = vmatmul.f32.gmra.mxu0 %v784
      %v906 = vpop.f32.mrf.mxu0
      %907 = vmatmul.f32.gmra.mxu0 %v786
      %v908 = vpop.f32.mrf.mxu0
      %v909 = vadd.f32 0.0, %v908
      %910 = vmatmul.f32.gmra.mxu0 %v788
      %v911 = vpop.f32.mrf.mxu0
      %v912 = vadd.f32 0.0, %v911
      %913 = vmatmul.f32.gmra.mxu0 %v790
      %v914 = vpop.f32.mrf.mxu0
      %915 = vmatmul.f32.gmra.mxu0 %v792
      %v916 = vpop.f32.mrf.mxu0
      %v917 = vadd.f32 0.0, %v916
      %918 = vmatmul.f32.gmra.mxu0 %v794
      %v919 = vpop.f32.mrf.mxu0
      %v920 = vadd.f32 0.0, %v919
      %921 = vmatmul.f32.gmra.mxu0 %v796
      %v922 = vpop.f32.mrf.mxu0
      %923 = vmatmul.f32.gmra.mxu0 %v798
      %v924 = vpop.f32.mrf.mxu0
      %v925 = vadd.f32 0.0, %v924
      %926 = vmatmul.f32.gmra.mxu0 %v800
      %v927 = vpop.f32.mrf.mxu0
      %v928 = vadd.f32 0.0, %v927
      %929 = vmatmul.f32.gmra.mxu0 %v802
      %v930 = vpop.f32.mrf.mxu0
      %931 = vmatmul.f32.gmra.mxu0 %v804
      %v932 = vpop.f32.mrf.mxu0
      %v933 = vadd.f32 0.0, %v932
      %934 = vmatmul.f32.gmra.mxu0 %v806
      %v935 = vpop.f32.mrf.mxu0
      %v936 = vadd.f32 0.0, %v935
      %937 = vmatmul.f32.gmra.mxu0 %v808
      %v938 = vpop.f32.mrf.mxu0
      %939 = vmatmul.f32.gmra.mxu0 %v810
      %v940 = vpop.f32.mrf.mxu0
      %v941 = vadd.f32 0.0, %v940
      %942 = vmatmul.f32.gmra.mxu0 %v812
      %v943 = vpop.f32.mrf.mxu0
      %v944 = vadd.f32 0.0, %v943
      %945 = vmatmul.f32.gmra.mxu0 %v814
      %v946 = vpop.f32.mrf.mxu0
      %947 = vmatmul.f32.gmra.mxu0 %v816
      %v948 = vpop.f32.mrf.mxu0
      %v949 = vadd.f32 0.0, %v948
      %950 = vmatmul.f32.gmra.mxu0 %v818
      %v951 = vpop.f32.mrf.mxu0
      %v952 = vadd.f32 0.0, %v951
      %953 = vmatmul.f32.gmra.mxu0 %v820
      %v954 = vpop.f32.mrf.mxu0
      %955 = vmatmul.f32.gmra.mxu0 %v822
      %v956 = vpop.f32.mrf.mxu0
      %v957 = vadd.f32 0.0, %v956
      %958 = vmatmul.f32.gmra.mxu0 %v824
      %v959 = vpop.f32.mrf.mxu0
      %v960 = vadd.f32 0.0, %v959
      %961 = vmatmul.f32.gmra.mxu0 %v826
      %v962 = vpop.f32.mrf.mxu0
      %963 = vmatmul.f32.gmra.mxu0 %v828
      %v964 = vpop.f32.mrf.mxu0
      %v965 = vadd.f32 0.0, %v964
      %966 = vmatmul.f32.gmra.mxu0 %v830
      %v967 = vpop.f32.mrf.mxu0
      %v968 = vadd.f32 0.0, %v967
      %969 = vmatmul.f32.gmra.mxu0 %v832
      %v970 = vpop.f32.mrf.mxu0
      %971 = vmatmul.f32.gmra.mxu0 %v834
      %v972 = vpop.f32.mrf.mxu0
      %v973 = vadd.f32 0.0, %v972
      %974 = vmatmul.f32.gmra.mxu0 %v836
      %v975 = vpop.f32.mrf.mxu0
      %v976 = vadd.f32 0.0, %v975
      %977 = vmatmul.f32.gmra.mxu0 %v838
      %v978 = vpop.f32.mrf.mxu0
      %979 = vmatmul.f32.gmra.mxu0 %v840
      %v980 = vpop.f32.mrf.mxu0
      %v981 = vadd.f32 0.0, %v980
      %982 = vmatmul.f32.gmra.mxu0 %v842
      %v983 = vpop.f32.mrf.mxu0
      %v984 = vadd.f32 0.0, %v983
      %985 = vmatmul.f32.gmra.mxu0 %v844
      %v986 = vpop.f32.mrf.mxu0
      %987 = vmatmul.f32.gmra.mxu0 %v846
      %v988 = vpop.f32.mrf.mxu0
      %v989 = vadd.f32 0.0, %v988
      %990 = vmatmul.f32.gmra.mxu0 %v848
      %v991 = vpop.f32.mrf.mxu0
      %v992 = vadd.f32 0.0, %v991
      %993 = vmatmul.f32.gmra.mxu0 %v850
      %v994 = vpop.f32.mrf.mxu0
      %995 = vmatmul.f32.gmra.mxu0 %v852
      %v996 = vpop.f32.mrf.mxu0
      %v997 = vadd.f32 0.0, %v996
      %998 = vmatmul.f32.gmra.mxu0 %v854
      %v999 = vpop.f32.mrf.mxu0
      %v1000 = vadd.f32 0.0, %v999
      %1001 = vmatmul.f32.gmra.mxu0 %v856
      %v1002 = vpop.f32.mrf.mxu0
      %1003 = vmatmul.f32.gmra.mxu0 %v858
      %v1004 = vpop.f32.mrf.mxu0
      %v1005 = vadd.f32 0.0, %v1004
      %1006 = vmatmul.f32.gmra.mxu0 %v860
      %v1007 = vpop.f32.mrf.mxu0
      %v1008 = vadd.f32 0.0, %v1007
      %1009 = vmatmul.f32.gmra.mxu0 %v862
      %v1010 = vpop.f32.mrf.mxu0
      %1011 = vdwg.mxu0
      %v1012 = vsel %vm343, %v572, 0
      %v1014 = vsel %vm343, %v573, 0
      %v1016 = vsel %vm343, %v574, 0
      %v1018 = vsel %vm343, %v575, 0
      %v1020 = vsel %vm343, %v576, 0
      %v1022 = vsel %vm343, %v577, 0
      %v1024 = vsel %vm343, %v578, 0
      %v1026 = vsel %vm343, %v579, 0
      %v1028 = vsel %vm343, %v580, 0
      %v1030 = vsel %vm343, %v581, 0
      %v1032 = vsel %vm343, %v582, 0
      %v1034 = vsel %vm343, %v583, 0
      %v1036 = vsel %vm343, %v584, 0
      %v1038 = vsel %vm343, %v585, 0
      %v1040 = vsel %vm343, %v586, 0
      %v1042 = vsel %vm343, %v587, 0
      %v1044 = vsel %vm343, %v588, 0
      %v1046 = vsel %vm343, %v589, 0
      %v1048 = vsel %vm343, %v590, 0
      %v1050 = vsel %vm343, %v591, 0
      %v1052 = vsel %vm343, %v592, 0
      %v1054 = vsel %vm343, %v593, 0
      %v1056 = vsel %vm343, %v594, 0
      %v1058 = vsel %vm343, %v595, 0
      %v1060 = vsel %vm343, %v596, 0
      %v1062 = vsel %vm343, %v597, 0
      %v1064 = vsel %vm343, %v598, 0
      %v1066 = vsel %vm343, %v599, 0
      %v1068 = vsel %vm343, %v600, 0
      %v1070 = vsel %vm343, %v601, 0
      %v1072 = vsel %vm343, %v602, 0
      %v1074 = vsel %vm343, %v603, 0
      %v1076 = vsel %vm343, %v604, 0
      %v1078 = vsel %vm343, %v605, 0
      %v1080 = vsel %vm343, %v606, 0
      %v1082 = vsel %vm343, %v607, 0
      %v1084 = vsel %vm343, %v608, 0
      %v1086 = vsel %vm343, %v609, 0
      %v1088 = vsel %vm343, %v610, 0
      %v1090 = vsel %vm343, %v611, 0
      %v1092 = vsel %vm343, %v612, 0
      %v1094 = vsel %vm343, %v613, 0
      %v1096 = vsel %vm343, %v614, 0
      %v1098 = vsel %vm343, %v615, 0
      %v1100 = vsel %vm343, %v616, 0
      %v1102 = vsel %vm343, %v617, 0
      %v1104 = vsel %vm343, %v618, 0
      %v1106 = vsel %vm343, %v619, 0
      %v1109 = vsel %vm424, %v563, 0
      %1111 = vmatpush.msra.mxu0 0.0
      %1112 = vmatpush.msra.mxu0 0.0
      %1113 = vmatpush.msra.mxu0 0.0
      %1114 = vmatpush.msra.mxu0 0.0
      %1115 = vmatpush.msra.mxu0 0.0
      %1116 = vmatpush.msra.mxu0 0.0
      %1117 = vmatpush.msra.mxu0 0.0
      %1118 = vmatpush.msra.mxu0 0.0
      %1119 = vmatpush.msra.mxu0 0.0
      %1120 = vmatpush.msra.mxu0 0.0
      %1121 = vmatpush.msra.mxu0 0.0
      %1122 = vmatpush.msra.mxu0 0.0
      %1123 = vmatpush.msra.mxu0 0.0
      %1124 = vmatpush.msra.mxu0 0.0
      %1125 = vmatpush.msra.mxu0 0.0
      %1126 = vmatpush.msra.mxu0 %v1109
      %1127 = vmatmul.f32.gmra.mxu0 %v1012
      %v1128 = vpop.f32.mrf.mxu0
      %v1129 = vadd.f32 %v885, %v1128
      %1130 = vmatmul.f32.gmra.mxu0 %v1014
      %v1131 = vpop.f32.mrf.mxu0
      %v1132 = vadd.f32 %v888, %v1131
      %1133 = vmatmul.f32.gmra.mxu0 %v1016
      %v1134 = vpop.f32.mrf.mxu0
      %1135 = vmatmul.f32.gmra.mxu0 %v1018
      %v1136 = vpop.f32.mrf.mxu0
      %v1137 = vadd.f32 %v893, %v1136
      %1138 = vmatmul.f32.gmra.mxu0 %v1020
      %v1139 = vpop.f32.mrf.mxu0
      %v1140 = vadd.f32 %v896, %v1139
      %1141 = vmatmul.f32.gmra.mxu0 %v1022
      %v1142 = vpop.f32.mrf.mxu0
      %1143 = vmatmul.f32.gmra.mxu0 %v1024
      %v1144 = vpop.f32.mrf.mxu0
      %v1145 = vadd.f32 %v901, %v1144
      %1146 = vmatmul.f32.gmra.mxu0 %v1026
      %v1147 = vpop.f32.mrf.mxu0
      %v1148 = vadd.f32 %v904, %v1147
      %1149 = vmatmul.f32.gmra.mxu0 %v1028
      %v1150 = vpop.f32.mrf.mxu0
      %1151 = vmatmul.f32.gmra.mxu0 %v1030
      %v1152 = vpop.f32.mrf.mxu0
      %v1153 = vadd.f32 %v909, %v1152
      %1154 = vmatmul.f32.gmra.mxu0 %v1032
      %v1155 = vpop.f32.mrf.mxu0
      %v1156 = vadd.f32 %v912, %v1155
      %1157 = vmatmul.f32.gmra.mxu0 %v1034
      %v1158 = vpop.f32.mrf.mxu0
      %1159 = vmatmul.f32.gmra.mxu0 %v1036
      %v1160 = vpop.f32.mrf.mxu0
      %v1161 = vadd.f32 %v917, %v1160
      %1162 = vmatmul.f32.gmra.mxu0 %v1038
      %v1163 = vpop.f32.mrf.mxu0
      %v1164 = vadd.f32 %v920, %v1163
      %1165 = vmatmul.f32.gmra.mxu0 %v1040
      %v1166 = vpop.f32.mrf.mxu0
      %1167 = vmatmul.f32.gmra.mxu0 %v1042
      %v1168 = vpop.f32.mrf.mxu0
      %v1169 = vadd.f32 %v925, %v1168
      %1170 = vmatmul.f32.gmra.mxu0 %v1044
      %v1171 = vpop.f32.mrf.mxu0
      %v1172 = vadd.f32 %v928, %v1171
      %1173 = vmatmul.f32.gmra.mxu0 %v1046
      %v1174 = vpop.f32.mrf.mxu0
      %1175 = vmatmul.f32.gmra.mxu0 %v1048
      %v1176 = vpop.f32.mrf.mxu0
      %v1177 = vadd.f32 %v933, %v1176
      %1178 = vmatmul.f32.gmra.mxu0 %v1050
      %v1179 = vpop.f32.mrf.mxu0
      %v1180 = vadd.f32 %v936, %v1179
      %1181 = vmatmul.f32.gmra.mxu0 %v1052
      %v1182 = vpop.f32.mrf.mxu0
      %1183 = vmatmul.f32.gmra.mxu0 %v1054
      %v1184 = vpop.f32.mrf.mxu0
      %v1185 = vadd.f32 %v941, %v1184
      %1186 = vmatmul.f32.gmra.mxu0 %v1056
      %v1187 = vpop.f32.mrf.mxu0
      %v1188 = vadd.f32 %v944, %v1187
      %1189 = vmatmul.f32.gmra.mxu0 %v1058
      %v1190 = vpop.f32.mrf.mxu0
      %1191 = vmatmul.f32.gmra.mxu0 %v1060
      %v1192 = vpop.f32.mrf.mxu0
      %v1193 = vadd.f32 %v949, %v1192
      %1194 = vmatmul.f32.gmra.mxu0 %v1062
      %v1195 = vpop.f32.mrf.mxu0
      %v1196 = vadd.f32 %v952, %v1195
      %1197 = vmatmul.f32.gmra.mxu0 %v1064
      %v1198 = vpop.f32.mrf.mxu0
      %1199 = vmatmul.f32.gmra.mxu0 %v1066
      %v1200 = vpop.f32.mrf.mxu0
      %v1201 = vadd.f32 %v957, %v1200
      %1202 = vmatmul.f32.gmra.mxu0 %v1068
      %v1203 = vpop.f32.mrf.mxu0
      %v1204 = vadd.f32 %v960, %v1203
      %1205 = vmatmul.f32.gmra.mxu0 %v1070
      %v1206 = vpop.f32.mrf.mxu0
      %1207 = vmatmul.f32.gmra.mxu0 %v1072
      %v1208 = vpop.f32.mrf.mxu0
      %v1209 = vadd.f32 %v965, %v1208
      %1210 = vmatmul.f32.gmra.mxu0 %v1074
      %v1211 = vpop.f32.mrf.mxu0
      %v1212 = vadd.f32 %v968, %v1211
      %1213 = vmatmul.f32.gmra.mxu0 %v1076
      %v1214 = vpop.f32.mrf.mxu0
      %1215 = vmatmul.f32.gmra.mxu0 %v1078
      %v1216 = vpop.f32.mrf.mxu0
      %v1217 = vadd.f32 %v973, %v1216
      %1218 = vmatmul.f32.gmra.mxu0 %v1080
      %v1219 = vpop.f32.mrf.mxu0
      %v1220 = vadd.f32 %v976, %v1219
      %1221 = vmatmul.f32.gmra.mxu0 %v1082
      %v1222 = vpop.f32.mrf.mxu0
      %1223 = vmatmul.f32.gmra.mxu0 %v1084
      %v1224 = vpop.f32.mrf.mxu0
      %v1225 = vadd.f32 %v981, %v1224
      %1226 = vmatmul.f32.gmra.mxu0 %v1086
      %v1227 = vpop.f32.mrf.mxu0
      %v1228 = vadd.f32 %v984, %v1227
      %1229 = vmatmul.f32.gmra.mxu0 %v1088
      %v1230 = vpop.f32.mrf.mxu0
      %1231 = vmatmul.f32.gmra.mxu0 %v1090
      %v1232 = vpop.f32.mrf.mxu0
      %v1233 = vadd.f32 %v989, %v1232
      %1234 = vmatmul.f32.gmra.mxu0 %v1092
      %v1235 = vpop.f32.mrf.mxu0
      %v1236 = vadd.f32 %v992, %v1235
      %1237 = vmatmul.f32.gmra.mxu0 %v1094
      %v1238 = vpop.f32.mrf.mxu0
      %1239 = vmatmul.f32.gmra.mxu0 %v1096
      %v1240 = vpop.f32.mrf.mxu0
      %v1241 = vadd.f32 %v997, %v1240
      %1242 = vmatmul.f32.gmra.mxu0 %v1098
      %v1243 = vpop.f32.mrf.mxu0
      %v1244 = vadd.f32 %v1000, %v1243
      %1245 = vmatmul.f32.gmra.mxu0 %v1100
      %v1246 = vpop.f32.mrf.mxu0
      %1247 = vmatmul.f32.gmra.mxu0 %v1102
      %v1248 = vpop.f32.mrf.mxu0
      %v1249 = vadd.f32 %v1005, %v1248
      %1250 = vmatmul.f32.gmra.mxu0 %v1104
      %v1251 = vpop.f32.mrf.mxu0
      %v1252 = vadd.f32 %v1008, %v1251
      %1253 = vmatmul.f32.gmra.mxu0 %v1106
      %v1254 = vpop.f32.mrf.mxu0
      %1255 = vdwg.mxu0
      %vm1256 = vcmask 1045504
      %v1257 = vrot.slane %v572, 2
      %v1258 = vrot.slane %v573, 2
      %v1259 = vsel %vm1256, %v1257, %v1258
      %v1260 = vrot.slane %v574, 2
      %v1261 = vsel %vm1256, %v1258, %v1260
      %v1262 = vrot.slane %v575, 2
      %v1263 = vsel %vm1256, %v1260, %v1262
      %v1264 = vrot.slane %v576, 2
      %v1265 = vsel %vm1256, %v1262, %v1264
      %v1266 = vrot.slane %v577, 2
      %v1267 = vsel %vm1256, %v1264, %v1266
      %v1268 = vrot.slane %v578, 2
      %v1269 = vsel %vm1256, %v1266, %v1268
      %v1270 = vrot.slane %v579, 2
      %v1271 = vsel %vm1256, %v1268, %v1270
      %v1272 = vrot.slane %v580, 2
      %v1273 = vsel %vm1256, %v1270, %v1272
      %v1274 = vrot.slane %v581, 2
      %v1275 = vsel %vm1256, %v1272, %v1274
      %v1276 = vrot.slane %v582, 2
      %v1277 = vsel %vm1256, %v1274, %v1276
      %v1278 = vrot.slane %v583, 2
      %v1279 = vsel %vm1256, %v1276, %v1278
      %v1280 = vrot.slane %v584, 2
      %v1281 = vsel %vm1256, %v1278, %v1280
      %v1282 = vrot.slane %v585, 2
      %v1283 = vsel %vm1256, %v1280, %v1282
      %v1284 = vrot.slane %v586, 2
      %v1285 = vsel %vm1256, %v1282, %v1284
      %v1286 = vrot.slane %v587, 2
      %v1287 = vsel %vm1256, %v1284, %v1286
      %v1288 = vrot.slane %v588, 2
      %v1289 = vsel %vm1256, %v1286, %v1288
      %v1290 = vrot.slane %v589, 2
      %v1291 = vsel %vm1256, %v1288, %v1290
      %v1292 = vrot.slane %v590, 2
      %v1293 = vsel %vm1256, %v1290, %v1292
      %v1294 = vrot.slane %v591, 2
      %v1295 = vsel %vm1256, %v1292, %v1294
      %v1296 = vrot.slane %v592, 2
      %v1297 = vsel %vm1256, %v1294, %v1296
      %v1298 = vrot.slane %v593, 2
      %v1299 = vsel %vm1256, %v1296, %v1298
      %v1300 = vrot.slane %v594, 2
      %v1301 = vsel %vm1256, %v1298, %v1300
      %v1302 = vrot.slane %v595, 2
      %v1303 = vsel %vm1256, %v1300, %v1302
      %v1304 = vrot.slane %v596, 2
      %v1305 = vsel %vm1256, %v1302, %v1304
      %v1306 = vrot.slane %v597, 2
      %v1307 = vsel %vm1256, %v1304, %v1306
      %v1308 = vrot.slane %v598, 2
      %v1309 = vsel %vm1256, %v1306, %v1308
      %v1310 = vrot.slane %v599, 2
      %v1311 = vsel %vm1256, %v1308, %v1310
      %v1312 = vrot.slane %v600, 2
      %v1313 = vsel %vm1256, %v1310, %v1312
      %v1314 = vrot.slane %v601, 2
      %v1315 = vsel %vm1256, %v1312, %v1314
      %v1316 = vrot.slane %v602, 2
      %v1317 = vsel %vm1256, %v1314, %v1316
      %v1318 = vrot.slane %v603, 2
      %v1319 = vsel %vm1256, %v1316, %v1318
      %v1320 = vrot.slane %v604, 2
      %v1321 = vsel %vm1256, %v1318, %v1320
      %v1322 = vrot.slane %v605, 2
      %v1323 = vsel %vm1256, %v1320, %v1322
      %v1324 = vrot.slane %v606, 2
      %v1325 = vsel %vm1256, %v1322, %v1324
      %v1326 = vrot.slane %v607, 2
      %v1327 = vsel %vm1256, %v1324, %v1326
      %v1328 = vrot.slane %v608, 2
      %v1329 = vsel %vm1256, %v1326, %v1328
      %v1330 = vrot.slane %v609, 2
      %v1331 = vsel %vm1256, %v1328, %v1330
      %v1332 = vrot.slane %v610, 2
      %v1333 = vsel %vm1256, %v1330, %v1332
      %v1334 = vrot.slane %v611, 2
      %v1335 = vsel %vm1256, %v1332, %v1334
      %v1336 = vrot.slane %v612, 2
      %v1337 = vsel %vm1256, %v1334, %v1336
      %v1338 = vrot.slane %v613, 2
      %v1339 = vsel %vm1256, %v1336, %v1338
      %v1340 = vrot.slane %v614, 2
      %v1341 = vsel %vm1256, %v1338, %v1340
      %v1342 = vrot.slane %v615, 2
      %v1343 = vsel %vm1256, %v1340, %v1342
      %v1344 = vrot.slane %v616, 2
      %v1345 = vsel %vm1256, %v1342, %v1344
      %v1346 = vrot.slane %v617, 2
      %v1347 = vsel %vm1256, %v1344, %v1346
      %v1348 = vrot.slane %v618, 2
      %v1349 = vsel %vm1256, %v1346, %v1348
      %v1350 = vrot.slane %v619, 2
      %v1351 = vsel %vm1256, %v1348, %v1350
      %v1352 = vrot.slane %v620, 2
      %v1353 = vsel %vm1256, %v1350, %v1352
      %v1354 = vsel %vm343, %v1259, 0
      %v1356 = vsel %vm343, %v1261, 0
      %v1358 = vsel %vm343, %v1263, 0
      %v1360 = vsel %vm343, %v1265, 0
      %v1362 = vsel %vm343, %v1267, 0
      %v1364 = vsel %vm343, %v1269, 0
      %v1366 = vsel %vm343, %v1271, 0
      %v1368 = vsel %vm343, %v1273, 0
      %v1370 = vsel %vm343, %v1275, 0
      %v1372 = vsel %vm343, %v1277, 0
      %v1374 = vsel %vm343, %v1279, 0
      %v1376 = vsel %vm343, %v1281, 0
      %v1378 = vsel %vm343, %v1283, 0
      %v1380 = vsel %vm343, %v1285, 0
      %v1382 = vsel %vm343, %v1287, 0
      %v1384 = vsel %vm343, %v1289, 0
      %v1386 = vsel %vm343, %v1291, 0
      %v1388 = vsel %vm343, %v1293, 0
      %v1390 = vsel %vm343, %v1295, 0
      %v1392 = vsel %vm343, %v1297, 0
      %v1394 = vsel %vm343, %v1299, 0
      %v1396 = vsel %vm343, %v1301, 0
      %v1398 = vsel %vm343, %v1303, 0
      %v1400 = vsel %vm343, %v1305, 0
      %v1402 = vsel %vm343, %v1307, 0
      %v1404 = vsel %vm343, %v1309, 0
      %v1406 = vsel %vm343, %v1311, 0
      %v1408 = vsel %vm343, %v1313, 0
      %v1410 = vsel %vm343, %v1315, 0
      %v1412 = vsel %vm343, %v1317, 0
      %v1414 = vsel %vm343, %v1319, 0
      %v1416 = vsel %vm343, %v1321, 0
      %v1418 = vsel %vm343, %v1323, 0
      %v1420 = vsel %vm343, %v1325, 0
      %v1422 = vsel %vm343, %v1327, 0
      %v1424 = vsel %vm343, %v1329, 0
      %v1426 = vsel %vm343, %v1331, 0
      %v1428 = vsel %vm343, %v1333, 0
      %v1430 = vsel %vm343, %v1335, 0
      %v1432 = vsel %vm343, %v1337, 0
      %v1434 = vsel %vm343, %v1339, 0
      %v1436 = vsel %vm343, %v1341, 0
      %v1438 = vsel %vm343, %v1343, 0
      %v1440 = vsel %vm343, %v1345, 0
      %v1442 = vsel %vm343, %v1347, 0
      %v1444 = vsel %vm343, %v1349, 0
      %v1446 = vsel %vm343, %v1351, 0
      %v1448 = vsel %vm343, %v1353, 0
      %v1451 = vsel %vm424, %v565, 0
      %1453 = vmatpush.msra.mxu0 0.0
      %1454 = vmatpush.msra.mxu0 0.0
      %1455 = vmatpush.msra.mxu0 0.0
      %1456 = vmatpush.msra.mxu0 0.0
      %1457 = vmatpush.msra.mxu0 0.0
      %1458 = vmatpush.msra.mxu0 0.0
      %1459 = vmatpush.msra.mxu0 0.0
      %1460 = vmatpush.msra.mxu0 0.0
      %1461 = vmatpush.msra.mxu0 0.0
      %1462 = vmatpush.msra.mxu0 0.0
      %1463 = vmatpush.msra.mxu0 0.0
      %1464 = vmatpush.msra.mxu0 0.0
      %1465 = vmatpush.msra.mxu0 0.0
      %1466 = vmatpush.msra.mxu0 0.0
      %1467 = vmatpush.msra.mxu0 0.0
      %1468 = vmatpush.msra.mxu0 %v1451
      %1469 = vmatmul.f32.gmra.mxu0 %v1354
      %v1470 = vpop.f32.mrf.mxu0
      %v1471 = vadd.f32 0.0, %v1470
      %1472 = vmatmul.f32.gmra.mxu0 %v1356
      %v1473 = vpop.f32.mrf.mxu0
      %v1474 = vadd.f32 0.0, %v1473
      %1475 = vmatmul.f32.gmra.mxu0 %v1358
      %v1476 = vpop.f32.mrf.mxu0
      %1477 = vmatmul.f32.gmra.mxu0 %v1360
      %v1478 = vpop.f32.mrf.mxu0
      %v1479 = vadd.f32 0.0, %v1478
      %1480 = vmatmul.f32.gmra.mxu0 %v1362
      %v1481 = vpop.f32.mrf.mxu0
      %v1482 = vadd.f32 0.0, %v1481
      %1483 = vmatmul.f32.gmra.mxu0 %v1364
      %v1484 = vpop.f32.mrf.mxu0
      %1485 = vmatmul.f32.gmra.mxu0 %v1366
      %v1486 = vpop.f32.mrf.mxu0
      %v1487 = vadd.f32 0.0, %v1486
      %1488 = vmatmul.f32.gmra.mxu0 %v1368
      %v1489 = vpop.f32.mrf.mxu0
      %v1490 = vadd.f32 0.0, %v1489
      %1491 = vmatmul.f32.gmra.mxu0 %v1370
      %v1492 = vpop.f32.mrf.mxu0
      %1493 = vmatmul.f32.gmra.mxu0 %v1372
      %v1494 = vpop.f32.mrf.mxu0
      %v1495 = vadd.f32 0.0, %v1494
      %1496 = vmatmul.f32.gmra.mxu0 %v1374
      %v1497 = vpop.f32.mrf.mxu0
      %v1498 = vadd.f32 0.0, %v1497
      %1499 = vmatmul.f32.gmra.mxu0 %v1376
      %v1500 = vpop.f32.mrf.mxu0
      %1501 = vmatmul.f32.gmra.mxu0 %v1378
      %v1502 = vpop.f32.mrf.mxu0
      %v1503 = vadd.f32 0.0, %v1502
      %1504 = vmatmul.f32.gmra.mxu0 %v1380
      %v1505 = vpop.f32.mrf.mxu0
      %v1506 = vadd.f32 0.0, %v1505
      %1507 = vmatmul.f32.gmra.mxu0 %v1382
      %v1508 = vpop.f32.mrf.mxu0
      %1509 = vmatmul.f32.gmra.mxu0 %v1384
      %v1510 = vpop.f32.mrf.mxu0
      %v1511 = vadd.f32 0.0, %v1510
      %1512 = vmatmul.f32.gmra.mxu0 %v1386
      %v1513 = vpop.f32.mrf.mxu0
      %v1514 = vadd.f32 0.0, %v1513
      %1515 = vmatmul.f32.gmra.mxu0 %v1388
      %v1516 = vpop.f32.mrf.mxu0
      %1517 = vmatmul.f32.gmra.mxu0 %v1390
      %v1518 = vpop.f32.mrf.mxu0
      %v1519 = vadd.f32 0.0, %v1518
      %1520 = vmatmul.f32.gmra.mxu0 %v1392
      %v1521 = vpop.f32.mrf.mxu0
      %v1522 = vadd.f32 0.0, %v1521
      %1523 = vmatmul.f32.gmra.mxu0 %v1394
      %v1524 = vpop.f32.mrf.mxu0
      %1525 = vmatmul.f32.gmra.mxu0 %v1396
      %v1526 = vpop.f32.mrf.mxu0
      %v1527 = vadd.f32 0.0, %v1526
      %1528 = vmatmul.f32.gmra.mxu0 %v1398
      %v1529 = vpop.f32.mrf.mxu0
      %v1530 = vadd.f32 0.0, %v1529
      %1531 = vmatmul.f32.gmra.mxu0 %v1400
      %v1532 = vpop.f32.mrf.mxu0
      %1533 = vmatmul.f32.gmra.mxu0 %v1402
      %v1534 = vpop.f32.mrf.mxu0
      %v1535 = vadd.f32 0.0, %v1534
      %1536 = vmatmul.f32.gmra.mxu0 %v1404
      %v1537 = vpop.f32.mrf.mxu0
      %v1538 = vadd.f32 0.0, %v1537
      %1539 = vmatmul.f32.gmra.mxu0 %v1406
      %v1540 = vpop.f32.mrf.mxu0
      %1541 = vmatmul.f32.gmra.mxu0 %v1408
      %v1542 = vpop.f32.mrf.mxu0
      %v1543 = vadd.f32 0.0, %v1542
      %1544 = vmatmul.f32.gmra.mxu0 %v1410
      %v1545 = vpop.f32.mrf.mxu0
      %v1546 = vadd.f32 0.0, %v1545
      %1547 = vmatmul.f32.gmra.mxu0 %v1412
      %v1548 = vpop.f32.mrf.mxu0
      %1549 = vmatmul.f32.gmra.mxu0 %v1414
      %v1550 = vpop.f32.mrf.mxu0
      %v1551 = vadd.f32 0.0, %v1550
      %1552 = vmatmul.f32.gmra.mxu0 %v1416
      %v1553 = vpop.f32.mrf.mxu0
      %v1554 = vadd.f32 0.0, %v1553
      %1555 = vmatmul.f32.gmra.mxu0 %v1418
      %v1556 = vpop.f32.mrf.mxu0
      %1557 = vmatmul.f32.gmra.mxu0 %v1420
      %v1558 = vpop.f32.mrf.mxu0
      %v1559 = vadd.f32 0.0, %v1558
      %1560 = vmatmul.f32.gmra.mxu0 %v1422
      %v1561 = vpop.f32.mrf.mxu0
      %v1562 = vadd.f32 0.0, %v1561
      %1563 = vmatmul.f32.gmra.mxu0 %v1424
      %v1564 = vpop.f32.mrf.mxu0
      %1565 = vmatmul.f32.gmra.mxu0 %v1426
      %v1566 = vpop.f32.mrf.mxu0
      %v1567 = vadd.f32 0.0, %v1566
      %1568 = vmatmul.f32.gmra.mxu0 %v1428
      %v1569 = vpop.f32.mrf.mxu0
      %v1570 = vadd.f32 0.0, %v1569
      %1571 = vmatmul.f32.gmra.mxu0 %v1430
      %v1572 = vpop.f32.mrf.mxu0
      %1573 = vmatmul.f32.gmra.mxu0 %v1432
      %v1574 = vpop.f32.mrf.mxu0
      %v1575 = vadd.f32 0.0, %v1574
      %1576 = vmatmul.f32.gmra.mxu0 %v1434
      %v1577 = vpop.f32.mrf.mxu0
      %v1578 = vadd.f32 0.0, %v1577
      %1579 = vmatmul.f32.gmra.mxu0 %v1436
      %v1580 = vpop.f32.mrf.mxu0
      %1581 = vmatmul.f32.gmra.mxu0 %v1438
      %v1582 = vpop.f32.mrf.mxu0
      %v1583 = vadd.f32 0.0, %v1582
      %1584 = vmatmul.f32.gmra.mxu0 %v1440
      %v1585 = vpop.f32.mrf.mxu0
      %v1586 = vadd.f32 0.0, %v1585
      %1587 = vmatmul.f32.gmra.mxu0 %v1442
      %v1588 = vpop.f32.mrf.mxu0
      %1589 = vmatmul.f32.gmra.mxu0 %v1444
      %v1590 = vpop.f32.mrf.mxu0
      %v1591 = vadd.f32 0.0, %v1590
      %1592 = vmatmul.f32.gmra.mxu0 %v1446
      %v1593 = vpop.f32.mrf.mxu0
      %v1594 = vadd.f32 0.0, %v1593
      %1595 = vmatmul.f32.gmra.mxu0 %v1448
      %v1596 = vpop.f32.mrf.mxu0
      %1597 = vdwg.mxu0
      %v1598 = vadd.f32 %v1129, %v1471
      %v1599 = vadd.f32 %v1132, %v1474
      %v1600 = vadd.f32 %v1137, %v1479
      %v1601 = vadd.f32 %v1140, %v1482
      %v1602 = vadd.f32 %v1145, %v1487
      %v1603 = vadd.f32 %v1148, %v1490
      %v1604 = vadd.f32 %v1153, %v1495
      %v1605 = vadd.f32 %v1156, %v1498
      %v1606 = vadd.f32 %v1161, %v1503
      %v1607 = vadd.f32 %v1164, %v1506
      %v1608 = vadd.f32 %v1169, %v1511
      %v1609 = vadd.f32 %v1172, %v1514
      %v1610 = vadd.f32 %v1177, %v1519
      %v1611 = vadd.f32 %v1180, %v1522
      %v1612 = vadd.f32 %v1185, %v1527
      %v1613 = vadd.f32 %v1188, %v1530
      %v1614 = vadd.f32 %v1193, %v1535
      %v1615 = vadd.f32 %v1196, %v1538
      %v1616 = vadd.f32 %v1201, %v1543
      %v1617 = vadd.f32 %v1204, %v1546
      %v1618 = vadd.f32 %v1209, %v1551
      %v1619 = vadd.f32 %v1212, %v1554
      %v1620 = vadd.f32 %v1217, %v1559
      %v1621 = vadd.f32 %v1220, %v1562
      %v1622 = vadd.f32 %v1225, %v1567
      %v1623 = vadd.f32 %v1228, %v1570
      %v1624 = vadd.f32 %v1233, %v1575
      %v1625 = vadd.f32 %v1236, %v1578
      %v1626 = vadd.f32 %v1241, %v1583
      %v1627 = vadd.f32 %v1244, %v1586
      %v1628 = vadd.f32 %v1249, %v1591
      %v1629 = vadd.f32 %v1252, %v1594
      %v1630 = vld [vmem:[%s463] sm:$0xff]
      %v1631 = vld [vmem:[%s463 + $0x8] sm:$0xff]
      %v1632 = vld [vmem:[%s463 + $0x10] sm:$0xff]
      %v1633 = vld [vmem:[%s463 + $0x18] sm:$0xff]
      %v1634 = vld [vmem:[%s463 + $0x20] sm:$0xff]
      %v1635 = vld [vmem:[%s463 + $0x28] sm:$0xff]
      %v1636 = vld [vmem:[%s463 + $0x30] sm:$0xff]
      %v1637 = vld [vmem:[%s463 + $0x38] sm:$0xff]
      %v1638 = vld [vmem:[%s463 + $0x40] sm:$0xff]
      %v1639 = vld [vmem:[%s463 + $0x48] sm:$0xff]
      %v1640 = vld [vmem:[%s463 + $0x50] sm:$0xff]
      %v1641 = vld [vmem:[%s463 + $0x58] sm:$0xff]
      %v1642 = vld [vmem:[%s463 + $0x60] sm:$0xff]
      %v1643 = vld [vmem:[%s463 + $0x68] sm:$0xff]
      %v1644 = vld [vmem:[%s463 + $0x70] sm:$0xff]
      %v1645 = vld [vmem:[%s463 + $0x78] sm:$0xff]
      %v1646 = vld [vmem:[%s463 + $0x80] sm:$0xff]
      %v1647 = vld [vmem:[%s463 + $0x88] sm:$0xff]
      %v1648 = vld [vmem:[%s463 + $0x90] sm:$0xff]
      %v1649 = vld [vmem:[%s463 + $0x98] sm:$0xff]
      %v1650 = vld [vmem:[%s463 + $0xa0] sm:$0xff]
      %v1651 = vld [vmem:[%s463 + $0xa8] sm:$0xff]
      %v1652 = vld [vmem:[%s463 + $0xb0] sm:$0xff]
      %v1653 = vld [vmem:[%s463 + $0xb8] sm:$0xff]
      %v1654 = vld [vmem:[%s463 + $0xc0] sm:$0xff]
      %v1655 = vld [vmem:[%s463 + $0xc8] sm:$0xff]
      %v1656 = vld [vmem:[%s463 + $0xd0] sm:$0xff]
      %v1657 = vld [vmem:[%s463 + $0xd8] sm:$0xff]
      %v1658 = vld [vmem:[%s463 + $0xe0] sm:$0xff]
      %v1659 = vld [vmem:[%s463 + $0xe8] sm:$0xff]
      %v1660 = vld [vmem:[%s463 + $0xf0] sm:$0xff]
      %v1661 = vld [vmem:[%s463 + $0xf8] sm:$0xff]
      %v1662 = vld [vmem:[%s463 + $0x100] sm:$0xff]
      %v1663 = vld [vmem:[%s463 + $0x108] sm:$0xff]
      %v1664 = vld [vmem:[%s463 + $0x110] sm:$0xff]
      %v1665 = vld [vmem:[%s463 + $0x118] sm:$0xff]
      %v1666 = vld [vmem:[%s463 + $0x120] sm:$0xff]
      %v1667 = vld [vmem:[%s463 + $0x128] sm:$0xff]
      %v1668 = vld [vmem:[%s463 + $0x130] sm:$0xff]
      %v1669 = vld [vmem:[%s463 + $0x138] sm:$0xff]
      %v1670 = vld [vmem:[%s463 + $0x140] sm:$0xff]
      %v1671 = vld [vmem:[%s463 + $0x148] sm:$0xff]
      %v1672 = vld [vmem:[%s463 + $0x150] sm:$0xff]
      %v1673 = vld [vmem:[%s463 + $0x158] sm:$0xff]
      %v1674 = vld [vmem:[%s463 + $0x160] sm:$0xff]
      %v1675 = vld [vmem:[%s463 + $0x168] sm:$0xff]
      %v1676 = vld [vmem:[%s463 + $0x170] sm:$0xff]
      %v1677 = vld [vmem:[%s463 + $0x178] sm:$0xff]
      %v1678 = vld [vmem:[%s463 + $0x180] sm:$0xff]
      %v1680 = vsel %vm343, %v1630, 0
      %v1683 = vsel %vm343, %v1631, 0
      %v1686 = vsel %vm343, %v1632, 0
      %v1689 = vsel %vm343, %v1633, 0
      %v1692 = vsel %vm343, %v1634, 0
      %v1695 = vsel %vm343, %v1635, 0
      %v1698 = vsel %vm343, %v1636, 0
      %v1701 = vsel %vm343, %v1637, 0
      %v1704 = vsel %vm343, %v1638, 0
      %v1707 = vsel %vm343, %v1639, 0
      %v1710 = vsel %vm343, %v1640, 0
      %v1713 = vsel %vm343, %v1641, 0
      %v1716 = vsel %vm343, %v1642, 0
      %v1719 = vsel %vm343, %v1643, 0
      %v1722 = vsel %vm343, %v1644, 0
      %v1725 = vsel %vm343, %v1645, 0
      %v1728 = vsel %vm343, %v1646, 0
      %v1731 = vsel %vm343, %v1647, 0
      %v1734 = vsel %vm343, %v1648, 0
      %v1737 = vsel %vm343, %v1649, 0
      %v1740 = vsel %vm343, %v1650, 0
      %v1743 = vsel %vm343, %v1651, 0
      %v1746 = vsel %vm343, %v1652, 0
      %v1749 = vsel %vm343, %v1653, 0
      %v1752 = vsel %vm343, %v1654, 0
      %v1755 = vsel %vm343, %v1655, 0
      %v1758 = vsel %vm343, %v1656, 0
      %v1761 = vsel %vm343, %v1657, 0
      %v1764 = vsel %vm343, %v1658, 0
      %v1767 = vsel %vm343, %v1659, 0
      %v1770 = vsel %vm343, %v1660, 0
      %v1773 = vsel %vm343, %v1661, 0
      %v1776 = vsel %vm343, %v1662, 0
      %v1779 = vsel %vm343, %v1663, 0
      %v1782 = vsel %vm343, %v1664, 0
      %v1785 = vsel %vm343, %v1665, 0
      %v1788 = vsel %vm343, %v1666, 0
      %v1791 = vsel %vm343, %v1667, 0
      %v1794 = vsel %vm343, %v1668, 0
      %v1797 = vsel %vm343, %v1669, 0
      %v1800 = vsel %vm343, %v1670, 0
      %v1803 = vsel %vm343, %v1671, 0
      %v1806 = vsel %vm343, %v1672, 0
      %v1809 = vsel %vm343, %v1673, 0
      %v1812 = vsel %vm343, %v1674, 0
      %v1815 = vsel %vm343, %v1675, 0
      %v1818 = vsel %vm343, %v1676, 0
      %v1821 = vsel %vm343, %v1677, 0
      %v1824 = vsel %vm424, %v566, 0
      %1826 = vmatpush.msra.mxu0 0.0
      %1827 = vmatpush.msra.mxu0 0.0
      %1828 = vmatpush.msra.mxu0 0.0
      %1829 = vmatpush.msra.mxu0 0.0
      %1830 = vmatpush.msra.mxu0 0.0
      %1831 = vmatpush.msra.mxu0 0.0
      %1832 = vmatpush.msra.mxu0 0.0
      %1833 = vmatpush.msra.mxu0 0.0
      %1834 = vmatpush.msra.mxu0 0.0
      %1835 = vmatpush.msra.mxu0 0.0
      %1836 = vmatpush.msra.mxu0 0.0
      %1837 = vmatpush.msra.mxu0 0.0
      %1838 = vmatpush.msra.mxu0 0.0
      %1839 = vmatpush.msra.mxu0 0.0
      %1840 = vmatpush.msra.mxu0 0.0
      %1841 = vmatpush.msra.mxu0 %v1824
      %1842 = vmatmul.f32.gmra.mxu0 %v1680
      %v1843 = vpop.f32.mrf.mxu0
      %v1844 = vadd.f32 0.0, %v1843
      %1845 = vmatmul.f32.gmra.mxu0 %v1683
      %v1846 = vpop.f32.mrf.mxu0
      %v1847 = vadd.f32 0.0, %v1846
      %1848 = vmatmul.f32.gmra.mxu0 %v1686
      %v1849 = vpop.f32.mrf.mxu0
      %1850 = vmatmul.f32.gmra.mxu0 %v1689
      %v1851 = vpop.f32.mrf.mxu0
      %v1852 = vadd.f32 0.0, %v1851
      %1853 = vmatmul.f32.gmra.mxu0 %v1692
      %v1854 = vpop.f32.mrf.mxu0
      %v1855 = vadd.f32 0.0, %v1854
      %1856 = vmatmul.f32.gmra.mxu0 %v1695
      %v1857 = vpop.f32.mrf.mxu0
      %1858 = vmatmul.f32.gmra.mxu0 %v1698
      %v1859 = vpop.f32.mrf.mxu0
      %v1860 = vadd.f32 0.0, %v1859
      %1861 = vmatmul.f32.gmra.mxu0 %v1701
      %v1862 = vpop.f32.mrf.mxu0
      %v1863 = vadd.f32 0.0, %v1862
      %1864 = vmatmul.f32.gmra.mxu0 %v1704
      %v1865 = vpop.f32.mrf.mxu0
      %1866 = vmatmul.f32.gmra.mxu0 %v1707
      %v1867 = vpop.f32.mrf.mxu0
      %v1868 = vadd.f32 0.0, %v1867
      %1869 = vmatmul.f32.gmra.mxu0 %v1710
      %v1870 = vpop.f32.mrf.mxu0
      %v1871 = vadd.f32 0.0, %v1870
      %1872 = vmatmul.f32.gmra.mxu0 %v1713
      %v1873 = vpop.f32.mrf.mxu0
      %1874 = vmatmul.f32.gmra.mxu0 %v1716
      %v1875 = vpop.f32.mrf.mxu0
      %v1876 = vadd.f32 0.0, %v1875
      %1877 = vmatmul.f32.gmra.mxu0 %v1719
      %v1878 = vpop.f32.mrf.mxu0
      %v1879 = vadd.f32 0.0, %v1878
      %1880 = vmatmul.f32.gmra.mxu0 %v1722
      %v1881 = vpop.f32.mrf.mxu0
      %1882 = vmatmul.f32.gmra.mxu0 %v1725
      %v1883 = vpop.f32.mrf.mxu0
      %v1884 = vadd.f32 0.0, %v1883
      %1885 = vmatmul.f32.gmra.mxu0 %v1728
      %v1886 = vpop.f32.mrf.mxu0
      %v1887 = vadd.f32 0.0, %v1886
      %1888 = vmatmul.f32.gmra.mxu0 %v1731
      %v1889 = vpop.f32.mrf.mxu0
      %1890 = vmatmul.f32.gmra.mxu0 %v1734
      %v1891 = vpop.f32.mrf.mxu0
      %v1892 = vadd.f32 0.0, %v1891
      %1893 = vmatmul.f32.gmra.mxu0 %v1737
      %v1894 = vpop.f32.mrf.mxu0
      %v1895 = vadd.f32 0.0, %v1894
      %1896 = vmatmul.f32.gmra.mxu0 %v1740
      %v1897 = vpop.f32.mrf.mxu0
      %1898 = vmatmul.f32.gmra.mxu0 %v1743
      %v1899 = vpop.f32.mrf.mxu0
      %v1900 = vadd.f32 0.0, %v1899
      %1901 = vmatmul.f32.gmra.mxu0 %v1746
      %v1902 = vpop.f32.mrf.mxu0
      %v1903 = vadd.f32 0.0, %v1902
      %1904 = vmatmul.f32.gmra.mxu0 %v1749
      %v1905 = vpop.f32.mrf.mxu0
      %1906 = vmatmul.f32.gmra.mxu0 %v1752
      %v1907 = vpop.f32.mrf.mxu0
      %v1908 = vadd.f32 0.0, %v1907
      %1909 = vmatmul.f32.gmra.mxu0 %v1755
      %v1910 = vpop.f32.mrf.mxu0
      %v1911 = vadd.f32 0.0, %v1910
      %1912 = vmatmul.f32.gmra.mxu0 %v1758
      %v1913 = vpop.f32.mrf.mxu0
      %1914 = vmatmul.f32.gmra.mxu0 %v1761
      %v1915 = vpop.f32.mrf.mxu0
      %v1916 = vadd.f32 0.0, %v1915
      %1917 = vmatmul.f32.gmra.mxu0 %v1764
      %v1918 = vpop.f32.mrf.mxu0
      %v1919 = vadd.f32 0.0, %v1918
      %1920 = vmatmul.f32.gmra.mxu0 %v1767
      %v1921 = vpop.f32.mrf.mxu0
      %1922 = vmatmul.f32.gmra.mxu0 %v1770
      %v1923 = vpop.f32.mrf.mxu0
      %v1924 = vadd.f32 0.0, %v1923
      %1925 = vmatmul.f32.gmra.mxu0 %v1773
      %v1926 = vpop.f32.mrf.mxu0
      %v1927 = vadd.f32 0.0, %v1926
      %1928 = vmatmul.f32.gmra.mxu0 %v1776
      %v1929 = vpop.f32.mrf.mxu0
      %1930 = vmatmul.f32.gmra.mxu0 %v1779
      %v1931 = vpop.f32.mrf.mxu0
      %v1932 = vadd.f32 0.0, %v1931
      %1933 = vmatmul.f32.gmra.mxu0 %v1782
      %v1934 = vpop.f32.mrf.mxu0
      %v1935 = vadd.f32 0.0, %v1934
      %1936 = vmatmul.f32.gmra.mxu0 %v1785
      %v1937 = vpop.f32.mrf.mxu0
      %1938 = vmatmul.f32.gmra.mxu0 %v1788
      %v1939 = vpop.f32.mrf.mxu0
      %v1940 = vadd.f32 0.0, %v1939
      %1941 = vmatmul.f32.gmra.mxu0 %v1791
      %v1942 = vpop.f32.mrf.mxu0
      %v1943 = vadd.f32 0.0, %v1942
      %1944 = vmatmul.f32.gmra.mxu0 %v1794
      %v1945 = vpop.f32.mrf.mxu0
      %1946 = vmatmul.f32.gmra.mxu0 %v1797
      %v1947 = vpop.f32.mrf.mxu0
      %v1948 = vadd.f32 0.0, %v1947
      %1949 = vmatmul.f32.gmra.mxu0 %v1800
      %v1950 = vpop.f32.mrf.mxu0
      %v1951 = vadd.f32 0.0, %v1950
      %1952 = vmatmul.f32.gmra.mxu0 %v1803
      %v1953 = vpop.f32.mrf.mxu0
      %1954 = vmatmul.f32.gmra.mxu0 %v1806
      %v1955 = vpop.f32.mrf.mxu0
      %v1956 = vadd.f32 0.0, %v1955
      %1957 = vmatmul.f32.gmra.mxu0 %v1809
      %v1958 = vpop.f32.mrf.mxu0
      %v1959 = vadd.f32 0.0, %v1958
      %1960 = vmatmul.f32.gmra.mxu0 %v1812
      %v1961 = vpop.f32.mrf.mxu0
      %1962 = vmatmul.f32.gmra.mxu0 %v1815
      %v1963 = vpop.f32.mrf.mxu0
      %v1964 = vadd.f32 0.0, %v1963
      %1965 = vmatmul.f32.gmra.mxu0 %v1818
      %v1966 = vpop.f32.mrf.mxu0
      %v1967 = vadd.f32 0.0, %v1966
      %1968 = vmatmul.f32.gmra.mxu0 %v1821
      %v1969 = vpop.f32.mrf.mxu0
      %1970 = vdwg.mxu0
      %v1971 = vadd.f32 %v1598, %v1844
      %v1972 = vadd.f32 %v1599, %v1847
      %v1973 = vadd.f32 %v1600, %v1852
      %v1974 = vadd.f32 %v1601, %v1855
      %v1975 = vadd.f32 %v1602, %v1860
      %v1976 = vadd.f32 %v1603, %v1863
      %v1977 = vadd.f32 %v1604, %v1868
      %v1978 = vadd.f32 %v1605, %v1871
      %v1979 = vadd.f32 %v1606, %v1876
      %v1980 = vadd.f32 %v1607, %v1879
      %v1981 = vadd.f32 %v1608, %v1884
      %v1982 = vadd.f32 %v1609, %v1887
      %v1983 = vadd.f32 %v1610, %v1892
      %v1984 = vadd.f32 %v1611, %v1895
      %v1985 = vadd.f32 %v1612, %v1900
      %v1986 = vadd.f32 %v1613, %v1903
      %v1987 = vadd.f32 %v1614, %v1908
      %v1988 = vadd.f32 %v1615, %v1911
      %v1989 = vadd.f32 %v1616, %v1916
      %v1990 = vadd.f32 %v1617, %v1919
      %v1991 = vadd.f32 %v1618, %v1924
      %v1992 = vadd.f32 %v1619, %v1927
      %v1993 = vadd.f32 %v1620, %v1932
      %v1994 = vadd.f32 %v1621, %v1935
      %v1995 = vadd.f32 %v1622, %v1940
      %v1996 = vadd.f32 %v1623, %v1943
      %v1997 = vadd.f32 %v1624, %v1948
      %v1998 = vadd.f32 %v1625, %v1951
      %v1999 = vadd.f32 %v1626, %v1956
      %v2000 = vadd.f32 %v1627, %v1959
      %v2001 = vadd.f32 %v1628, %v1964
      %v2002 = vadd.f32 %v1629, %v1967
      %v2004 = vrot.slane %v1630, 1
      %v2005 = vrot.slane %v1631, 1
      %v2006 = vsel %vm670, %v2004, %v2005
      %v2007 = vrot.slane %v1632, 1
      %v2008 = vsel %vm670, %v2005, %v2007
      %v2009 = vrot.slane %v1633, 1
      %v2010 = vsel %vm670, %v2007, %v2009
      %v2011 = vrot.slane %v1634, 1
      %v2012 = vsel %vm670, %v2009, %v2011
      %v2013 = vrot.slane %v1635, 1
      %v2014 = vsel %vm670, %v2011, %v2013
      %v2015 = vrot.slane %v1636, 1
      %v2016 = vsel %vm670, %v2013, %v2015
      %v2017 = vrot.slane %v1637, 1
      %v2018 = vsel %vm670, %v2015, %v2017
      %v2019 = vrot.slane %v1638, 1
      %v2020 = vsel %vm670, %v2017, %v2019
      %v2021 = vrot.slane %v1639, 1
      %v2022 = vsel %vm670, %v2019, %v2021
      %v2023 = vrot.slane %v1640, 1
      %v2024 = vsel %vm670, %v2021, %v2023
      %v2025 = vrot.slane %v1641, 1
      %v2026 = vsel %vm670, %v2023, %v2025
      %v2027 = vrot.slane %v1642, 1
      %v2028 = vsel %vm670, %v2025, %v2027
      %v2029 = vrot.slane %v1643, 1
      %v2030 = vsel %vm670, %v2027, %v2029
      %v2031 = vrot.slane %v1644, 1
      %v2032 = vsel %vm670, %v2029, %v2031
      %v2033 = vrot.slane %v1645, 1
      %v2034 = vsel %vm670, %v2031, %v2033
      %v2035 = vrot.slane %v1646, 1
      %v2036 = vsel %vm670, %v2033, %v2035
      %v2037 = vrot.slane %v1647, 1
      %v2038 = vsel %vm670, %v2035, %v2037
      %v2039 = vrot.slane %v1648, 1
      %v2040 = vsel %vm670, %v2037, %v2039
      %v2041 = vrot.slane %v1649, 1
      %v2042 = vsel %vm670, %v2039, %v2041
      %v2043 = vrot.slane %v1650, 1
      %v2044 = vsel %vm670, %v2041, %v2043
      %v2045 = vrot.slane %v1651, 1
      %v2046 = vsel %vm670, %v2043, %v2045
      %v2047 = vrot.slane %v1652, 1
      %v2048 = vsel %vm670, %v2045, %v2047
      %v2049 = vrot.slane %v1653, 1
      %v2050 = vsel %vm670, %v2047, %v2049
      %v2051 = vrot.slane %v1654, 1
      %v2052 = vsel %vm670, %v2049, %v2051
      %v2053 = vrot.slane %v1655, 1
      %v2054 = vsel %vm670, %v2051, %v2053
      %v2055 = vrot.slane %v1656, 1
      %v2056 = vsel %vm670, %v2053, %v2055
      %v2057 = vrot.slane %v1657, 1
      %v2058 = vsel %vm670, %v2055, %v2057
      %v2059 = vrot.slane %v1658, 1
      %v2060 = vsel %vm670, %v2057, %v2059
      %v2061 = vrot.slane %v1659, 1
      %v2062 = vsel %vm670, %v2059, %v2061
      %v2063 = vrot.slane %v1660, 1
      %v2064 = vsel %vm670, %v2061, %v2063
      %v2065 = vrot.slane %v1661, 1
      %v2066 = vsel %vm670, %v2063, %v2065
      %v2067 = vrot.slane %v1662, 1
      %v2068 = vsel %vm670, %v2065, %v2067
      %v2069 = vrot.slane %v1663, 1
      %v2070 = vsel %vm670, %v2067, %v2069
      %v2071 = vrot.slane %v1664, 1
      %v2072 = vsel %vm670, %v2069, %v2071
      %v2073 = vrot.slane %v1665, 1
      %v2074 = vsel %vm670, %v2071, %v2073
      %v2075 = vrot.slane %v1666, 1
      %v2076 = vsel %vm670, %v2073, %v2075
      %v2077 = vrot.slane %v1667, 1
      %v2078 = vsel %vm670, %v2075, %v2077
      %v2079 = vrot.slane %v1668, 1
      %v2080 = vsel %vm670, %v2077, %v2079
      %v2081 = vrot.slane %v1669, 1
      %v2082 = vsel %vm670, %v2079, %v2081
      %v2083 = vrot.slane %v1670, 1
      %v2084 = vsel %vm670, %v2081, %v2083
      %v2085 = vrot.slane %v1671, 1
      %v2086 = vsel %vm670, %v2083, %v2085
      %v2087 = vrot.slane %v1672, 1
      %v2088 = vsel %vm670, %v2085, %v2087
      %v2089 = vrot.slane %v1673, 1
      %v2090 = vsel %vm670, %v2087, %v2089
      %v2091 = vrot.slane %v1674, 1
      %v2092 = vsel %vm670, %v2089, %v2091
      %v2093 = vrot.slane %v1675, 1
      %v2094 = vsel %vm670, %v2091, %v2093
      %v2095 = vrot.slane %v1676, 1
      %v2096 = vsel %vm670, %v2093, %v2095
      %v2097 = vrot.slane %v1677, 1
      %v2098 = vsel %vm670, %v2095, %v2097
      %v2099 = vrot.slane %v1678, 1
      %v2100 = vsel %vm670, %v2097, %v2099
      %v2101 = vsel %vm343, %v2006, 0
      %v2103 = vsel %vm343, %v2008, 0
      %v2105 = vsel %vm343, %v2010, 0
      %v2107 = vsel %vm343, %v2012, 0
      %v2109 = vsel %vm343, %v2014, 0
      %v2111 = vsel %vm343, %v2016, 0
      %v2113 = vsel %vm343, %v2018, 0
      %v2115 = vsel %vm343, %v2020, 0
      %v2117 = vsel %vm343, %v2022, 0
      %v2119 = vsel %vm343, %v2024, 0
      %v2121 = vsel %vm343, %v2026, 0
      %v2123 = vsel %vm343, %v2028, 0
      %v2125 = vsel %vm343, %v2030, 0
      %v2127 = vsel %vm343, %v2032, 0
      %v2129 = vsel %vm343, %v2034, 0
      %v2131 = vsel %vm343, %v2036, 0
      %v2133 = vsel %vm343, %v2038, 0
      %v2135 = vsel %vm343, %v2040, 0
      %v2137 = vsel %vm343, %v2042, 0
      %v2139 = vsel %vm343, %v2044, 0
      %v2141 = vsel %vm343, %v2046, 0
      %v2143 = vsel %vm343, %v2048, 0
      %v2145 = vsel %vm343, %v2050, 0
      %v2147 = vsel %vm343, %v2052, 0
      %v2149 = vsel %vm343, %v2054, 0
      %v2151 = vsel %vm343, %v2056, 0
      %v2153 = vsel %vm343, %v2058, 0
      %v2155 = vsel %vm343, %v2060, 0
      %v2157 = vsel %vm343, %v2062, 0
      %v2159 = vsel %vm343, %v2064, 0
      %v2161 = vsel %vm343, %v2066, 0
      %v2163 = vsel %vm343, %v2068, 0
      %v2165 = vsel %vm343, %v2070, 0
      %v2167 = vsel %vm343, %v2072, 0
      %v2169 = vsel %vm343, %v2074, 0
      %v2171 = vsel %vm343, %v2076, 0
      %v2173 = vsel %vm343, %v2078, 0
      %v2175 = vsel %vm343, %v2080, 0
      %v2177 = vsel %vm343, %v2082, 0
      %v2179 = vsel %vm343, %v2084, 0
      %v2181 = vsel %vm343, %v2086, 0
      %v2183 = vsel %vm343, %v2088, 0
      %v2185 = vsel %vm343, %v2090, 0
      %v2187 = vsel %vm343, %v2092, 0
      %v2189 = vsel %vm343, %v2094, 0
      %v2191 = vsel %vm343, %v2096, 0
      %v2193 = vsel %vm343, %v2098, 0
      %v2195 = vsel %vm343, %v2100, 0
      %v2198 = vsel %vm424, %v567, 0
      %2200 = vmatpush.msra.mxu0 0.0
      %2201 = vmatpush.msra.mxu0 0.0
      %2202 = vmatpush.msra.mxu0 0.0
      %2203 = vmatpush.msra.mxu0 0.0
      %2204 = vmatpush.msra.mxu0 0.0
      %2205 = vmatpush.msra.mxu0 0.0
      %2206 = vmatpush.msra.mxu0 0.0
      %2207 = vmatpush.msra.mxu0 0.0
      %2208 = vmatpush.msra.mxu0 0.0
      %2209 = vmatpush.msra.mxu0 0.0
      %2210 = vmatpush.msra.mxu0 0.0
      %2211 = vmatpush.msra.mxu0 0.0
      %2212 = vmatpush.msra.mxu0 0.0
      %2213 = vmatpush.msra.mxu0 0.0
      %2214 = vmatpush.msra.mxu0 0.0
      %2215 = vmatpush.msra.mxu0 %v2198
      %2216 = vmatmul.f32.gmra.mxu0 %v2101
      %v2217 = vpop.f32.mrf.mxu0
      %v2218 = vadd.f32 0.0, %v2217
      %2219 = vmatmul.f32.gmra.mxu0 %v2103
      %v2220 = vpop.f32.mrf.mxu0
      %v2221 = vadd.f32 0.0, %v2220
      %2222 = vmatmul.f32.gmra.mxu0 %v2105
      %v2223 = vpop.f32.mrf.mxu0
      %2224 = vmatmul.f32.gmra.mxu0 %v2107
      %v2225 = vpop.f32.mrf.mxu0
      %v2226 = vadd.f32 0.0, %v2225
      %2227 = vmatmul.f32.gmra.mxu0 %v2109
      %v2228 = vpop.f32.mrf.mxu0
      %v2229 = vadd.f32 0.0, %v2228
      %2230 = vmatmul.f32.gmra.mxu0 %v2111
      %v2231 = vpop.f32.mrf.mxu0
      %2232 = vmatmul.f32.gmra.mxu0 %v2113
      %v2233 = vpop.f32.mrf.mxu0
      %v2234 = vadd.f32 0.0, %v2233
      %2235 = vmatmul.f32.gmra.mxu0 %v2115
      %v2236 = vpop.f32.mrf.mxu0
      %v2237 = vadd.f32 0.0, %v2236
      %2238 = vmatmul.f32.gmra.mxu0 %v2117
      %v2239 = vpop.f32.mrf.mxu0
      %2240 = vmatmul.f32.gmra.mxu0 %v2119
      %v2241 = vpop.f32.mrf.mxu0
      %v2242 = vadd.f32 0.0, %v2241
      %2243 = vmatmul.f32.gmra.mxu0 %v2121
      %v2244 = vpop.f32.mrf.mxu0
      %v2245 = vadd.f32 0.0, %v2244
      %2246 = vmatmul.f32.gmra.mxu0 %v2123
      %v2247 = vpop.f32.mrf.mxu0
      %2248 = vmatmul.f32.gmra.mxu0 %v2125
      %v2249 = vpop.f32.mrf.mxu0
      %v2250 = vadd.f32 0.0, %v2249
      %2251 = vmatmul.f32.gmra.mxu0 %v2127
      %v2252 = vpop.f32.mrf.mxu0
      %v2253 = vadd.f32 0.0, %v2252
      %2254 = vmatmul.f32.gmra.mxu0 %v2129
      %v2255 = vpop.f32.mrf.mxu0
      %2256 = vmatmul.f32.gmra.mxu0 %v2131
      %v2257 = vpop.f32.mrf.mxu0
      %v2258 = vadd.f32 0.0, %v2257
      %2259 = vmatmul.f32.gmra.mxu0 %v2133
      %v2260 = vpop.f32.mrf.mxu0
      %v2261 = vadd.f32 0.0, %v2260
      %2262 = vmatmul.f32.gmra.mxu0 %v2135
      %v2263 = vpop.f32.mrf.mxu0
      %2264 = vmatmul.f32.gmra.mxu0 %v2137
      %v2265 = vpop.f32.mrf.mxu0
      %v2266 = vadd.f32 0.0, %v2265
      %2267 = vmatmul.f32.gmra.mxu0 %v2139
      %v2268 = vpop.f32.mrf.mxu0
      %v2269 = vadd.f32 0.0, %v2268
      %2270 = vmatmul.f32.gmra.mxu0 %v2141
      %v2271 = vpop.f32.mrf.mxu0
      %2272 = vmatmul.f32.gmra.mxu0 %v2143
      %v2273 = vpop.f32.mrf.mxu0
      %v2274 = vadd.f32 0.0, %v2273
      %2275 = vmatmul.f32.gmra.mxu0 %v2145
      %v2276 = vpop.f32.mrf.mxu0
      %v2277 = vadd.f32 0.0, %v2276
      %2278 = vmatmul.f32.gmra.mxu0 %v2147
      %v2279 = vpop.f32.mrf.mxu0
      %2280 = vmatmul.f32.gmra.mxu0 %v2149
      %v2281 = vpop.f32.mrf.mxu0
      %v2282 = vadd.f32 0.0, %v2281
      %2283 = vmatmul.f32.gmra.mxu0 %v2151
      %v2284 = vpop.f32.mrf.mxu0
      %v2285 = vadd.f32 0.0, %v2284
      %2286 = vmatmul.f32.gmra.mxu0 %v2153
      %v2287 = vpop.f32.mrf.mxu0
      %2288 = vmatmul.f32.gmra.mxu0 %v2155
      %v2289 = vpop.f32.mrf.mxu0
      %v2290 = vadd.f32 0.0, %v2289
      %2291 = vmatmul.f32.gmra.mxu0 %v2157
      %v2292 = vpop.f32.mrf.mxu0
      %v2293 = vadd.f32 0.0, %v2292
      %2294 = vmatmul.f32.gmra.mxu0 %v2159
      %v2295 = vpop.f32.mrf.mxu0
      %2296 = vmatmul.f32.gmra.mxu0 %v2161
      %v2297 = vpop.f32.mrf.mxu0
      %v2298 = vadd.f32 0.0, %v2297
      %2299 = vmatmul.f32.gmra.mxu0 %v2163
      %v2300 = vpop.f32.mrf.mxu0
      %v2301 = vadd.f32 0.0, %v2300
      %2302 = vmatmul.f32.gmra.mxu0 %v2165
      %v2303 = vpop.f32.mrf.mxu0
      %2304 = vmatmul.f32.gmra.mxu0 %v2167
      %v2305 = vpop.f32.mrf.mxu0
      %v2306 = vadd.f32 0.0, %v2305
      %2307 = vmatmul.f32.gmra.mxu0 %v2169
      %v2308 = vpop.f32.mrf.mxu0
      %v2309 = vadd.f32 0.0, %v2308
      %2310 = vmatmul.f32.gmra.mxu0 %v2171
      %v2311 = vpop.f32.mrf.mxu0
      %2312 = vmatmul.f32.gmra.mxu0 %v2173
      %v2313 = vpop.f32.mrf.mxu0
      %v2314 = vadd.f32 0.0, %v2313
      %2315 = vmatmul.f32.gmra.mxu0 %v2175
      %v2316 = vpop.f32.mrf.mxu0
      %v2317 = vadd.f32 0.0, %v2316
      %2318 = vmatmul.f32.gmra.mxu0 %v2177
      %v2319 = vpop.f32.mrf.mxu0
      %2320 = vmatmul.f32.gmra.mxu0 %v2179
      %v2321 = vpop.f32.mrf.mxu0
      %v2322 = vadd.f32 0.0, %v2321
      %2323 = vmatmul.f32.gmra.mxu0 %v2181
      %v2324 = vpop.f32.mrf.mxu0
      %v2325 = vadd.f32 0.0, %v2324
      %2326 = vmatmul.f32.gmra.mxu0 %v2183
      %v2327 = vpop.f32.mrf.mxu0
      %2328 = vmatmul.f32.gmra.mxu0 %v2185
      %v2329 = vpop.f32.mrf.mxu0
      %v2330 = vadd.f32 0.0, %v2329
      %2331 = vmatmul.f32.gmra.mxu0 %v2187
      %v2332 = vpop.f32.mrf.mxu0
      %v2333 = vadd.f32 0.0, %v2332
      %2334 = vmatmul.f32.gmra.mxu0 %v2189
      %v2335 = vpop.f32.mrf.mxu0
      %2336 = vmatmul.f32.gmra.mxu0 %v2191
      %v2337 = vpop.f32.mrf.mxu0
      %v2338 = vadd.f32 0.0, %v2337
      %2339 = vmatmul.f32.gmra.mxu0 %v2193
      %v2340 = vpop.f32.mrf.mxu0
      %v2341 = vadd.f32 0.0, %v2340
      %2342 = vmatmul.f32.gmra.mxu0 %v2195
      %v2343 = vpop.f32.mrf.mxu0
      %2344 = vdwg.mxu0
      %v2345 = vadd.f32 %v1971, %v2218
      %v2346 = vadd.f32 %v1972, %v2221
      %v2347 = vadd.f32 %v1973, %v2226
      %v2348 = vadd.f32 %v1974, %v2229
      %v2349 = vadd.f32 %v1975, %v2234
      %v2350 = vadd.f32 %v1976, %v2237
      %v2351 = vadd.f32 %v1977, %v2242
      %v2352 = vadd.f32 %v1978, %v2245
      %v2353 = vadd.f32 %v1979, %v2250
      %v2354 = vadd.f32 %v1980, %v2253
      %v2355 = vadd.f32 %v1981, %v2258
      %v2356 = vadd.f32 %v1982, %v2261
      %v2357 = vadd.f32 %v1983, %v2266
      %v2358 = vadd.f32 %v1984, %v2269
      %v2359 = vadd.f32 %v1985, %v2274
      %v2360 = vadd.f32 %v1986, %v2277
      %v2361 = vadd.f32 %v1987, %v2282
      %v2362 = vadd.f32 %v1988, %v2285
      %v2363 = vadd.f32 %v1989, %v2290
      %v2364 = vadd.f32 %v1990, %v2293
      %v2365 = vadd.f32 %v1991, %v2298
      %v2366 = vadd.f32 %v1992, %v2301
      %v2367 = vadd.f32 %v1993, %v2306
      %v2368 = vadd.f32 %v1994, %v2309
      %v2369 = vadd.f32 %v1995, %v2314
      %v2370 = vadd.f32 %v1996, %v2317
      %v2371 = vadd.f32 %v1997, %v2322
      %v2372 = vadd.f32 %v1998, %v2325
      %v2373 = vadd.f32 %v1999, %v2330
      %v2374 = vadd.f32 %v2000, %v2333
      %v2375 = vadd.f32 %v2001, %v2338
      %v2376 = vadd.f32 %v2002, %v2341
      %v2377 = vrot.slane %v1630, 2
      %v2378 = vrot.slane %v1631, 2
      %v2379 = vsel %vm1256, %v2377, %v2378
      %v2380 = vrot.slane %v1632, 2
      %v2381 = vsel %vm1256, %v2378, %v2380
      %v2382 = vrot.slane %v1633, 2
      %v2383 = vsel %vm1256, %v2380, %v2382
      %v2384 = vrot.slane %v1634, 2
      %v2385 = vsel %vm1256, %v2382, %v2384
      %v2386 = vrot.slane %v1635, 2
      %v2387 = vsel %vm1256, %v2384, %v2386
      %v2388 = vrot.slane %v1636, 2
      %v2389 = vsel %vm1256, %v2386, %v2388
      %v2390 = vrot.slane %v1637, 2
      %v2391 = vsel %vm1256, %v2388, %v2390
      %v2392 = vrot.slane %v1638, 2
      %v2393 = vsel %vm1256, %v2390, %v2392
      %v2394 = vrot.slane %v1639, 2
      %v2395 = vsel %vm1256, %v2392, %v2394
      %v2396 = vrot.slane %v1640, 2
      %v2397 = vsel %vm1256, %v2394, %v2396
      %v2398 = vrot.slane %v1641, 2
      %v2399 = vsel %vm1256, %v2396, %v2398
      %v2400 = vrot.slane %v1642, 2
      %v2401 = vsel %vm1256, %v2398, %v2400
      %v2402 = vrot.slane %v1643, 2
      %v2403 = vsel %vm1256, %v2400, %v2402
      %v2404 = vrot.slane %v1644, 2
      %v2405 = vsel %vm1256, %v2402, %v2404
      %v2406 = vrot.slane %v1645, 2
      %v2407 = vsel %vm1256, %v2404, %v2406
      %v2408 = vrot.slane %v1646, 2
      %v2409 = vsel %vm1256, %v2406, %v2408
      %v2410 = vrot.slane %v1647, 2
      %v2411 = vsel %vm1256, %v2408, %v2410
      %v2412 = vrot.slane %v1648, 2
      %v2413 = vsel %vm1256, %v2410, %v2412
      %v2414 = vrot.slane %v1649, 2
      %v2415 = vsel %vm1256, %v2412, %v2414
      %v2416 = vrot.slane %v1650, 2
      %v2417 = vsel %vm1256, %v2414, %v2416
      %v2418 = vrot.slane %v1651, 2
      %v2419 = vsel %vm1256, %v2416, %v2418
      %v2420 = vrot.slane %v1652, 2
      %v2421 = vsel %vm1256, %v2418, %v2420
      %v2422 = vrot.slane %v1653, 2
      %v2423 = vsel %vm1256, %v2420, %v2422
      %v2424 = vrot.slane %v1654, 2
      %v2425 = vsel %vm1256, %v2422, %v2424
      %v2426 = vrot.slane %v1655, 2
      %v2427 = vsel %vm1256, %v2424, %v2426
      %v2428 = vrot.slane %v1656, 2
      %v2429 = vsel %vm1256, %v2426, %v2428
      %v2430 = vrot.slane %v1657, 2
      %v2431 = vsel %vm1256, %v2428, %v2430
      %v2432 = vrot.slane %v1658, 2
      %v2433 = vsel %vm1256, %v2430, %v2432
      %v2434 = vrot.slane %v1659, 2
      %v2435 = vsel %vm1256, %v2432, %v2434
      %v2436 = vrot.slane %v1660, 2
      %v2437 = vsel %vm1256, %v2434, %v2436
      %v2438 = vrot.slane %v1661, 2
      %v2439 = vsel %vm1256, %v2436, %v2438
      %v2440 = vrot.slane %v1662, 2
      %v2441 = vsel %vm1256, %v2438, %v2440
      %v2442 = vrot.slane %v1663, 2
      %v2443 = vsel %vm1256, %v2440, %v2442
      %v2444 = vrot.slane %v1664, 2
      %v2445 = vsel %vm1256, %v2442, %v2444
      %v2446 = vrot.slane %v1665, 2
      %v2447 = vsel %vm1256, %v2444, %v2446
      %v2448 = vrot.slane %v1666, 2
      %v2449 = vsel %vm1256, %v2446, %v2448
      %v2450 = vrot.slane %v1667, 2
      %v2451 = vsel %vm1256, %v2448, %v2450
      %v2452 = vrot.slane %v1668, 2
      %v2453 = vsel %vm1256, %v2450, %v2452
      %v2454 = vrot.slane %v1669, 2
      %v2455 = vsel %vm1256, %v2452, %v2454
      %v2456 = vrot.slane %v1670, 2
      %v2457 = vsel %vm1256, %v2454, %v2456
      %v2458 = vrot.slane %v1671, 2
      %v2459 = vsel %vm1256, %v2456, %v2458
      %v2460 = vrot.slane %v1672, 2
      %v2461 = vsel %vm1256, %v2458, %v2460
      %v2462 = vrot.slane %v1673, 2
      %v2463 = vsel %vm1256, %v2460, %v2462
      %v2464 = vrot.slane %v1674, 2
      %v2465 = vsel %vm1256, %v2462, %v2464
      %v2466 = vrot.slane %v1675, 2
      %v2467 = vsel %vm1256, %v2464, %v2466
      %v2468 = vrot.slane %v1676, 2
      %v2469 = vsel %vm1256, %v2466, %v2468
      %v2470 = vrot.slane %v1677, 2
      %v2471 = vsel %vm1256, %v2468, %v2470
      %v2472 = vrot.slane %v1678, 2
      %v2473 = vsel %vm1256, %v2470, %v2472
      %v2474 = vsel %vm343, %v2379, 0
      %v2476 = vsel %vm343, %v2381, 0
      %v2478 = vsel %vm343, %v2383, 0
      %v2480 = vsel %vm343, %v2385, 0
      %v2482 = vsel %vm343, %v2387, 0
      %v2484 = vsel %vm343, %v2389, 0
      %v2486 = vsel %vm343, %v2391, 0
      %v2488 = vsel %vm343, %v2393, 0
      %v2490 = vsel %vm343, %v2395, 0
      %v2492 = vsel %vm343, %v2397, 0
      %v2494 = vsel %vm343, %v2399, 0
      %v2496 = vsel %vm343, %v2401, 0
      %v2498 = vsel %vm343, %v2403, 0
      %v2500 = vsel %vm343, %v2405, 0
      %v2502 = vsel %vm343, %v2407, 0
      %v2504 = vsel %vm343, %v2409, 0
      %v2506 = vsel %vm343, %v2411, 0
      %v2508 = vsel %vm343, %v2413, 0
      %v2510 = vsel %vm343, %v2415, 0
      %v2512 = vsel %vm343, %v2417, 0
      %v2514 = vsel %vm343, %v2419, 0
      %v2516 = vsel %vm343, %v2421, 0
      %v2518 = vsel %vm343, %v2423, 0
      %v2520 = vsel %vm343, %v2425, 0
      %v2522 = vsel %vm343, %v2427, 0
      %v2524 = vsel %vm343, %v2429, 0
      %v2526 = vsel %vm343, %v2431, 0
      %v2528 = vsel %vm343, %v2433, 0
      %v2530 = vsel %vm343, %v2435, 0
      %v2532 = vsel %vm343, %v2437, 0
      %v2534 = vsel %vm343, %v2439, 0
      %v2536 = vsel %vm343, %v2441, 0
      %v2538 = vsel %vm343, %v2443, 0
      %v2540 = vsel %vm343, %v2445, 0
      %v2542 = vsel %vm343, %v2447, 0
      %v2544 = vsel %vm343, %v2449, 0
      %v2546 = vsel %vm343, %v2451, 0
      %v2548 = vsel %vm343, %v2453, 0
      %v2550 = vsel %vm343, %v2455, 0
      %v2552 = vsel %vm343, %v2457, 0
      %v2554 = vsel %vm343, %v2459, 0
      %v2556 = vsel %vm343, %v2461, 0
      %v2558 = vsel %vm343, %v2463, 0
      %v2560 = vsel %vm343, %v2465, 0
      %v2562 = vsel %vm343, %v2467, 0
      %v2564 = vsel %vm343, %v2469, 0
      %v2566 = vsel %vm343, %v2471, 0
      %v2568 = vsel %vm343, %v2473, 0
      %v2571 = vsel %vm424, %v568, 0
      %2573 = vmatpush.msra.mxu0 0.0
      %2574 = vmatpush.msra.mxu0 0.0
      %2575 = vmatpush.msra.mxu0 0.0
      %2576 = vmatpush.msra.mxu0 0.0
      %2577 = vmatpush.msra.mxu0 0.0
      %2578 = vmatpush.msra.mxu0 0.0
      %2579 = vmatpush.msra.mxu0 0.0
      %2580 = vmatpush.msra.mxu0 0.0
      %2581 = vmatpush.msra.mxu0 0.0
      %2582 = vmatpush.msra.mxu0 0.0
      %2583 = vmatpush.msra.mxu0 0.0
      %2584 = vmatpush.msra.mxu0 0.0
      %2585 = vmatpush.msra.mxu0 0.0
      %2586 = vmatpush.msra.mxu0 0.0
      %2587 = vmatpush.msra.mxu0 0.0
      %2588 = vmatpush.msra.mxu0 %v2571
      %2589 = vmatmul.f32.gmra.mxu0 %v2474
      %v2590 = vpop.f32.mrf.mxu0
      %v2591 = vadd.f32 0.0, %v2590
      %2592 = vmatmul.f32.gmra.mxu0 %v2476
      %v2593 = vpop.f32.mrf.mxu0
      %v2594 = vadd.f32 0.0, %v2593
      %2595 = vmatmul.f32.gmra.mxu0 %v2478
      %v2596 = vpop.f32.mrf.mxu0
      %2597 = vmatmul.f32.gmra.mxu0 %v2480
      %v2598 = vpop.f32.mrf.mxu0
      %v2599 = vadd.f32 0.0, %v2598
      %2600 = vmatmul.f32.gmra.mxu0 %v2482
      %v2601 = vpop.f32.mrf.mxu0
      %v2602 = vadd.f32 0.0, %v2601
      %2603 = vmatmul.f32.gmra.mxu0 %v2484
      %v2604 = vpop.f32.mrf.mxu0
      %2605 = vmatmul.f32.gmra.mxu0 %v2486
      %v2606 = vpop.f32.mrf.mxu0
      %v2607 = vadd.f32 0.0, %v2606
      %2608 = vmatmul.f32.gmra.mxu0 %v2488
      %v2609 = vpop.f32.mrf.mxu0
      %v2610 = vadd.f32 0.0, %v2609
      %2611 = vmatmul.f32.gmra.mxu0 %v2490
      %v2612 = vpop.f32.mrf.mxu0
      %2613 = vmatmul.f32.gmra.mxu0 %v2492
      %v2614 = vpop.f32.mrf.mxu0
      %v2615 = vadd.f32 0.0, %v2614
      %2616 = vmatmul.f32.gmra.mxu0 %v2494
      %v2617 = vpop.f32.mrf.mxu0
      %v2618 = vadd.f32 0.0, %v2617
      %2619 = vmatmul.f32.gmra.mxu0 %v2496
      %v2620 = vpop.f32.mrf.mxu0
      %2621 = vmatmul.f32.gmra.mxu0 %v2498
      %v2622 = vpop.f32.mrf.mxu0
      %v2623 = vadd.f32 0.0, %v2622
      %2624 = vmatmul.f32.gmra.mxu0 %v2500
      %v2625 = vpop.f32.mrf.mxu0
      %v2626 = vadd.f32 0.0, %v2625
      %2627 = vmatmul.f32.gmra.mxu0 %v2502
      %v2628 = vpop.f32.mrf.mxu0
      %2629 = vmatmul.f32.gmra.mxu0 %v2504
      %v2630 = vpop.f32.mrf.mxu0
      %v2631 = vadd.f32 0.0, %v2630
      %2632 = vmatmul.f32.gmra.mxu0 %v2506
      %v2633 = vpop.f32.mrf.mxu0
      %v2634 = vadd.f32 0.0, %v2633
      %2635 = vmatmul.f32.gmra.mxu0 %v2508
      %v2636 = vpop.f32.mrf.mxu0
      %2637 = vmatmul.f32.gmra.mxu0 %v2510
      %v2638 = vpop.f32.mrf.mxu0
      %v2639 = vadd.f32 0.0, %v2638
      %2640 = vmatmul.f32.gmra.mxu0 %v2512
      %v2641 = vpop.f32.mrf.mxu0
      %v2642 = vadd.f32 0.0, %v2641
      %2643 = vmatmul.f32.gmra.mxu0 %v2514
      %v2644 = vpop.f32.mrf.mxu0
      %2645 = vmatmul.f32.gmra.mxu0 %v2516
      %v2646 = vpop.f32.mrf.mxu0
      %v2647 = vadd.f32 0.0, %v2646
      %2648 = vmatmul.f32.gmra.mxu0 %v2518
      %v2649 = vpop.f32.mrf.mxu0
      %v2650 = vadd.f32 0.0, %v2649
      %2651 = vmatmul.f32.gmra.mxu0 %v2520
      %v2652 = vpop.f32.mrf.mxu0
      %2653 = vmatmul.f32.gmra.mxu0 %v2522
      %v2654 = vpop.f32.mrf.mxu0
      %v2655 = vadd.f32 0.0, %v2654
      %2656 = vmatmul.f32.gmra.mxu0 %v2524
      %v2657 = vpop.f32.mrf.mxu0
      %v2658 = vadd.f32 0.0, %v2657
      %2659 = vmatmul.f32.gmra.mxu0 %v2526
      %v2660 = vpop.f32.mrf.mxu0
      %2661 = vmatmul.f32.gmra.mxu0 %v2528
      %v2662 = vpop.f32.mrf.mxu0
      %v2663 = vadd.f32 0.0, %v2662
      %2664 = vmatmul.f32.gmra.mxu0 %v2530
      %v2665 = vpop.f32.mrf.mxu0
      %v2666 = vadd.f32 0.0, %v2665
      %2667 = vmatmul.f32.gmra.mxu0 %v2532
      %v2668 = vpop.f32.mrf.mxu0
      %2669 = vmatmul.f32.gmra.mxu0 %v2534
      %v2670 = vpop.f32.mrf.mxu0
      %v2671 = vadd.f32 0.0, %v2670
      %2672 = vmatmul.f32.gmra.mxu0 %v2536
      %v2673 = vpop.f32.mrf.mxu0
      %v2674 = vadd.f32 0.0, %v2673
      %2675 = vmatmul.f32.gmra.mxu0 %v2538
      %v2676 = vpop.f32.mrf.mxu0
      %2677 = vmatmul.f32.gmra.mxu0 %v2540
      %v2678 = vpop.f32.mrf.mxu0
      %v2679 = vadd.f32 0.0, %v2678
      %2680 = vmatmul.f32.gmra.mxu0 %v2542
      %v2681 = vpop.f32.mrf.mxu0
      %v2682 = vadd.f32 0.0, %v2681
      %2683 = vmatmul.f32.gmra.mxu0 %v2544
      %v2684 = vpop.f32.mrf.mxu0
      %2685 = vmatmul.f32.gmra.mxu0 %v2546
      %v2686 = vpop.f32.mrf.mxu0
      %v2687 = vadd.f32 0.0, %v2686
      %2688 = vmatmul.f32.gmra.mxu0 %v2548
      %v2689 = vpop.f32.mrf.mxu0
      %v2690 = vadd.f32 0.0, %v2689
      %2691 = vmatmul.f32.gmra.mxu0 %v2550
      %v2692 = vpop.f32.mrf.mxu0
      %2693 = vmatmul.f32.gmra.mxu0 %v2552
      %v2694 = vpop.f32.mrf.mxu0
      %v2695 = vadd.f32 0.0, %v2694
      %2696 = vmatmul.f32.gmra.mxu0 %v2554
      %v2697 = vpop.f32.mrf.mxu0
      %v2698 = vadd.f32 0.0, %v2697
      %2699 = vmatmul.f32.gmra.mxu0 %v2556
      %v2700 = vpop.f32.mrf.mxu0
      %2701 = vmatmul.f32.gmra.mxu0 %v2558
      %v2702 = vpop.f32.mrf.mxu0
      %v2703 = vadd.f32 0.0, %v2702
      %2704 = vmatmul.f32.gmra.mxu0 %v2560
      %v2705 = vpop.f32.mrf.mxu0
      %v2706 = vadd.f32 0.0, %v2705
      %2707 = vmatmul.f32.gmra.mxu0 %v2562
      %v2708 = vpop.f32.mrf.mxu0
      %2709 = vmatmul.f32.gmra.mxu0 %v2564
      %v2710 = vpop.f32.mrf.mxu0
      %v2711 = vadd.f32 0.0, %v2710
      %2712 = vmatmul.f32.gmra.mxu0 %v2566
      %v2713 = vpop.f32.mrf.mxu0
      %v2714 = vadd.f32 0.0, %v2713
      %2715 = vmatmul.f32.gmra.mxu0 %v2568
      %v2716 = vpop.f32.mrf.mxu0
      %2717 = vdwg.mxu0
      %v2718 = vadd.f32 %v2345, %v2591
      %v2719 = vadd.f32 %v2346, %v2594
      %v2720 = vadd.f32 %v2347, %v2599
      %v2721 = vadd.f32 %v2348, %v2602
      %v2722 = vadd.f32 %v2349, %v2607
      %v2723 = vadd.f32 %v2350, %v2610
      %v2724 = vadd.f32 %v2351, %v2615
      %v2725 = vadd.f32 %v2352, %v2618
      %v2726 = vadd.f32 %v2353, %v2623
      %v2727 = vadd.f32 %v2354, %v2626
      %v2728 = vadd.f32 %v2355, %v2631
      %v2729 = vadd.f32 %v2356, %v2634
      %v2730 = vadd.f32 %v2357, %v2639
      %v2731 = vadd.f32 %v2358, %v2642
      %v2732 = vadd.f32 %v2359, %v2647
      %v2733 = vadd.f32 %v2360, %v2650
      %v2734 = vadd.f32 %v2361, %v2655
      %v2735 = vadd.f32 %v2362, %v2658
      %v2736 = vadd.f32 %v2363, %v2663
      %v2737 = vadd.f32 %v2364, %v2666
      %v2738 = vadd.f32 %v2365, %v2671
      %v2739 = vadd.f32 %v2366, %v2674
      %v2740 = vadd.f32 %v2367, %v2679
      %v2741 = vadd.f32 %v2368, %v2682
      %v2742 = vadd.f32 %v2369, %v2687
      %v2743 = vadd.f32 %v2370, %v2690
      %v2744 = vadd.f32 %v2371, %v2695
      %v2745 = vadd.f32 %v2372, %v2698
      %v2746 = vadd.f32 %v2373, %v2703
      %v2747 = vadd.f32 %v2374, %v2706
      %v2748 = vadd.f32 %v2375, %v2711
      %v2749 = vadd.f32 %v2376, %v2714
      %s2750 = scalar_lea.vmem [#allocation2], 48
      %v2751 = vld [vmem:[%s2750] sm:$0xff]
      %v2752 = vld [vmem:[%s2750 + $0x8] sm:$0xff]
      %v2753 = vld [vmem:[%s2750 + $0x10] sm:$0xff]
      %v2754 = vld [vmem:[%s2750 + $0x18] sm:$0xff]
      %v2755 = vld [vmem:[%s2750 + $0x20] sm:$0xff]
      %v2756 = vld [vmem:[%s2750 + $0x28] sm:$0xff]
      %v2757 = vld [vmem:[%s2750 + $0x30] sm:$0xff]
      %v2758 = vld [vmem:[%s2750 + $0x38] sm:$0xff]
      %v2759 = vld [vmem:[%s2750 + $0x40] sm:$0xff]
      %v2760 = vld [vmem:[%s2750 + $0x48] sm:$0xff]
      %v2761 = vld [vmem:[%s2750 + $0x50] sm:$0xff]
      %v2762 = vld [vmem:[%s2750 + $0x58] sm:$0xff]
      %v2763 = vld [vmem:[%s2750 + $0x60] sm:$0xff]
      %v2764 = vld [vmem:[%s2750 + $0x68] sm:$0xff]
      %v2765 = vld [vmem:[%s2750 + $0x70] sm:$0xff]
      %v2766 = vld [vmem:[%s2750 + $0x78] sm:$0xff]
      %v2767 = vld [vmem:[%s2750 + $0x80] sm:$0xff]
      %v2768 = vld [vmem:[%s2750 + $0x88] sm:$0xff]
      %v2769 = vld [vmem:[%s2750 + $0x90] sm:$0xff]
      %v2770 = vld [vmem:[%s2750 + $0x98] sm:$0xff]
      %v2771 = vld [vmem:[%s2750 + $0xa0] sm:$0xff]
      %v2772 = vld [vmem:[%s2750 + $0xa8] sm:$0xff]
      %v2773 = vld [vmem:[%s2750 + $0xb0] sm:$0xff]
      %v2774 = vld [vmem:[%s2750 + $0xb8] sm:$0xff]
      %v2775 = vld [vmem:[%s2750 + $0xc0] sm:$0xff]
      %v2776 = vld [vmem:[%s2750 + $0xc8] sm:$0xff]
      %v2777 = vld [vmem:[%s2750 + $0xd0] sm:$0xff]
      %v2778 = vld [vmem:[%s2750 + $0xd8] sm:$0xff]
      %v2779 = vld [vmem:[%s2750 + $0xe0] sm:$0xff]
      %v2780 = vld [vmem:[%s2750 + $0xe8] sm:$0xff]
      %v2781 = vld [vmem:[%s2750 + $0xf0] sm:$0xff]
      %v2782 = vld [vmem:[%s2750 + $0xf8] sm:$0xff]
      %v2783 = vld [vmem:[%s2750 + $0x100] sm:$0xff]
      %v2784 = vld [vmem:[%s2750 + $0x108] sm:$0xff]
      %v2785 = vld [vmem:[%s2750 + $0x110] sm:$0xff]
      %v2786 = vld [vmem:[%s2750 + $0x118] sm:$0xff]
      %v2787 = vld [vmem:[%s2750 + $0x120] sm:$0xff]
      %v2788 = vld [vmem:[%s2750 + $0x128] sm:$0xff]
      %v2789 = vld [vmem:[%s2750 + $0x130] sm:$0xff]
      %v2790 = vld [vmem:[%s2750 + $0x138] sm:$0xff]
      %v2791 = vld [vmem:[%s2750 + $0x140] sm:$0xff]
      %v2792 = vld [vmem:[%s2750 + $0x148] sm:$0xff]
      %v2793 = vld [vmem:[%s2750 + $0x150] sm:$0xff]
      %v2794 = vld [vmem:[%s2750 + $0x158] sm:$0xff]
      %v2795 = vld [vmem:[%s2750 + $0x160] sm:$0xff]
      %v2796 = vld [vmem:[%s2750 + $0x168] sm:$0xff]
      %v2797 = vld [vmem:[%s2750 + $0x170] sm:$0xff]
      %v2798 = vld [vmem:[%s2750 + $0x178] sm:$0xff]
      %v2799 = vld [vmem:[%s2750 + $0x180] sm:$0xff]
      %v2801 = vsel %vm343, %v2751, 0
      %v2804 = vsel %vm343, %v2752, 0
      %v2807 = vsel %vm343, %v2753, 0
      %v2810 = vsel %vm343, %v2754, 0
      %v2813 = vsel %vm343, %v2755, 0
      %v2816 = vsel %vm343, %v2756, 0
      %v2819 = vsel %vm343, %v2757, 0
      %v2822 = vsel %vm343, %v2758, 0
      %v2825 = vsel %vm343, %v2759, 0
      %v2828 = vsel %vm343, %v2760, 0
      %v2831 = vsel %vm343, %v2761, 0
      %v2834 = vsel %vm343, %v2762, 0
      %v2837 = vsel %vm343, %v2763, 0
      %v2840 = vsel %vm343, %v2764, 0
      %v2843 = vsel %vm343, %v2765, 0
      %v2846 = vsel %vm343, %v2766, 0
      %v2849 = vsel %vm343, %v2767, 0
      %v2852 = vsel %vm343, %v2768, 0
      %v2855 = vsel %vm343, %v2769, 0
      %v2858 = vsel %vm343, %v2770, 0
      %v2861 = vsel %vm343, %v2771, 0
      %v2864 = vsel %vm343, %v2772, 0
      %v2867 = vsel %vm343, %v2773, 0
      %v2870 = vsel %vm343, %v2774, 0
      %v2873 = vsel %vm343, %v2775, 0
      %v2876 = vsel %vm343, %v2776, 0
      %v2879 = vsel %vm343, %v2777, 0
      %v2882 = vsel %vm343, %v2778, 0
      %v2885 = vsel %vm343, %v2779, 0
      %v2888 = vsel %vm343, %v2780, 0
      %v2891 = vsel %vm343, %v2781, 0
      %v2894 = vsel %vm343, %v2782, 0
      %v2897 = vsel %vm343, %v2783, 0
      %v2900 = vsel %vm343, %v2784, 0
      %v2903 = vsel %vm343, %v2785, 0
      %v2906 = vsel %vm343, %v2786, 0
      %v2909 = vsel %vm343, %v2787, 0
      %v2912 = vsel %vm343, %v2788, 0
      %v2915 = vsel %vm343, %v2789, 0
      %v2918 = vsel %vm343, %v2790, 0
      %v2921 = vsel %vm343, %v2791, 0
      %v2924 = vsel %vm343, %v2792, 0
      %v2927 = vsel %vm343, %v2793, 0
      %v2930 = vsel %vm343, %v2794, 0
      %v2933 = vsel %vm343, %v2795, 0
      %v2936 = vsel %vm343, %v2796, 0
      %v2939 = vsel %vm343, %v2797, 0
      %v2942 = vsel %vm343, %v2798, 0
      %v2945 = vsel %vm424, %v569, 0
      %2947 = vmatpush.msra.mxu0 0.0
      %2948 = vmatpush.msra.mxu0 0.0
      %2949 = vmatpush.msra.mxu0 0.0
      %2950 = vmatpush.msra.mxu0 0.0
      %2951 = vmatpush.msra.mxu0 0.0
      %2952 = vmatpush.msra.mxu0 0.0
      %2953 = vmatpush.msra.mxu0 0.0
      %2954 = vmatpush.msra.mxu0 0.0
      %2955 = vmatpush.msra.mxu0 0.0
      %2956 = vmatpush.msra.mxu0 0.0
      %2957 = vmatpush.msra.mxu0 0.0
      %2958 = vmatpush.msra.mxu0 0.0
      %2959 = vmatpush.msra.mxu0 0.0
      %2960 = vmatpush.msra.mxu0 0.0
      %2961 = vmatpush.msra.mxu0 0.0
      %2962 = vmatpush.msra.mxu0 %v2945
      %2963 = vmatmul.f32.gmra.mxu0 %v2801
      %v2964 = vpop.f32.mrf.mxu0
      %v2965 = vadd.f32 0.0, %v2964
      %2966 = vmatmul.f32.gmra.mxu0 %v2804
      %v2967 = vpop.f32.mrf.mxu0
      %v2968 = vadd.f32 0.0, %v2967
      %2969 = vmatmul.f32.gmra.mxu0 %v2807
      %v2970 = vpop.f32.mrf.mxu0
      %2971 = vmatmul.f32.gmra.mxu0 %v2810
      %v2972 = vpop.f32.mrf.mxu0
      %v2973 = vadd.f32 0.0, %v2972
      %2974 = vmatmul.f32.gmra.mxu0 %v2813
      %v2975 = vpop.f32.mrf.mxu0
      %v2976 = vadd.f32 0.0, %v2975
      %2977 = vmatmul.f32.gmra.mxu0 %v2816
      %v2978 = vpop.f32.mrf.mxu0
      %2979 = vmatmul.f32.gmra.mxu0 %v2819
      %v2980 = vpop.f32.mrf.mxu0
      %v2981 = vadd.f32 0.0, %v2980
      %2982 = vmatmul.f32.gmra.mxu0 %v2822
      %v2983 = vpop.f32.mrf.mxu0
      %v2984 = vadd.f32 0.0, %v2983
      %2985 = vmatmul.f32.gmra.mxu0 %v2825
      %v2986 = vpop.f32.mrf.mxu0
      %2987 = vmatmul.f32.gmra.mxu0 %v2828
      %v2988 = vpop.f32.mrf.mxu0
      %v2989 = vadd.f32 0.0, %v2988
      %2990 = vmatmul.f32.gmra.mxu0 %v2831
      %v2991 = vpop.f32.mrf.mxu0
      %v2992 = vadd.f32 0.0, %v2991
      %2993 = vmatmul.f32.gmra.mxu0 %v2834
      %v2994 = vpop.f32.mrf.mxu0
      %2995 = vmatmul.f32.gmra.mxu0 %v2837
      %v2996 = vpop.f32.mrf.mxu0
      %v2997 = vadd.f32 0.0, %v2996
      %2998 = vmatmul.f32.gmra.mxu0 %v2840
      %v2999 = vpop.f32.mrf.mxu0
      %v3000 = vadd.f32 0.0, %v2999
      %3001 = vmatmul.f32.gmra.mxu0 %v2843
      %v3002 = vpop.f32.mrf.mxu0
      %3003 = vmatmul.f32.gmra.mxu0 %v2846
      %v3004 = vpop.f32.mrf.mxu0
      %v3005 = vadd.f32 0.0, %v3004
      %3006 = vmatmul.f32.gmra.mxu0 %v2849
      %v3007 = vpop.f32.mrf.mxu0
      %v3008 = vadd.f32 0.0, %v3007
      %3009 = vmatmul.f32.gmra.mxu0 %v2852
      %v3010 = vpop.f32.mrf.mxu0
      %3011 = vmatmul.f32.gmra.mxu0 %v2855
      %v3012 = vpop.f32.mrf.mxu0
      %v3013 = vadd.f32 0.0, %v3012
      %3014 = vmatmul.f32.gmra.mxu0 %v2858
      %v3015 = vpop.f32.mrf.mxu0
      %v3016 = vadd.f32 0.0, %v3015
      %3017 = vmatmul.f32.gmra.mxu0 %v2861
      %v3018 = vpop.f32.mrf.mxu0
      %3019 = vmatmul.f32.gmra.mxu0 %v2864
      %v3020 = vpop.f32.mrf.mxu0
      %v3021 = vadd.f32 0.0, %v3020
      %3022 = vmatmul.f32.gmra.mxu0 %v2867
      %v3023 = vpop.f32.mrf.mxu0
      %v3024 = vadd.f32 0.0, %v3023
      %3025 = vmatmul.f32.gmra.mxu0 %v2870
      %v3026 = vpop.f32.mrf.mxu0
      %3027 = vmatmul.f32.gmra.mxu0 %v2873
      %v3028 = vpop.f32.mrf.mxu0
      %v3029 = vadd.f32 0.0, %v3028
      %3030 = vmatmul.f32.gmra.mxu0 %v2876
      %v3031 = vpop.f32.mrf.mxu0
      %v3032 = vadd.f32 0.0, %v3031
      %3033 = vmatmul.f32.gmra.mxu0 %v2879
      %v3034 = vpop.f32.mrf.mxu0
      %3035 = vmatmul.f32.gmra.mxu0 %v2882
      %v3036 = vpop.f32.mrf.mxu0
      %v3037 = vadd.f32 0.0, %v3036
      %3038 = vmatmul.f32.gmra.mxu0 %v2885
      %v3039 = vpop.f32.mrf.mxu0
      %v3040 = vadd.f32 0.0, %v3039
      %3041 = vmatmul.f32.gmra.mxu0 %v2888
      %v3042 = vpop.f32.mrf.mxu0
      %3043 = vmatmul.f32.gmra.mxu0 %v2891
      %v3044 = vpop.f32.mrf.mxu0
      %v3045 = vadd.f32 0.0, %v3044
      %3046 = vmatmul.f32.gmra.mxu0 %v2894
      %v3047 = vpop.f32.mrf.mxu0
      %v3048 = vadd.f32 0.0, %v3047
      %3049 = vmatmul.f32.gmra.mxu0 %v2897
      %v3050 = vpop.f32.mrf.mxu0
      %3051 = vmatmul.f32.gmra.mxu0 %v2900
      %v3052 = vpop.f32.mrf.mxu0
      %v3053 = vadd.f32 0.0, %v3052
      %3054 = vmatmul.f32.gmra.mxu0 %v2903
      %v3055 = vpop.f32.mrf.mxu0
      %v3056 = vadd.f32 0.0, %v3055
      %3057 = vmatmul.f32.gmra.mxu0 %v2906
      %v3058 = vpop.f32.mrf.mxu0
      %3059 = vmatmul.f32.gmra.mxu0 %v2909
      %v3060 = vpop.f32.mrf.mxu0
      %v3061 = vadd.f32 0.0, %v3060
      %3062 = vmatmul.f32.gmra.mxu0 %v2912
      %v3063 = vpop.f32.mrf.mxu0
      %v3064 = vadd.f32 0.0, %v3063
      %3065 = vmatmul.f32.gmra.mxu0 %v2915
      %v3066 = vpop.f32.mrf.mxu0
      %3067 = vmatmul.f32.gmra.mxu0 %v2918
      %v3068 = vpop.f32.mrf.mxu0
      %v3069 = vadd.f32 0.0, %v3068
      %3070 = vmatmul.f32.gmra.mxu0 %v2921
      %v3071 = vpop.f32.mrf.mxu0
      %v3072 = vadd.f32 0.0, %v3071
      %3073 = vmatmul.f32.gmra.mxu0 %v2924
      %v3074 = vpop.f32.mrf.mxu0
      %3075 = vmatmul.f32.gmra.mxu0 %v2927
      %v3076 = vpop.f32.mrf.mxu0
      %v3077 = vadd.f32 0.0, %v3076
      %3078 = vmatmul.f32.gmra.mxu0 %v2930
      %v3079 = vpop.f32.mrf.mxu0
      %v3080 = vadd.f32 0.0, %v3079
      %3081 = vmatmul.f32.gmra.mxu0 %v2933
      %v3082 = vpop.f32.mrf.mxu0
      %3083 = vmatmul.f32.gmra.mxu0 %v2936
      %v3084 = vpop.f32.mrf.mxu0
      %v3085 = vadd.f32 0.0, %v3084
      %3086 = vmatmul.f32.gmra.mxu0 %v2939
      %v3087 = vpop.f32.mrf.mxu0
      %v3088 = vadd.f32 0.0, %v3087
      %3089 = vmatmul.f32.gmra.mxu0 %v2942
      %v3090 = vpop.f32.mrf.mxu0
      %3091 = vdwg.mxu0
      %v3092 = vadd.f32 %v2718, %v2965
      %v3093 = vadd.f32 %v2719, %v2968
      %v3094 = vadd.f32 %v2720, %v2973
      %v3095 = vadd.f32 %v2721, %v2976
      %v3096 = vadd.f32 %v2722, %v2981
      %v3097 = vadd.f32 %v2723, %v2984
      %v3098 = vadd.f32 %v2724, %v2989
      %v3099 = vadd.f32 %v2725, %v2992
      %v3100 = vadd.f32 %v2726, %v2997
      %v3101 = vadd.f32 %v2727, %v3000
      %v3102 = vadd.f32 %v2728, %v3005
      %v3103 = vadd.f32 %v2729, %v3008
      %v3104 = vadd.f32 %v2730, %v3013
      %v3105 = vadd.f32 %v2731, %v3016
      %v3106 = vadd.f32 %v2732, %v3021
      %v3107 = vadd.f32 %v2733, %v3024
      %v3108 = vadd.f32 %v2734, %v3029
      %v3109 = vadd.f32 %v2735, %v3032
      %v3110 = vadd.f32 %v2736, %v3037
      %v3111 = vadd.f32 %v2737, %v3040
      %v3112 = vadd.f32 %v2738, %v3045
      %v3113 = vadd.f32 %v2739, %v3048
      %v3114 = vadd.f32 %v2740, %v3053
      %v3115 = vadd.f32 %v2741, %v3056
      %v3116 = vadd.f32 %v2742, %v3061
      %v3117 = vadd.f32 %v2743, %v3064
      %v3118 = vadd.f32 %v2744, %v3069
      %v3119 = vadd.f32 %v2745, %v3072
      %v3120 = vadd.f32 %v2746, %v3077
      %v3121 = vadd.f32 %v2747, %v3080
      %v3122 = vadd.f32 %v2748, %v3085
      %v3123 = vadd.f32 %v2749, %v3088
      %v3125 = vrot.slane %v2751, 1
      %v3126 = vrot.slane %v2752, 1
      %v3127 = vsel %vm670, %v3125, %v3126
      %v3128 = vrot.slane %v2753, 1
      %v3129 = vsel %vm670, %v3126, %v3128
      %v3130 = vrot.slane %v2754, 1
      %v3131 = vsel %vm670, %v3128, %v3130
      %v3132 = vrot.slane %v2755, 1
      %v3133 = vsel %vm670, %v3130, %v3132
      %v3134 = vrot.slane %v2756, 1
      %v3135 = vsel %vm670, %v3132, %v3134
      %v3136 = vrot.slane %v2757, 1
      %v3137 = vsel %vm670, %v3134, %v3136
      %v3138 = vrot.slane %v2758, 1
      %v3139 = vsel %vm670, %v3136, %v3138
      %v3140 = vrot.slane %v2759, 1
      %v3141 = vsel %vm670, %v3138, %v3140
      %v3142 = vrot.slane %v2760, 1
      %v3143 = vsel %vm670, %v3140, %v3142
      %v3144 = vrot.slane %v2761, 1
      %v3145 = vsel %vm670, %v3142, %v3144
      %v3146 = vrot.slane %v2762, 1
      %v3147 = vsel %vm670, %v3144, %v3146
      %v3148 = vrot.slane %v2763, 1
      %v3149 = vsel %vm670, %v3146, %v3148
      %v3150 = vrot.slane %v2764, 1
      %v3151 = vsel %vm670, %v3148, %v3150
      %v3152 = vrot.slane %v2765, 1
      %v3153 = vsel %vm670, %v3150, %v3152
      %v3154 = vrot.slane %v2766, 1
      %v3155 = vsel %vm670, %v3152, %v3154
      %v3156 = vrot.slane %v2767, 1
      %v3157 = vsel %vm670, %v3154, %v3156
      %v3158 = vrot.slane %v2768, 1
      %v3159 = vsel %vm670, %v3156, %v3158
      %v3160 = vrot.slane %v2769, 1
      %v3161 = vsel %vm670, %v3158, %v3160
      %v3162 = vrot.slane %v2770, 1
      %v3163 = vsel %vm670, %v3160, %v3162
      %v3164 = vrot.slane %v2771, 1
      %v3165 = vsel %vm670, %v3162, %v3164
      %v3166 = vrot.slane %v2772, 1
      %v3167 = vsel %vm670, %v3164, %v3166
      %v3168 = vrot.slane %v2773, 1
      %v3169 = vsel %vm670, %v3166, %v3168
      %v3170 = vrot.slane %v2774, 1
      %v3171 = vsel %vm670, %v3168, %v3170
      %v3172 = vrot.slane %v2775, 1
      %v3173 = vsel %vm670, %v3170, %v3172
      %v3174 = vrot.slane %v2776, 1
      %v3175 = vsel %vm670, %v3172, %v3174
      %v3176 = vrot.slane %v2777, 1
      %v3177 = vsel %vm670, %v3174, %v3176
      %v3178 = vrot.slane %v2778, 1
      %v3179 = vsel %vm670, %v3176, %v3178
      %v3180 = vrot.slane %v2779, 1
      %v3181 = vsel %vm670, %v3178, %v3180
      %v3182 = vrot.slane %v2780, 1
      %v3183 = vsel %vm670, %v3180, %v3182
      %v3184 = vrot.slane %v2781, 1
      %v3185 = vsel %vm670, %v3182, %v3184
      %v3186 = vrot.slane %v2782, 1
      %v3187 = vsel %vm670, %v3184, %v3186
      %v3188 = vrot.slane %v2783, 1
      %v3189 = vsel %vm670, %v3186, %v3188
      %v3190 = vrot.slane %v2784, 1
      %v3191 = vsel %vm670, %v3188, %v3190
      %v3192 = vrot.slane %v2785, 1
      %v3193 = vsel %vm670, %v3190, %v3192
      %v3194 = vrot.slane %v2786, 1
      %v3195 = vsel %vm670, %v3192, %v3194
      %v3196 = vrot.slane %v2787, 1
      %v3197 = vsel %vm670, %v3194, %v3196
      %v3198 = vrot.slane %v2788, 1
      %v3199 = vsel %vm670, %v3196, %v3198
      %v3200 = vrot.slane %v2789, 1
      %v3201 = vsel %vm670, %v3198, %v3200
      %v3202 = vrot.slane %v2790, 1
      %v3203 = vsel %vm670, %v3200, %v3202
      %v3204 = vrot.slane %v2791, 1
      %v3205 = vsel %vm670, %v3202, %v3204
      %v3206 = vrot.slane %v2792, 1
      %v3207 = vsel %vm670, %v3204, %v3206
      %v3208 = vrot.slane %v2793, 1
      %v3209 = vsel %vm670, %v3206, %v3208
      %v3210 = vrot.slane %v2794, 1
      %v3211 = vsel %vm670, %v3208, %v3210
      %v3212 = vrot.slane %v2795, 1
      %v3213 = vsel %vm670, %v3210, %v3212
      %v3214 = vrot.slane %v2796, 1
      %v3215 = vsel %vm670, %v3212, %v3214
      %v3216 = vrot.slane %v2797, 1
      %v3217 = vsel %vm670, %v3214, %v3216
      %v3218 = vrot.slane %v2798, 1
      %v3219 = vsel %vm670, %v3216, %v3218
      %v3220 = vrot.slane %v2799, 1
      %v3221 = vsel %vm670, %v3218, %v3220
      %v3222 = vsel %vm343, %v3127, 0
      %v3224 = vsel %vm343, %v3129, 0
      %v3226 = vsel %vm343, %v3131, 0
      %v3228 = vsel %vm343, %v3133, 0
      %v3230 = vsel %vm343, %v3135, 0
      %v3232 = vsel %vm343, %v3137, 0
      %v3234 = vsel %vm343, %v3139, 0
      %v3236 = vsel %vm343, %v3141, 0
      %v3238 = vsel %vm343, %v3143, 0
      %v3240 = vsel %vm343, %v3145, 0
      %v3242 = vsel %vm343, %v3147, 0
      %v3244 = vsel %vm343, %v3149, 0
      %v3246 = vsel %vm343, %v3151, 0
      %v3248 = vsel %vm343, %v3153, 0
      %v3250 = vsel %vm343, %v3155, 0
      %v3252 = vsel %vm343, %v3157, 0
      %v3254 = vsel %vm343, %v3159, 0
      %v3256 = vsel %vm343, %v3161, 0
      %v3258 = vsel %vm343, %v3163, 0
      %v3260 = vsel %vm343, %v3165, 0
      %v3262 = vsel %vm343, %v3167, 0
      %v3264 = vsel %vm343, %v3169, 0
      %v3266 = vsel %vm343, %v3171, 0
      %v3268 = vsel %vm343, %v3173, 0
      %v3270 = vsel %vm343, %v3175, 0
      %v3272 = vsel %vm343, %v3177, 0
      %v3274 = vsel %vm343, %v3179, 0
      %v3276 = vsel %vm343, %v3181, 0
      %v3278 = vsel %vm343, %v3183, 0
      %v3280 = vsel %vm343, %v3185, 0
      %v3282 = vsel %vm343, %v3187, 0
      %v3284 = vsel %vm343, %v3189, 0
      %v3286 = vsel %vm343, %v3191, 0
      %v3288 = vsel %vm343, %v3193, 0
      %v3290 = vsel %vm343, %v3195, 0
      %v3292 = vsel %vm343, %v3197, 0
      %v3294 = vsel %vm343, %v3199, 0
      %v3296 = vsel %vm343, %v3201, 0
      %v3298 = vsel %vm343, %v3203, 0
      %v3300 = vsel %vm343, %v3205, 0
      %v3302 = vsel %vm343, %v3207, 0
      %v3304 = vsel %vm343, %v3209, 0
      %v3306 = vsel %vm343, %v3211, 0
      %v3308 = vsel %vm343, %v3213, 0
      %v3310 = vsel %vm343, %v3215, 0
      %v3312 = vsel %vm343, %v3217, 0
      %v3314 = vsel %vm343, %v3219, 0
      %v3316 = vsel %vm343, %v3221, 0
      %v3319 = vsel %vm424, %v570, 0
      %3321 = vmatpush.msra.mxu0 0.0
      %3322 = vmatpush.msra.mxu0 0.0
      %3323 = vmatpush.msra.mxu0 0.0
      %3324 = vmatpush.msra.mxu0 0.0
      %3325 = vmatpush.msra.mxu0 0.0
      %3326 = vmatpush.msra.mxu0 0.0
      %3327 = vmatpush.msra.mxu0 0.0
      %3328 = vmatpush.msra.mxu0 0.0
      %3329 = vmatpush.msra.mxu0 0.0
      %3330 = vmatpush.msra.mxu0 0.0
      %3331 = vmatpush.msra.mxu0 0.0
      %3332 = vmatpush.msra.mxu0 0.0
      %3333 = vmatpush.msra.mxu0 0.0
      %3334 = vmatpush.msra.mxu0 0.0
      %3335 = vmatpush.msra.mxu0 0.0
      %3336 = vmatpush.msra.mxu0 %v3319
      %3337 = vmatmul.f32.gmra.mxu0 %v3222
      %v3338 = vpop.f32.mrf.mxu0
      %v3339 = vadd.f32 0.0, %v3338
      %3340 = vmatmul.f32.gmra.mxu0 %v3224
      %v3341 = vpop.f32.mrf.mxu0
      %v3342 = vadd.f32 0.0, %v3341
      %3343 = vmatmul.f32.gmra.mxu0 %v3226
      %v3344 = vpop.f32.mrf.mxu0
      %3345 = vmatmul.f32.gmra.mxu0 %v3228
      %v3346 = vpop.f32.mrf.mxu0
      %v3347 = vadd.f32 0.0, %v3346
      %3348 = vmatmul.f32.gmra.mxu0 %v3230
      %v3349 = vpop.f32.mrf.mxu0
      %v3350 = vadd.f32 0.0, %v3349
      %3351 = vmatmul.f32.gmra.mxu0 %v3232
      %v3352 = vpop.f32.mrf.mxu0
      %3353 = vmatmul.f32.gmra.mxu0 %v3234
      %v3354 = vpop.f32.mrf.mxu0
      %v3355 = vadd.f32 0.0, %v3354
      %3356 = vmatmul.f32.gmra.mxu0 %v3236
      %v3357 = vpop.f32.mrf.mxu0
      %v3358 = vadd.f32 0.0, %v3357
      %3359 = vmatmul.f32.gmra.mxu0 %v3238
      %v3360 = vpop.f32.mrf.mxu0
      %3361 = vmatmul.f32.gmra.mxu0 %v3240
      %v3362 = vpop.f32.mrf.mxu0
      %v3363 = vadd.f32 0.0, %v3362
      %3364 = vmatmul.f32.gmra.mxu0 %v3242
      %v3365 = vpop.f32.mrf.mxu0
      %v3366 = vadd.f32 0.0, %v3365
      %3367 = vmatmul.f32.gmra.mxu0 %v3244
      %v3368 = vpop.f32.mrf.mxu0
      %3369 = vmatmul.f32.gmra.mxu0 %v3246
      %v3370 = vpop.f32.mrf.mxu0
      %v3371 = vadd.f32 0.0, %v3370
      %3372 = vmatmul.f32.gmra.mxu0 %v3248
      %v3373 = vpop.f32.mrf.mxu0
      %v3374 = vadd.f32 0.0, %v3373
      %3375 = vmatmul.f32.gmra.mxu0 %v3250
      %v3376 = vpop.f32.mrf.mxu0
      %3377 = vmatmul.f32.gmra.mxu0 %v3252
      %v3378 = vpop.f32.mrf.mxu0
      %v3379 = vadd.f32 0.0, %v3378
      %3380 = vmatmul.f32.gmra.mxu0 %v3254
      %v3381 = vpop.f32.mrf.mxu0
      %v3382 = vadd.f32 0.0, %v3381
      %3383 = vmatmul.f32.gmra.mxu0 %v3256
      %v3384 = vpop.f32.mrf.mxu0
      %3385 = vmatmul.f32.gmra.mxu0 %v3258
      %v3386 = vpop.f32.mrf.mxu0
      %v3387 = vadd.f32 0.0, %v3386
      %3388 = vmatmul.f32.gmra.mxu0 %v3260
      %v3389 = vpop.f32.mrf.mxu0
      %v3390 = vadd.f32 0.0, %v3389
      %3391 = vmatmul.f32.gmra.mxu0 %v3262
      %v3392 = vpop.f32.mrf.mxu0
      %3393 = vmatmul.f32.gmra.mxu0 %v3264
      %v3394 = vpop.f32.mrf.mxu0
      %v3395 = vadd.f32 0.0, %v3394
      %3396 = vmatmul.f32.gmra.mxu0 %v3266
      %v3397 = vpop.f32.mrf.mxu0
      %v3398 = vadd.f32 0.0, %v3397
      %3399 = vmatmul.f32.gmra.mxu0 %v3268
      %v3400 = vpop.f32.mrf.mxu0
      %3401 = vmatmul.f32.gmra.mxu0 %v3270
      %v3402 = vpop.f32.mrf.mxu0
      %v3403 = vadd.f32 0.0, %v3402
      %3404 = vmatmul.f32.gmra.mxu0 %v3272
      %v3405 = vpop.f32.mrf.mxu0
      %v3406 = vadd.f32 0.0, %v3405
      %3407 = vmatmul.f32.gmra.mxu0 %v3274
      %v3408 = vpop.f32.mrf.mxu0
      %3409 = vmatmul.f32.gmra.mxu0 %v3276
      %v3410 = vpop.f32.mrf.mxu0
      %v3411 = vadd.f32 0.0, %v3410
      %3412 = vmatmul.f32.gmra.mxu0 %v3278
      %v3413 = vpop.f32.mrf.mxu0
      %v3414 = vadd.f32 0.0, %v3413
      %3415 = vmatmul.f32.gmra.mxu0 %v3280
      %v3416 = vpop.f32.mrf.mxu0
      %3417 = vmatmul.f32.gmra.mxu0 %v3282
      %v3418 = vpop.f32.mrf.mxu0
      %v3419 = vadd.f32 0.0, %v3418
      %3420 = vmatmul.f32.gmra.mxu0 %v3284
      %v3421 = vpop.f32.mrf.mxu0
      %v3422 = vadd.f32 0.0, %v3421
      %3423 = vmatmul.f32.gmra.mxu0 %v3286
      %v3424 = vpop.f32.mrf.mxu0
      %3425 = vmatmul.f32.gmra.mxu0 %v3288
      %v3426 = vpop.f32.mrf.mxu0
      %v3427 = vadd.f32 0.0, %v3426
      %3428 = vmatmul.f32.gmra.mxu0 %v3290
      %v3429 = vpop.f32.mrf.mxu0
      %v3430 = vadd.f32 0.0, %v3429
      %3431 = vmatmul.f32.gmra.mxu0 %v3292
      %v3432 = vpop.f32.mrf.mxu0
      %3433 = vmatmul.f32.gmra.mxu0 %v3294
      %v3434 = vpop.f32.mrf.mxu0
      %v3435 = vadd.f32 0.0, %v3434
      %3436 = vmatmul.f32.gmra.mxu0 %v3296
      %v3437 = vpop.f32.mrf.mxu0
      %v3438 = vadd.f32 0.0, %v3437
      %3439 = vmatmul.f32.gmra.mxu0 %v3298
      %v3440 = vpop.f32.mrf.mxu0
      %3441 = vmatmul.f32.gmra.mxu0 %v3300
      %v3442 = vpop.f32.mrf.mxu0
      %v3443 = vadd.f32 0.0, %v3442
      %3444 = vmatmul.f32.gmra.mxu0 %v3302
      %v3445 = vpop.f32.mrf.mxu0
      %v3446 = vadd.f32 0.0, %v3445
      %3447 = vmatmul.f32.gmra.mxu0 %v3304
      %v3448 = vpop.f32.mrf.mxu0
      %3449 = vmatmul.f32.gmra.mxu0 %v3306
      %v3450 = vpop.f32.mrf.mxu0
      %v3451 = vadd.f32 0.0, %v3450
      %3452 = vmatmul.f32.gmra.mxu0 %v3308
      %v3453 = vpop.f32.mrf.mxu0
      %v3454 = vadd.f32 0.0, %v3453
      %3455 = vmatmul.f32.gmra.mxu0 %v3310
      %v3456 = vpop.f32.mrf.mxu0
      %3457 = vmatmul.f32.gmra.mxu0 %v3312
      %v3458 = vpop.f32.mrf.mxu0
      %v3459 = vadd.f32 0.0, %v3458
      %3460 = vmatmul.f32.gmra.mxu0 %v3314
      %v3461 = vpop.f32.mrf.mxu0
      %v3462 = vadd.f32 0.0, %v3461
      %3463 = vmatmul.f32.gmra.mxu0 %v3316
      %v3464 = vpop.f32.mrf.mxu0
      %3465 = vdwg.mxu0
      %v3466 = vadd.f32 %v3092, %v3339
      %v3467 = vadd.f32 %v3093, %v3342
      %v3468 = vadd.f32 %v3094, %v3347
      %v3469 = vadd.f32 %v3095, %v3350
      %v3470 = vadd.f32 %v3096, %v3355
      %v3471 = vadd.f32 %v3097, %v3358
      %v3472 = vadd.f32 %v3098, %v3363
      %v3473 = vadd.f32 %v3099, %v3366
      %v3474 = vadd.f32 %v3100, %v3371
      %v3475 = vadd.f32 %v3101, %v3374
      %v3476 = vadd.f32 %v3102, %v3379
      %v3477 = vadd.f32 %v3103, %v3382
      %v3478 = vadd.f32 %v3104, %v3387
      %v3479 = vadd.f32 %v3105, %v3390
      %v3480 = vadd.f32 %v3106, %v3395
      %v3481 = vadd.f32 %v3107, %v3398
      %v3482 = vadd.f32 %v3108, %v3403
      %v3483 = vadd.f32 %v3109, %v3406
      %v3484 = vadd.f32 %v3110, %v3411
      %v3485 = vadd.f32 %v3111, %v3414
      %v3486 = vadd.f32 %v3112, %v3419
      %v3487 = vadd.f32 %v3113, %v3422
      %v3488 = vadd.f32 %v3114, %v3427
      %v3489 = vadd.f32 %v3115, %v3430
      %v3490 = vadd.f32 %v3116, %v3435
      %v3491 = vadd.f32 %v3117, %v3438
      %v3492 = vadd.f32 %v3118, %v3443
      %v3493 = vadd.f32 %v3119, %v3446
      %v3494 = vadd.f32 %v3120, %v3451
      %v3495 = vadd.f32 %v3121, %v3454
      %v3496 = vadd.f32 %v3122, %v3459
      %v3497 = vadd.f32 %v3123, %v3462
      %v3498 = vrot.slane %v2751, 2
      %v3499 = vrot.slane %v2752, 2
      %v3500 = vsel %vm1256, %v3498, %v3499
      %v3501 = vrot.slane %v2753, 2
      %v3502 = vsel %vm1256, %v3499, %v3501
      %v3503 = vrot.slane %v2754, 2
      %v3504 = vsel %vm1256, %v3501, %v3503
      %v3505 = vrot.slane %v2755, 2
      %v3506 = vsel %vm1256, %v3503, %v3505
      %v3507 = vrot.slane %v2756, 2
      %v3508 = vsel %vm1256, %v3505, %v3507
      %v3509 = vrot.slane %v2757, 2
      %v3510 = vsel %vm1256, %v3507, %v3509
      %v3511 = vrot.slane %v2758, 2
      %v3512 = vsel %vm1256, %v3509, %v3511
      %v3513 = vrot.slane %v2759, 2
      %v3514 = vsel %vm1256, %v3511, %v3513
      %v3515 = vrot.slane %v2760, 2
      %v3516 = vsel %vm1256, %v3513, %v3515
      %v3517 = vrot.slane %v2761, 2
      %v3518 = vsel %vm1256, %v3515, %v3517
      %v3519 = vrot.slane %v2762, 2
      %v3520 = vsel %vm1256, %v3517, %v3519
      %v3521 = vrot.slane %v2763, 2
      %v3522 = vsel %vm1256, %v3519, %v3521
      %v3523 = vrot.slane %v2764, 2
      %v3524 = vsel %vm1256, %v3521, %v3523
      %v3525 = vrot.slane %v2765, 2
      %v3526 = vsel %vm1256, %v3523, %v3525
      %v3527 = vrot.slane %v2766, 2
      %v3528 = vsel %vm1256, %v3525, %v3527
      %v3529 = vrot.slane %v2767, 2
      %v3530 = vsel %vm1256, %v3527, %v3529
      %v3531 = vrot.slane %v2768, 2
      %v3532 = vsel %vm1256, %v3529, %v3531
      %v3533 = vrot.slane %v2769, 2
      %v3534 = vsel %vm1256, %v3531, %v3533
      %v3535 = vrot.slane %v2770, 2
      %v3536 = vsel %vm1256, %v3533, %v3535
      %v3537 = vrot.slane %v2771, 2
      %v3538 = vsel %vm1256, %v3535, %v3537
      %v3539 = vrot.slane %v2772, 2
      %v3540 = vsel %vm1256, %v3537, %v3539
      %v3541 = vrot.slane %v2773, 2
      %v3542 = vsel %vm1256, %v3539, %v3541
      %v3543 = vrot.slane %v2774, 2
      %v3544 = vsel %vm1256, %v3541, %v3543
      %v3545 = vrot.slane %v2775, 2
      %v3546 = vsel %vm1256, %v3543, %v3545
      %v3547 = vrot.slane %v2776, 2
      %v3548 = vsel %vm1256, %v3545, %v3547
      %v3549 = vrot.slane %v2777, 2
      %v3550 = vsel %vm1256, %v3547, %v3549
      %v3551 = vrot.slane %v2778, 2
      %v3552 = vsel %vm1256, %v3549, %v3551
      %v3553 = vrot.slane %v2779, 2
      %v3554 = vsel %vm1256, %v3551, %v3553
      %v3555 = vrot.slane %v2780, 2
      %v3556 = vsel %vm1256, %v3553, %v3555
      %v3557 = vrot.slane %v2781, 2
      %v3558 = vsel %vm1256, %v3555, %v3557
      %v3559 = vrot.slane %v2782, 2
      %v3560 = vsel %vm1256, %v3557, %v3559
      %v3561 = vrot.slane %v2783, 2
      %v3562 = vsel %vm1256, %v3559, %v3561
      %v3563 = vrot.slane %v2784, 2
      %v3564 = vsel %vm1256, %v3561, %v3563
      %v3565 = vrot.slane %v2785, 2
      %v3566 = vsel %vm1256, %v3563, %v3565
      %v3567 = vrot.slane %v2786, 2
      %v3568 = vsel %vm1256, %v3565, %v3567
      %v3569 = vrot.slane %v2787, 2
      %v3570 = vsel %vm1256, %v3567, %v3569
      %v3571 = vrot.slane %v2788, 2
      %v3572 = vsel %vm1256, %v3569, %v3571
      %v3573 = vrot.slane %v2789, 2
      %v3574 = vsel %vm1256, %v3571, %v3573
      %v3575 = vrot.slane %v2790, 2
      %v3576 = vsel %vm1256, %v3573, %v3575
      %v3577 = vrot.slane %v2791, 2
      %v3578 = vsel %vm1256, %v3575, %v3577
      %v3579 = vrot.slane %v2792, 2
      %v3580 = vsel %vm1256, %v3577, %v3579
      %v3581 = vrot.slane %v2793, 2
      %v3582 = vsel %vm1256, %v3579, %v3581
      %v3583 = vrot.slane %v2794, 2
      %v3584 = vsel %vm1256, %v3581, %v3583
      %v3585 = vrot.slane %v2795, 2
      %v3586 = vsel %vm1256, %v3583, %v3585
      %v3587 = vrot.slane %v2796, 2
      %v3588 = vsel %vm1256, %v3585, %v3587
      %v3589 = vrot.slane %v2797, 2
      %v3590 = vsel %vm1256, %v3587, %v3589
      %v3591 = vrot.slane %v2798, 2
      %v3592 = vsel %vm1256, %v3589, %v3591
      %v3593 = vrot.slane %v2799, 2
      %v3594 = vsel %vm1256, %v3591, %v3593
      %v3595 = vsel %vm343, %v3500, 0
      %v3597 = vsel %vm343, %v3502, 0
      %v3599 = vsel %vm343, %v3504, 0
      %v3601 = vsel %vm343, %v3506, 0
      %v3603 = vsel %vm343, %v3508, 0
      %v3605 = vsel %vm343, %v3510, 0
      %v3607 = vsel %vm343, %v3512, 0
      %v3609 = vsel %vm343, %v3514, 0
      %v3611 = vsel %vm343, %v3516, 0
      %v3613 = vsel %vm343, %v3518, 0
      %v3615 = vsel %vm343, %v3520, 0
      %v3617 = vsel %vm343, %v3522, 0
      %v3619 = vsel %vm343, %v3524, 0
      %v3621 = vsel %vm343, %v3526, 0
      %v3623 = vsel %vm343, %v3528, 0
      %v3625 = vsel %vm343, %v3530, 0
      %v3627 = vsel %vm343, %v3532, 0
      %v3629 = vsel %vm343, %v3534, 0
      %v3631 = vsel %vm343, %v3536, 0
      %v3633 = vsel %vm343, %v3538, 0
      %v3635 = vsel %vm343, %v3540, 0
      %v3637 = vsel %vm343, %v3542, 0
      %v3639 = vsel %vm343, %v3544, 0
      %v3641 = vsel %vm343, %v3546, 0
      %v3643 = vsel %vm343, %v3548, 0
      %v3645 = vsel %vm343, %v3550, 0
      %v3647 = vsel %vm343, %v3552, 0
      %v3649 = vsel %vm343, %v3554, 0
      %v3651 = vsel %vm343, %v3556, 0
      %v3653 = vsel %vm343, %v3558, 0
      %v3655 = vsel %vm343, %v3560, 0
      %v3657 = vsel %vm343, %v3562, 0
      %v3659 = vsel %vm343, %v3564, 0
      %v3661 = vsel %vm343, %v3566, 0
      %v3663 = vsel %vm343, %v3568, 0
      %v3665 = vsel %vm343, %v3570, 0
      %v3667 = vsel %vm343, %v3572, 0
      %v3669 = vsel %vm343, %v3574, 0
      %v3671 = vsel %vm343, %v3576, 0
      %v3673 = vsel %vm343, %v3578, 0
      %v3675 = vsel %vm343, %v3580, 0
      %v3677 = vsel %vm343, %v3582, 0
      %v3679 = vsel %vm343, %v3584, 0
      %v3681 = vsel %vm343, %v3586, 0
      %v3683 = vsel %vm343, %v3588, 0
      %v3685 = vsel %vm343, %v3590, 0
      %v3687 = vsel %vm343, %v3592, 0
      %v3689 = vsel %vm343, %v3594, 0
      %v3692 = vsel %vm424, %v571, 0
      %3694 = vmatpush.msra.mxu0 0.0
      %3695 = vmatpush.msra.mxu0 0.0
      %3696 = vmatpush.msra.mxu0 0.0
      %3697 = vmatpush.msra.mxu0 0.0
      %3698 = vmatpush.msra.mxu0 0.0
      %3699 = vmatpush.msra.mxu0 0.0
      %3700 = vmatpush.msra.mxu0 0.0
      %3701 = vmatpush.msra.mxu0 0.0
      %3702 = vmatpush.msra.mxu0 0.0
      %3703 = vmatpush.msra.mxu0 0.0
      %3704 = vmatpush.msra.mxu0 0.0
      %3705 = vmatpush.msra.mxu0 0.0
      %3706 = vmatpush.msra.mxu0 0.0
      %3707 = vmatpush.msra.mxu0 0.0
      %3708 = vmatpush.msra.mxu0 0.0
      %3709 = vmatpush.msra.mxu0 %v3692
      %3710 = vmatmul.f32.gmra.mxu0 %v3595
      %v3711 = vpop.f32.mrf.mxu0
      %v3712 = vadd.f32 0.0, %v3711
      %3713 = vmatmul.f32.gmra.mxu0 %v3597
      %v3714 = vpop.f32.mrf.mxu0
      %v3715 = vadd.f32 0.0, %v3714
      %3716 = vmatmul.f32.gmra.mxu0 %v3599
      %v3717 = vpop.f32.mrf.mxu0
      %3718 = vmatmul.f32.gmra.mxu0 %v3601
      %v3719 = vpop.f32.mrf.mxu0
      %v3720 = vadd.f32 0.0, %v3719
      %3721 = vmatmul.f32.gmra.mxu0 %v3603
      %v3722 = vpop.f32.mrf.mxu0
      %v3723 = vadd.f32 0.0, %v3722
      %3724 = vmatmul.f32.gmra.mxu0 %v3605
      %v3725 = vpop.f32.mrf.mxu0
      %3726 = vmatmul.f32.gmra.mxu0 %v3607
      %v3727 = vpop.f32.mrf.mxu0
      %v3728 = vadd.f32 0.0, %v3727
      %3729 = vmatmul.f32.gmra.mxu0 %v3609
      %v3730 = vpop.f32.mrf.mxu0
      %v3731 = vadd.f32 0.0, %v3730
      %3732 = vmatmul.f32.gmra.mxu0 %v3611
      %v3733 = vpop.f32.mrf.mxu0
      %3734 = vmatmul.f32.gmra.mxu0 %v3613
      %v3735 = vpop.f32.mrf.mxu0
      %v3736 = vadd.f32 0.0, %v3735
      %3737 = vmatmul.f32.gmra.mxu0 %v3615
      %v3738 = vpop.f32.mrf.mxu0
      %v3739 = vadd.f32 0.0, %v3738
      %3740 = vmatmul.f32.gmra.mxu0 %v3617
      %v3741 = vpop.f32.mrf.mxu0
      %3742 = vmatmul.f32.gmra.mxu0 %v3619
      %v3743 = vpop.f32.mrf.mxu0
      %v3744 = vadd.f32 0.0, %v3743
      %3745 = vmatmul.f32.gmra.mxu0 %v3621
      %v3746 = vpop.f32.mrf.mxu0
      %v3747 = vadd.f32 0.0, %v3746
      %3748 = vmatmul.f32.gmra.mxu0 %v3623
      %v3749 = vpop.f32.mrf.mxu0
      %3750 = vmatmul.f32.gmra.mxu0 %v3625
      %v3751 = vpop.f32.mrf.mxu0
      %v3752 = vadd.f32 0.0, %v3751
      %3753 = vmatmul.f32.gmra.mxu0 %v3627
      %v3754 = vpop.f32.mrf.mxu0
      %v3755 = vadd.f32 0.0, %v3754
      %3756 = vmatmul.f32.gmra.mxu0 %v3629
      %v3757 = vpop.f32.mrf.mxu0
      %3758 = vmatmul.f32.gmra.mxu0 %v3631
      %v3759 = vpop.f32.mrf.mxu0
      %v3760 = vadd.f32 0.0, %v3759
      %3761 = vmatmul.f32.gmra.mxu0 %v3633
      %v3762 = vpop.f32.mrf.mxu0
      %v3763 = vadd.f32 0.0, %v3762
      %3764 = vmatmul.f32.gmra.mxu0 %v3635
      %v3765 = vpop.f32.mrf.mxu0
      %3766 = vmatmul.f32.gmra.mxu0 %v3637
      %v3767 = vpop.f32.mrf.mxu0
      %v3768 = vadd.f32 0.0, %v3767
      %3769 = vmatmul.f32.gmra.mxu0 %v3639
      %v3770 = vpop.f32.mrf.mxu0
      %v3771 = vadd.f32 0.0, %v3770
      %3772 = vmatmul.f32.gmra.mxu0 %v3641
      %v3773 = vpop.f32.mrf.mxu0
      %3774 = vmatmul.f32.gmra.mxu0 %v3643
      %v3775 = vpop.f32.mrf.mxu0
      %v3776 = vadd.f32 0.0, %v3775
      %3777 = vmatmul.f32.gmra.mxu0 %v3645
      %v3778 = vpop.f32.mrf.mxu0
      %v3779 = vadd.f32 0.0, %v3778
      %3780 = vmatmul.f32.gmra.mxu0 %v3647
      %v3781 = vpop.f32.mrf.mxu0
      %3782 = vmatmul.f32.gmra.mxu0 %v3649
      %v3783 = vpop.f32.mrf.mxu0
      %v3784 = vadd.f32 0.0, %v3783
      %3785 = vmatmul.f32.gmra.mxu0 %v3651
      %v3786 = vpop.f32.mrf.mxu0
      %v3787 = vadd.f32 0.0, %v3786
      %3788 = vmatmul.f32.gmra.mxu0 %v3653
      %v3789 = vpop.f32.mrf.mxu0
      %3790 = vmatmul.f32.gmra.mxu0 %v3655
      %v3791 = vpop.f32.mrf.mxu0
      %v3792 = vadd.f32 0.0, %v3791
      %3793 = vmatmul.f32.gmra.mxu0 %v3657
      %v3794 = vpop.f32.mrf.mxu0
      %v3795 = vadd.f32 0.0, %v3794
      %3796 = vmatmul.f32.gmra.mxu0 %v3659
      %v3797 = vpop.f32.mrf.mxu0
      %3798 = vmatmul.f32.gmra.mxu0 %v3661
      %v3799 = vpop.f32.mrf.mxu0
      %v3800 = vadd.f32 0.0, %v3799
      %3801 = vmatmul.f32.gmra.mxu0 %v3663
      %v3802 = vpop.f32.mrf.mxu0
      %v3803 = vadd.f32 0.0, %v3802
      %3804 = vmatmul.f32.gmra.mxu0 %v3665
      %v3805 = vpop.f32.mrf.mxu0
      %3806 = vmatmul.f32.gmra.mxu0 %v3667
      %v3807 = vpop.f32.mrf.mxu0
      %v3808 = vadd.f32 0.0, %v3807
      %3809 = vmatmul.f32.gmra.mxu0 %v3669
      %v3810 = vpop.f32.mrf.mxu0
      %v3811 = vadd.f32 0.0, %v3810
      %3812 = vmatmul.f32.gmra.mxu0 %v3671
      %v3813 = vpop.f32.mrf.mxu0
      %3814 = vmatmul.f32.gmra.mxu0 %v3673
      %v3815 = vpop.f32.mrf.mxu0
      %v3816 = vadd.f32 0.0, %v3815
      %3817 = vmatmul.f32.gmra.mxu0 %v3675
      %v3818 = vpop.f32.mrf.mxu0
      %v3819 = vadd.f32 0.0, %v3818
      %3820 = vmatmul.f32.gmra.mxu0 %v3677
      %v3821 = vpop.f32.mrf.mxu0
      %3822 = vmatmul.f32.gmra.mxu0 %v3679
      %v3823 = vpop.f32.mrf.mxu0
      %v3824 = vadd.f32 0.0, %v3823
      %3825 = vmatmul.f32.gmra.mxu0 %v3681
      %v3826 = vpop.f32.mrf.mxu0
      %v3827 = vadd.f32 0.0, %v3826
      %3828 = vmatmul.f32.gmra.mxu0 %v3683
      %v3829 = vpop.f32.mrf.mxu0
      %3830 = vmatmul.f32.gmra.mxu0 %v3685
      %v3831 = vpop.f32.mrf.mxu0
      %v3832 = vadd.f32 0.0, %v3831
      %3833 = vmatmul.f32.gmra.mxu0 %v3687
      %v3834 = vpop.f32.mrf.mxu0
      %v3835 = vadd.f32 0.0, %v3834
      %3836 = vmatmul.f32.gmra.mxu0 %v3689
      %v3837 = vpop.f32.mrf.mxu0
      %3838 = vdwg.mxu0
      %v3839 = vadd.f32 %v3466, %v3712
      %v3840 = vadd.f32 %v3467, %v3715
      %v3841 = vadd.f32 %v3468, %v3720
      %v3842 = vadd.f32 %v3469, %v3723
      %v3843 = vadd.f32 %v3470, %v3728
      %v3844 = vadd.f32 %v3471, %v3731
      %v3845 = vadd.f32 %v3472, %v3736
      %v3846 = vadd.f32 %v3473, %v3739
      %v3847 = vadd.f32 %v3474, %v3744
      %v3848 = vadd.f32 %v3475, %v3747
      %v3849 = vadd.f32 %v3476, %v3752
      %v3850 = vadd.f32 %v3477, %v3755
      %v3851 = vadd.f32 %v3478, %v3760
      %v3852 = vadd.f32 %v3479, %v3763
      %v3853 = vadd.f32 %v3480, %v3768
      %v3854 = vadd.f32 %v3481, %v3771
      %v3855 = vadd.f32 %v3482, %v3776
      %v3856 = vadd.f32 %v3483, %v3779
      %v3857 = vadd.f32 %v3484, %v3784
      %v3858 = vadd.f32 %v3485, %v3787
      %v3859 = vadd.f32 %v3486, %v3792
      %v3860 = vadd.f32 %v3487, %v3795
      %v3861 = vadd.f32 %v3488, %v3800
      %v3862 = vadd.f32 %v3489, %v3803
      %v3863 = vadd.f32 %v3490, %v3808
      %v3864 = vadd.f32 %v3491, %v3811
      %v3865 = vadd.f32 %v3492, %v3816
      %v3866 = vadd.f32 %v3493, %v3819
      %v3867 = vadd.f32 %v3494, %v3824
      %v3868 = vadd.f32 %v3495, %v3827
      %v3869 = vadd.f32 %v3496, %v3832
      %v3870 = vadd.f32 %v3497, %v3835
      %vm3871 = vcmask 64512
      %3872 = vst.msk [vmem:[%s278] sm:$0xff] %vm3871, %v3839
      %3873 = vst.msk [vmem:[%s278 + $0x8] sm:$0xff] %vm3871, %v3840
      %3874 = vst.msk [vmem:[%s278 + $0x10] sm:$0xff] %vm3871, %v3841
      %3875 = vst.msk [vmem:[%s278 + $0x18] sm:$0xff] %vm3871, %v3842
      %3876 = vst.msk [vmem:[%s278 + $0x20] sm:$0xff] %vm3871, %v3843
      %3877 = vst.msk [vmem:[%s278 + $0x28] sm:$0xff] %vm3871, %v3844
      %3878 = vst.msk [vmem:[%s278 + $0x30] sm:$0xff] %vm3871, %v3845
      %3879 = vst.msk [vmem:[%s278 + $0x38] sm:$0xff] %vm3871, %v3846
      %3880 = vst.msk [vmem:[%s278 + $0x40] sm:$0xff] %vm3871, %v3847
      %3881 = vst.msk [vmem:[%s278 + $0x48] sm:$0xff] %vm3871, %v3848
      %3882 = vst.msk [vmem:[%s278 + $0x50] sm:$0xff] %vm3871, %v3849
      %3883 = vst.msk [vmem:[%s278 + $0x58] sm:$0xff] %vm3871, %v3850
      %3884 = vst.msk [vmem:[%s278 + $0x60] sm:$0xff] %vm3871, %v3851
      %3885 = vst.msk [vmem:[%s278 + $0x68] sm:$0xff] %vm3871, %v3852
      %3886 = vst.msk [vmem:[%s278 + $0x70] sm:$0xff] %vm3871, %v3853
      %3887 = vst.msk [vmem:[%s278 + $0x78] sm:$0xff] %vm3871, %v3854
      %3888 = vst.msk [vmem:[%s278 + $0x80] sm:$0xff] %vm3871, %v3855
      %3889 = vst.msk [vmem:[%s278 + $0x88] sm:$0xff] %vm3871, %v3856
      %3890 = vst.msk [vmem:[%s278 + $0x90] sm:$0xff] %vm3871, %v3857
      %3891 = vst.msk [vmem:[%s278 + $0x98] sm:$0xff] %vm3871, %v3858
      %3892 = vst.msk [vmem:[%s278 + $0xa0] sm:$0xff] %vm3871, %v3859
      %3893 = vst.msk [vmem:[%s278 + $0xa8] sm:$0xff] %vm3871, %v3860
      %3894 = vst.msk [vmem:[%s278 + $0xb0] sm:$0xff] %vm3871, %v3861
      %3895 = vst.msk [vmem:[%s278 + $0xb8] sm:$0xff] %vm3871, %v3862
      %3896 = vst.msk [vmem:[%s278 + $0xc0] sm:$0xff] %vm3871, %v3863
      %3897 = vst.msk [vmem:[%s278 + $0xc8] sm:$0xff] %vm3871, %v3864
      %3898 = vst.msk [vmem:[%s278 + $0xd0] sm:$0xff] %vm3871, %v3865
      %3899 = vst.msk [vmem:[%s278 + $0xd8] sm:$0xff] %vm3871, %v3866
      %3900 = vst.msk [vmem:[%s278 + $0xe0] sm:$0xff] %vm3871, %v3867
      %3901 = vst.msk [vmem:[%s278 + $0xe8] sm:$0xff] %vm3871, %v3868
      %3902 = vst.msk [vmem:[%s278 + $0xf0] sm:$0xff] %vm3871, %v3869
      %3903 = vst.msk [vmem:[%s278 + $0xf8] sm:$0xff] %vm3871, %v3870
      %p3904 = scmp.lt.s32.totalorder %s18, 1
      %s3905 = scalar_select %p3904, %s18, 1
      %s3906 = smul.addr %s3905, 32
      %s3907 = smul.addr %s3906, 8
      %s3908 = scalar_lea.vmem %s7, %s3907
      // Predicated region
      $region49: #{tpu_custom_call.1} parent=47 // pred_check
        %p3909 = pneg %p188
      $region50: #{tpu_custom_call.1} parent=47 // pred_check_branch
        %3911 = sbr.rel (%p3909) target = $region52
      $region51: #{tpu_custom_call.1} parent=47 // pred_region
        _
      $region52: #{tpu_custom_call.1} parent=47 // pred_fallthru
        _
    $region48: #{tpu_custom_call.1} parent=5 // pred_fallthru
      _
    %p3912 = scmp.le.s32.totalorder 2, %s13
    // Predicated region
    $region53: #{tpu_custom_call.1} parent=5 // pred_check
      %p3913 = pneg %p3912
    $region54: #{tpu_custom_call.1} parent=5 // pred_check_branch
      %3915 = sbr.rel (%p3913) target = $region56
    $region55: #{tpu_custom_call.1} parent=5 // pred_region
      %s3916 = ssub.s32 %s13, 2
      // Predicated region
      $region57: #{tpu_custom_call.1} parent=55 // pred_check
        %p3917 = pneg %p194
      $region58: #{tpu_custom_call.1} parent=55 // pred_check_branch
        %3919 = sbr.rel (%p3917) target = $region60
      $region59: #{tpu_custom_call.1} parent=55 // pred_region
        %p3920 = scmp.lt.s32.totalorder %s19, 1
        %s3921 = scalar_select %p3920, %s19, 1
        %s3922 = smul.addr %s3921, 32
        %s3923 = smul.addr %s3922, 8
        %s3924 = scalar_lea.vmem %s7, %s3923
      $region60: #{tpu_custom_call.1} parent=55 // pred_fallthru
        _
    $region56: #{tpu_custom_call.1} parent=5 // pred_fallthru
      _
  $region6: #{tpu_custom_call.1} parent=0 // loop_footer
    %s17 = sadd.s32 1, %s13
  $region7: #{tpu_custom_call.1} parent=0 // loop_footer_branch
    %12 = sbr.rel target = $region3
  $region8: #{tpu_custom_call.1} parent=0 // loop_exit
    _

</llo_original>
